<compile_context>
chip_gen: v7x
topology: tpu7x:2x2x1
jax: 0.10.0
libtpu: 0.0.40
codegen_flags: <defaults>
</compile_context>

<pallas_src>
import math

import jax
import jax.numpy as jnp
from jax.experimental import pallas as pl
from jax.experimental.pallas import tpu as pltpu

# ---- static configuration (small shapes consistent with the module) ----
B, S = 2, 8           # batch, sequence length
N_TOKENS = 50         # vocab size
EMBED = 32            # embed_dim (must be divisible by N_HEAD)
N_HEAD = 4            # module default 6 does not divide EMBED=32; use 4
HEAD_DIM = EMBED // N_HEAD
N_HID = 64            # feed-forward hidden dim
N_CLASS = 4
N_LAYERS = 2
PAD_IDX = 0
LN_EPS = 1e-5
NEG_INF = -1e9        # finite stand-in for -inf used by key_padding_mask
VEC_W = 3 * EMBED     # width of the packed per-layer bias/LN slab

# TODO(synk): nn.Dropout (p=0.5 / p=0.1) layers are identity here (inference mode).


# ---------------------------------------------------------------------------
# Single fused kernel: posenc add + 2 encoder layers + mean-over-seq + fc
# ---------------------------------------------------------------------------
def fused_forward_kernel(emb_ref, pe_ref, kbias_ref,
                         wqkv_ref, wout_ref, wff1_ref, wff2_ref,
                         vec_ref, fcw_ref, o_ref, attn_scr):
    """
    emb:   [B*S, E]   token embeddings (sqrt(E) already folded into the table)
    pe:    [B*S, E]   positional encoding tiled over batch
    kbias: [B, S]     0 for real tokens, NEG_INF for pad (added to scores)
    wqkv:  [L, E, 3E] in_proj (pre-transposed; 1/sqrt(head_dim) folded into Q cols)
    wout:  [L, E, E]  out_proj (pre-transposed)
    wff1:  [L, E, F]  / wff2: [L, F, E]  feed-forward (pre-transposed)
    vec:   [L, 8, 3E] packed rows: in_b | out_b | ln1_w | ln1_b | ln2_w | ln2_b | ff1_b | ff2_b
    fcw:   [E+1, C]   rows 0..E-1 = fc weight^T * (1/S), row E = fc bias
    o:     [B, C]
    attn_scr: [B*S, E] VMEM scratch for assembling per-head attention outputs
    """
    x = emb_ref[...] + pe_ref[...]                    # [B*S, E]
    kbias = kbias_ref[...]                            # [B, S]

    for l in range(N_LAYERS):                         # static unroll over layers
        wqkv = wqkv_ref[l]                            # [E, 3E]
        wout = wout_ref[l]                            # [E, E]
        wff1 = wff1_ref[l]                            # [E, F]
        wff2 = wff2_ref[l]                            # [F, E]
        vec = vec_ref[l]                              # [8, 3E]
        in_b = vec[0:1, :]                            # [1, 3E]
        out_b = vec[1:2, 0:EMBED]
        ln1w = vec[2:3, 0:EMBED]
        ln1b = vec[3:4, 0:EMBED]
        ln2w = vec[4:5, 0:EMBED]
        ln2b = vec[5:6, 0:EMBED]
        ff1b = vec[6:7, 0:N_HID]
        ff2b = vec[7:8, 0:EMBED]

        # --- QKV projection on the flattened batch: one [B*S,E]@[E,3E] push ---
        qkv = jnp.dot(x, wqkv, preferred_element_type=jnp.float32) + in_b

        # --- multi-head self-attention (per batch, per head; tiny 8x8 tiles) ---
        for b in range(B):
            kb = kbias[b:b + 1, :]                    # [1, S] broadcast over queries
            qkv_b = qkv[b * S:(b + 1) * S, :]         # [S, 3E]
            q = qkv_b[:, 0:EMBED]
            k = qkv_b[:, EMBED:2 * EMBED]
            v = qkv_b[:, 2 * EMBED:3 * EMBED]
            for h in range(N_HEAD):
                sl = slice(h * HEAD_DIM, (h + 1) * HEAD_DIM)
                qh, kh, vh = q[:, sl], k[:, sl], v[:, sl]
                # q @ k^T without an explicit transpose (contract last dims)
                s = jax.lax.dot_general(qh, kh, (((1,), (1,)), ((), ())),
                                        preferred_element_type=jnp.float32)  # [S, S]
                s = s + kb                            # key-padding bias (per key)
                s = s - jnp.max(s, axis=-1, keepdims=True)
                p = jnp.exp(s)
                p = p * pl.reciprocal(jnp.sum(p, axis=-1, keepdims=True), approx=True)
                oh = jnp.dot(p, vh, preferred_element_type=jnp.float32)      # [S, HD]
                # write the head directly into the [B*S, E] scratch (no concat)
                attn_scr[b * S:(b + 1) * S, h * HEAD_DIM:(h + 1) * HEAD_DIM] = oh

        # out-projection back on the flattened batch
        attn = jnp.dot(attn_scr[...], wout, preferred_element_type=jnp.float32) + out_b

        # residual + layernorm 1
        y = x + attn
        mu = jnp.mean(y, axis=-1, keepdims=True)
        var = jnp.mean(jnp.square(y - mu), axis=-1, keepdims=True)
        y = (y - mu) * jax.lax.rsqrt(var + LN_EPS) * ln1w + ln1b

        # feed-forward (relu)
        h1 = jnp.maximum(jnp.dot(y, wff1, preferred_element_type=jnp.float32) + ff1b, 0.0)
        h2 = jnp.dot(h1, wff2, preferred_element_type=jnp.float32) + ff2b

        # residual + layernorm 2
        z = y + h2
        mu2 = jnp.mean(z, axis=-1, keepdims=True)
        var2 = jnp.mean(jnp.square(z - mu2), axis=-1, keepdims=True)
        x = (z - mu2) * jax.lax.rsqrt(var2 + LN_EPS) * ln2w + ln2b

    # --- mean over sequence folded into fc (weights pre-scaled by 1/S) ---
    fcw = fcw_ref[0:EMBED, :]                         # [E, C]
    fcb = fcw_ref[EMBED:EMBED + 1, :]                 # [1, C]
    logits = jnp.dot(x, fcw, preferred_element_type=jnp.float32)   # [B*S, C]
    for b in range(B):
        o_ref[b:b + 1, :] = jnp.sum(logits[b * S:(b + 1) * S, :],
                                    axis=0, keepdims=True) + fcb


# ---------------------------------------------------------------------------
# Parameters (deterministic, in-script) with host-side constant folding
# ---------------------------------------------------------------------------
def init_params(key):
    def w(k, shape, scale=0.1):
        return jax.random.normal(k, shape, dtype=jnp.float32) * scale

    ks = jax.random.split(key, 4 + N_LAYERS)
    params = {}
    # embedding table with sqrt(E) pre-folded (one-time constant fold)
    params["embedding"] = w(ks[0], (N_TOKENS, EMBED), 1.0) * math.sqrt(EMBED)

    # positional-encoding buffer (first S rows), exactly as in PositionalEncoding,
    # tiled over batch so the kernel does a single flat [B*S, E] add
    pos = jnp.arange(S, dtype=jnp.float32)[:, None]
    div = jnp.exp(jnp.arange(0, EMBED, 2, dtype=jnp.float32) * (-math.log(10000.0) / EMBED))
    pe = jnp.zeros((S, EMBED), jnp.float32)
    pe = pe.at[:, 0::2].set(jnp.sin(pos * div))
    pe = pe.at[:, 1::2].set(jnp.cos(pos * div))
    params["pe_tiled"] = jnp.tile(pe, (B, 1))                     # [B*S, E]

    def pad_row(v, width):
        v = v.reshape(1, -1)
        return jnp.pad(v, ((0, 0), (0, width - v.shape[1])))

    attn_scale = 1.0 / math.sqrt(HEAD_DIM)
    wqkv_l, wout_l, wff1_l, wff2_l, vec_l = [], [], [], [], []
    for l in range(N_LAYERS):
        lk = jax.random.split(ks[1 + l], 8)
        in_w = w(lk[0], (3 * EMBED, EMBED))                       # in_proj_weight [3E, E]
        in_b = w(lk[1], (3 * EMBED,), 0.02)
        # fold 1/sqrt(head_dim) into the Q rows (host-side constant folding)
        in_w = in_w.at[0:EMBED, :].multiply(attn_scale)
        in_b = in_b.at[0:EMBED].multiply(attn_scale)
        out_w = w(lk[2], (EMBED, EMBED))
        out_b = w(lk[3], (EMBED,), 0.02)
        ff1_w = w(lk[4], (N_HID, EMBED))
        ff1_b = w(lk[5], (N_HID,), 0.02)
        ff2_w = w(lk[6], (EMBED, N_HID))
        ff2_b = w(lk[7], (EMBED,), 0.02)
        ln1_w = jnp.ones((EMBED,), jnp.float32)
        ln1_b = jnp.zeros((EMBED,), jnp.float32)
        ln2_w = jnp.ones((EMBED,), jnp.float32)
        ln2_b = jnp.zeros((EMBED,), jnp.float32)

        wqkv_l.append(in_w.T)                                     # [E, 3E]
        wout_l.append(out_w.T)                                    # [E, E]
        wff1_l.append(ff1_w.T)                                    # [E, F]
        wff2_l.append(ff2_w.T)                                    # [F, E]
        vec_l.append(jnp.concatenate([
            pad_row(in_b, VEC_W), pad_row(out_b, VEC_W),
            pad_row(ln1_w, VEC_W), pad_row(ln1_b, VEC_W),
            pad_row(ln2_w, VEC_W), pad_row(ln2_b, VEC_W),
            pad_row(ff1_b, VEC_W), pad_row(ff2_b, VEC_W)], axis=0))  # [8, 3E]

    params["wqkv"] = jnp.stack(wqkv_l)                            # [L, E, 3E]
    params["wout"] = jnp.stack(wout_l)                            # [L, E, E]
    params["wff1"] = jnp.stack(wff1_l)                            # [L, E, F]
    params["wff2"] = jnp.stack(wff2_l)                            # [L, F, E]
    params["vec"] = jnp.stack(vec_l)                              # [L, 8, 3E]

    fc_w = w(ks[-2], (N_CLASS, EMBED))
    fc_b = w(ks[-1], (N_CLASS,), 0.02)
    # fold the sequence-mean 1/S into the classifier weight; bias as the last row
    params["fc_packed"] = jnp.concatenate(
        [fc_w.T / float(S), fc_b.reshape(1, -1)], axis=0)         # [E+1, C]
    return params


# ---------------------------------------------------------------------------
# Forward pass (mirrors TransformerNet.forward) — one fused pallas_call
# ---------------------------------------------------------------------------
def transformer_net_forward(tokens, params):
    # km = (tokens == pad_idx); only affects attention keys (PyTorch semantics)
    km = tokens == PAD_IDX                                        # [B, S] bool
    kbias = jnp.where(km, jnp.float32(NEG_INF), jnp.float32(0.0))  # [B, S]

    # embedding lookup (glue); sqrt(E) is already folded into the table
    emb = jnp.take(params["embedding"], tokens.reshape(-1), axis=0)  # [B*S, E]

    args = (emb, params["pe_tiled"], kbias,
            params["wqkv"], params["wout"], params["wff1"], params["wff2"],
            params["vec"], params["fc_packed"])

    return pl.pallas_call(
        fused_forward_kernel,
        out_shape=jax.ShapeDtypeStruct((B, N_CLASS), jnp.float32),
        in_specs=[pl.BlockSpec(memory_space=pltpu.MemorySpace.VMEM)] * len(args),
        out_specs=pl.BlockSpec(memory_space=pltpu.MemorySpace.VMEM),
        scratch_shapes=[pltpu.VMEM((B * S, EMBED), jnp.float32)],
    )(*args)


if __name__ == "__main__":
    key = jax.random.PRNGKey(0)
    pkey, tkey = jax.random.split(key)
    params = init_params(pkey)

    tokens = jax.random.randint(tkey, (B, S), 1, N_TOKENS).astype(jnp.int32)
    tokens = tokens.at[0, -2:].set(PAD_IDX)   # exercise the key-padding mask

    fwd = jax.jit(lambda t: transformer_net_forward(t, params))
    out = fwd(tokens)
    jax.block_until_ready(out)

    assert out.shape == (B, N_CLASS), out.shape
    assert bool(jnp.all(jnp.isfinite(out)))
    print("KERNEL_OK")
</pallas_src>

<mosaic_0001>
module attributes {stable_mosaic.version = 11 : i64} {
  func.func @fused_forward_kernel(%arg0: memref<16x32xf32, #tpu.memory_space<vmem>>, %arg1: memref<16x32xf32, #tpu.memory_space<vmem>>, %arg2: memref<2x8xf32, #tpu.memory_space<vmem>>, %arg3: memref<2x32x96xf32, #tpu.memory_space<vmem>>, %arg4: memref<2x32x32xf32, #tpu.memory_space<vmem>>, %arg5: memref<2x32x64xf32, #tpu.memory_space<vmem>>, %arg6: memref<2x64x32xf32, #tpu.memory_space<vmem>>, %arg7: memref<2x8x96xf32, #tpu.memory_space<vmem>>, %arg8: memref<33x4xf32, #tpu.memory_space<vmem>>, %arg9: memref<2x4xf32, #tpu.memory_space<vmem>>, %arg10: memref<16x32xf32, #tpu.memory_space<vmem>>) attributes {dimension_semantics = [], scalar_prefetch = 0 : i64, scratch_operands = 1 : i64, tpu.core_type = #tpu.core_type<tc>} {
    %c0 = arith.constant 0 : index
    %c0_0 = arith.constant 0 : index
    %0 = vector.load %arg0[%c0, %c0_0] : memref<16x32xf32, #tpu.memory_space<vmem>>, vector<16x32xf32>
    %c0_1 = arith.constant 0 : index
    %c0_2 = arith.constant 0 : index
    %1 = vector.load %arg1[%c0_1, %c0_2] : memref<16x32xf32, #tpu.memory_space<vmem>>, vector<16x32xf32>
    %2 = arith.addf %0, %1 : vector<16x32xf32>
    %c0_3 = arith.constant 0 : index
    %c0_4 = arith.constant 0 : index
    %3 = vector.load %arg2[%c0_3, %c0_4] : memref<2x8xf32, #tpu.memory_space<vmem>>, vector<2x8xf32>
    %c0_5 = arith.constant 0 : index
    %c0_6 = arith.constant 0 : index
    %c0_7 = arith.constant 0 : index
    %4 = vector.load %arg3[%c0_5, %c0_6, %c0_7] : memref<2x32x96xf32, #tpu.memory_space<vmem>>, vector<1x32x96xf32>
    %5 = vector.shape_cast %4 : vector<1x32x96xf32> to vector<32x96xf32>
    %c0_8 = arith.constant 0 : index
    %c0_9 = arith.constant 0 : index
    %c0_10 = arith.constant 0 : index
    %6 = vector.load %arg4[%c0_8, %c0_9, %c0_10] : memref<2x32x32xf32, #tpu.memory_space<vmem>>, vector<1x32x32xf32>
    %7 = vector.shape_cast %6 : vector<1x32x32xf32> to vector<32x32xf32>
    %c0_11 = arith.constant 0 : index
    %c0_12 = arith.constant 0 : index
    %c0_13 = arith.constant 0 : index
    %8 = vector.load %arg5[%c0_11, %c0_12, %c0_13] : memref<2x32x64xf32, #tpu.memory_space<vmem>>, vector<1x32x64xf32>
    %9 = vector.shape_cast %8 : vector<1x32x64xf32> to vector<32x64xf32>
    %c0_14 = arith.constant 0 : index
    %c0_15 = arith.constant 0 : index
    %c0_16 = arith.constant 0 : index
    %10 = vector.load %arg6[%c0_14, %c0_15, %c0_16] : memref<2x64x32xf32, #tpu.memory_space<vmem>>, vector<1x64x32xf32>
    %11 = vector.shape_cast %10 : vector<1x64x32xf32> to vector<64x32xf32>
    %c0_17 = arith.constant 0 : index
    %c0_18 = arith.constant 0 : index
    %c0_19 = arith.constant 0 : index
    %12 = vector.load %arg7[%c0_17, %c0_18, %c0_19] : memref<2x8x96xf32, #tpu.memory_space<vmem>>, vector<1x8x96xf32>
    %13 = vector.shape_cast %12 : vector<1x8x96xf32> to vector<8x96xf32>
    %14 = vector.extract_strided_slice %13 {offsets = [0, 0], sizes = [1, 96], strides = [1, 1]} : vector<8x96xf32> to vector<1x96xf32>
    %15 = vector.extract_strided_slice %13 {offsets = [1, 0], sizes = [1, 32], strides = [1, 1]} : vector<8x96xf32> to vector<1x32xf32>
    %16 = vector.extract_strided_slice %13 {offsets = [2, 0], sizes = [1, 32], strides = [1, 1]} : vector<8x96xf32> to vector<1x32xf32>
    %17 = vector.extract_strided_slice %13 {offsets = [3, 0], sizes = [1, 32], strides = [1, 1]} : vector<8x96xf32> to vector<1x32xf32>
    %18 = vector.extract_strided_slice %13 {offsets = [4, 0], sizes = [1, 32], strides = [1, 1]} : vector<8x96xf32> to vector<1x32xf32>
    %19 = vector.extract_strided_slice %13 {offsets = [5, 0], sizes = [1, 32], strides = [1, 1]} : vector<8x96xf32> to vector<1x32xf32>
    %20 = vector.extract_strided_slice %13 {offsets = [6, 0], sizes = [1, 64], strides = [1, 1]} : vector<8x96xf32> to vector<1x64xf32>
    %21 = vector.extract_strided_slice %13 {offsets = [7, 0], sizes = [1, 32], strides = [1, 1]} : vector<8x96xf32> to vector<1x32xf32>
    %cst = arith.constant dense<0.000000e+00> : vector<16x96xf32>
    %22 = tpu.matmul %2, %5, %cst {dimension_numbers = #tpu.dot_dimension_numbers<[1], [0], [0], [1], [0, 0, 1, 1], [], []>} : vector<16x32xf32>, vector<32x96xf32>, vector<16x96xf32> -> vector<16x96xf32>
    %23 = vector.broadcast %14 : vector<1x96xf32> to vector<16x96xf32>
    %24 = arith.addf %22, %23 : vector<16x96xf32>
    %25 = vector.extract_strided_slice %3 {offsets = [0, 0], sizes = [1, 8], strides = [1, 1]} : vector<2x8xf32> to vector<1x8xf32>
    %26 = vector.extract_strided_slice %24 {offsets = [0, 0], sizes = [8, 96], strides = [1, 1]} : vector<16x96xf32> to vector<8x96xf32>
    %27 = vector.extract_strided_slice %26 {offsets = [0, 0], sizes = [8, 32], strides = [1, 1]} : vector<8x96xf32> to vector<8x32xf32>
    %28 = vector.extract_strided_slice %26 {offsets = [0, 32], sizes = [8, 32], strides = [1, 1]} : vector<8x96xf32> to vector<8x32xf32>
    %29 = vector.extract_strided_slice %26 {offsets = [0, 64], sizes = [8, 32], strides = [1, 1]} : vector<8x96xf32> to vector<8x32xf32>
    %30 = vector.extract_strided_slice %27 {offsets = [0, 0], sizes = [8, 8], strides = [1, 1]} : vector<8x32xf32> to vector<8x8xf32>
    %31 = vector.extract_strided_slice %28 {offsets = [0, 0], sizes = [8, 8], strides = [1, 1]} : vector<8x32xf32> to vector<8x8xf32>
    %32 = vector.extract_strided_slice %29 {offsets = [0, 0], sizes = [8, 8], strides = [1, 1]} : vector<8x32xf32> to vector<8x8xf32>
    %cst_20 = arith.constant dense<0.000000e+00> : vector<8x8xf32>
    %33 = tpu.matmul %30, %31, %cst_20 {dimension_numbers = #tpu.dot_dimension_numbers<[1], [1], [0], [0], [0, 0, 1, 0], [], []>} : vector<8x8xf32>, vector<8x8xf32>, vector<8x8xf32> -> vector<8x8xf32>
    %34 = vector.broadcast %25 : vector<1x8xf32> to vector<8x8xf32>
    %35 = arith.addf %33, %34 : vector<8x8xf32>
    %cst_21 = arith.constant dense<0xFF800000> : vector<8xf32>
    %36 = vector.multi_reduction <maximumf>, %35, %cst_21 [1] : vector<8x8xf32> to vector<8xf32>
    %37 = vector.shape_cast %36 : vector<8xf32> to vector<8x1xf32>
    %38 = vector.broadcast %37 : vector<8x1xf32> to vector<8x8xf32>
    %39 = arith.subf %35, %38 : vector<8x8xf32>
    %40 = math.exp %39 : vector<8x8xf32>
    %cst_22 = arith.constant dense<0.000000e+00> : vector<8xf32>
    %41 = vector.multi_reduction <add>, %40, %cst_22 [1] : vector<8x8xf32> to vector<8xf32>
    %42 = vector.shape_cast %41 : vector<8xf32> to vector<8x1xf32>
    %43 = tpu.reciprocal %42 {approx = true} : vector<8x1xf32> -> vector<8x1xf32>
    %44 = vector.broadcast %43 : vector<8x1xf32> to vector<8x8xf32>
    %45 = arith.mulf %40, %44 : vector<8x8xf32>
    %cst_23 = arith.constant dense<0.000000e+00> : vector<8x8xf32>
    %46 = tpu.matmul %45, %32, %cst_23 {dimension_numbers = #tpu.dot_dimension_numbers<[1], [0], [0], [1], [0, 0, 1, 1], [], []>} : vector<8x8xf32>, vector<8x8xf32>, vector<8x8xf32> -> vector<8x8xf32>
    %c0_24 = arith.constant 0 : index
    %c0_25 = arith.constant 0 : index
    %47 = vector.load %arg10[%c0_24, %c0_25] : memref<16x32xf32, #tpu.memory_space<vmem>>, vector<8x8xf32>
    tpu.vector_store %arg10[%c0_24, %c0_25], %46 {strides = array<i32>} : memref<16x32xf32, #tpu.memory_space<vmem>>, vector<8x8xf32>,
    %48 = vector.extract_strided_slice %27 {offsets = [0, 8], sizes = [8, 8], strides = [1, 1]} : vector<8x32xf32> to vector<8x8xf32>
    %49 = vector.extract_strided_slice %28 {offsets = [0, 8], sizes = [8, 8], strides = [1, 1]} : vector<8x32xf32> to vector<8x8xf32>
    %50 = vector.extract_strided_slice %29 {offsets = [0, 8], sizes = [8, 8], strides = [1, 1]} : vector<8x32xf32> to vector<8x8xf32>
    %cst_26 = arith.constant dense<0.000000e+00> : vector<8x8xf32>
    %51 = tpu.matmul %48, %49, %cst_26 {dimension_numbers = #tpu.dot_dimension_numbers<[1], [1], [0], [0], [0, 0, 1, 0], [], []>} : vector<8x8xf32>, vector<8x8xf32>, vector<8x8xf32> -> vector<8x8xf32>
    %52 = vector.broadcast %25 : vector<1x8xf32> to vector<8x8xf32>
    %53 = arith.addf %51, %52 : vector<8x8xf32>
    %cst_27 = arith.constant dense<0xFF800000> : vector<8xf32>
    %54 = vector.multi_reduction <maximumf>, %53, %cst_27 [1] : vector<8x8xf32> to vector<8xf32>
    %55 = vector.shape_cast %54 : vector<8xf32> to vector<8x1xf32>
    %56 = vector.broadcast %55 : vector<8x1xf32> to vector<8x8xf32>
    %57 = arith.subf %53, %56 : vector<8x8xf32>
    %58 = math.exp %57 : vector<8x8xf32>
    %cst_28 = arith.constant dense<0.000000e+00> : vector<8xf32>
    %59 = vector.multi_reduction <add>, %58, %cst_28 [1] : vector<8x8xf32> to vector<8xf32>
    %60 = vector.shape_cast %59 : vector<8xf32> to vector<8x1xf32>
    %61 = tpu.reciprocal %60 {approx = true} : vector<8x1xf32> -> vector<8x1xf32>
    %62 = vector.broadcast %61 : vector<8x1xf32> to vector<8x8xf32>
    %63 = arith.mulf %58, %62 : vector<8x8xf32>
    %cst_29 = arith.constant dense<0.000000e+00> : vector<8x8xf32>
    %64 = tpu.matmul %63, %50, %cst_29 {dimension_numbers = #tpu.dot_dimension_numbers<[1], [0], [0], [1], [0, 0, 1, 1], [], []>} : vector<8x8xf32>, vector<8x8xf32>, vector<8x8xf32> -> vector<8x8xf32>
    %c0_30 = arith.constant 0 : index
    %c8 = arith.constant 8 : index
    %65 = vector.load %arg10[%c0_30, %c8] : memref<16x32xf32, #tpu.memory_space<vmem>>, vector<8x8xf32>
    tpu.vector_store %arg10[%c0_30, %c8], %64 {strides = array<i32>} : memref<16x32xf32, #tpu.memory_space<vmem>>, vector<8x8xf32>,
    %66 = vector.extract_strided_slice %27 {offsets = [0, 16], sizes = [8, 8], strides = [1, 1]} : vector<8x32xf32> to vector<8x8xf32>
    %67 = vector.extract_strided_slice %28 {offsets = [0, 16], sizes = [8, 8], strides = [1, 1]} : vector<8x32xf32> to vector<8x8xf32>
    %68 = vector.extract_strided_slice %29 {offsets = [0, 16], sizes = [8, 8], strides = [1, 1]} : vector<8x32xf32> to vector<8x8xf32>
    %cst_31 = arith.constant dense<0.000000e+00> : vector<8x8xf32>
    %69 = tpu.matmul %66, %67, %cst_31 {dimension_numbers = #tpu.dot_dimension_numbers<[1], [1], [0], [0], [0, 0, 1, 0], [], []>} : vector<8x8xf32>, vector<8x8xf32>, vector<8x8xf32> -> vector<8x8xf32>
    %70 = vector.broadcast %25 : vector<1x8xf32> to vector<8x8xf32>
    %71 = arith.addf %69, %70 : vector<8x8xf32>
    %cst_32 = arith.constant dense<0xFF800000> : vector<8xf32>
    %72 = vector.multi_reduction <maximumf>, %71, %cst_32 [1] : vector<8x8xf32> to vector<8xf32>
    %73 = vector.shape_cast %72 : vector<8xf32> to vector<8x1xf32>
    %74 = vector.broadcast %73 : vector<8x1xf32> to vector<8x8xf32>
    %75 = arith.subf %71, %74 : vector<8x8xf32>
    %76 = math.exp %75 : vector<8x8xf32>
    %cst_33 = arith.constant dense<0.000000e+00> : vector<8xf32>
    %77 = vector.multi_reduction <add>, %76, %cst_33 [1] : vector<8x8xf32> to vector<8xf32>
    %78 = vector.shape_cast %77 : vector<8xf32> to vector<8x1xf32>
    %79 = tpu.reciprocal %78 {approx = true} : vector<8x1xf32> -> vector<8x1xf32>
    %80 = vector.broadcast %79 : vector<8x1xf32> to vector<8x8xf32>
    %81 = arith.mulf %76, %80 : vector<8x8xf32>
    %cst_34 = arith.constant dense<0.000000e+00> : vector<8x8xf32>
    %82 = tpu.matmul %81, %68, %cst_34 {dimension_numbers = #tpu.dot_dimension_numbers<[1], [0], [0], [1], [0, 0, 1, 1], [], []>} : vector<8x8xf32>, vector<8x8xf32>, vector<8x8xf32> -> vector<8x8xf32>
    %c0_35 = arith.constant 0 : index
    %c16 = arith.constant 16 : index
    %83 = vector.load %arg10[%c0_35, %c16] : memref<16x32xf32, #tpu.memory_space<vmem>>, vector<8x8xf32>
    tpu.vector_store %arg10[%c0_35, %c16], %82 {strides = array<i32>} : memref<16x32xf32, #tpu.memory_space<vmem>>, vector<8x8xf32>,
    %84 = vector.extract_strided_slice %27 {offsets = [0, 24], sizes = [8, 8], strides = [1, 1]} : vector<8x32xf32> to vector<8x8xf32>
    %85 = vector.extract_strided_slice %28 {offsets = [0, 24], sizes = [8, 8], strides = [1, 1]} : vector<8x32xf32> to vector<8x8xf32>
    %86 = vector.extract_strided_slice %29 {offsets = [0, 24], sizes = [8, 8], strides = [1, 1]} : vector<8x32xf32> to vector<8x8xf32>
    %cst_36 = arith.constant dense<0.000000e+00> : vector<8x8xf32>
    %87 = tpu.matmul %84, %85, %cst_36 {dimension_numbers = #tpu.dot_dimension_numbers<[1], [1], [0], [0], [0, 0, 1, 0], [], []>} : vector<8x8xf32>, vector<8x8xf32>, vector<8x8xf32> -> vector<8x8xf32>
    %88 = vector.broadcast %25 : vector<1x8xf32> to vector<8x8xf32>
    %89 = arith.addf %87, %88 : vector<8x8xf32>
    %cst_37 = arith.constant dense<0xFF800000> : vector<8xf32>
    %90 = vector.multi_reduction <maximumf>, %89, %cst_37 [1] : vector<8x8xf32> to vector<8xf32>
    %91 = vector.shape_cast %90 : vector<8xf32> to vector<8x1xf32>
    %92 = vector.broadcast %91 : vector<8x1xf32> to vector<8x8xf32>
    %93 = arith.subf %89, %92 : vector<8x8xf32>
    %94 = math.exp %93 : vector<8x8xf32>
    %cst_38 = arith.constant dense<0.000000e+00> : vector<8xf32>
    %95 = vector.multi_reduction <add>, %94, %cst_38 [1] : vector<8x8xf32> to vector<8xf32>
    %96 = vector.shape_cast %95 : vector<8xf32> to vector<8x1xf32>
    %97 = tpu.reciprocal %96 {approx = true} : vector<8x1xf32> -> vector<8x1xf32>
    %98 = vector.broadcast %97 : vector<8x1xf32> to vector<8x8xf32>
    %99 = arith.mulf %94, %98 : vector<8x8xf32>
    %cst_39 = arith.constant dense<0.000000e+00> : vector<8x8xf32>
    %100 = tpu.matmul %99, %86, %cst_39 {dimension_numbers = #tpu.dot_dimension_numbers<[1], [0], [0], [1], [0, 0, 1, 1], [], []>} : vector<8x8xf32>, vector<8x8xf32>, vector<8x8xf32> -> vector<8x8xf32>
    %c0_40 = arith.constant 0 : index
    %c24 = arith.constant 24 : index
    %101 = vector.load %arg10[%c0_40, %c24] : memref<16x32xf32, #tpu.memory_space<vmem>>, vector<8x8xf32>
    tpu.vector_store %arg10[%c0_40, %c24], %100 {strides = array<i32>} : memref<16x32xf32, #tpu.memory_space<vmem>>, vector<8x8xf32>,
    %102 = vector.extract_strided_slice %3 {offsets = [1, 0], sizes = [1, 8], strides = [1, 1]} : vector<2x8xf32> to vector<1x8xf32>
    %103 = vector.extract_strided_slice %24 {offsets = [8, 0], sizes = [8, 96], strides = [1, 1]} : vector<16x96xf32> to vector<8x96xf32>
    %104 = vector.extract_strided_slice %103 {offsets = [0, 0], sizes = [8, 32], strides = [1, 1]} : vector<8x96xf32> to vector<8x32xf32>
    %105 = vector.extract_strided_slice %103 {offsets = [0, 32], sizes = [8, 32], strides = [1, 1]} : vector<8x96xf32> to vector<8x32xf32>
    %106 = vector.extract_strided_slice %103 {offsets = [0, 64], sizes = [8, 32], strides = [1, 1]} : vector<8x96xf32> to vector<8x32xf32>
    %107 = vector.extract_strided_slice %104 {offsets = [0, 0], sizes = [8, 8], strides = [1, 1]} : vector<8x32xf32> to vector<8x8xf32>
    %108 = vector.extract_strided_slice %105 {offsets = [0, 0], sizes = [8, 8], strides = [1, 1]} : vector<8x32xf32> to vector<8x8xf32>
    %109 = vector.extract_strided_slice %106 {offsets = [0, 0], sizes = [8, 8], strides = [1, 1]} : vector<8x32xf32> to vector<8x8xf32>
    %cst_41 = arith.constant dense<0.000000e+00> : vector<8x8xf32>
    %110 = tpu.matmul %107, %108, %cst_41 {dimension_numbers = #tpu.dot_dimension_numbers<[1], [1], [0], [0], [0, 0, 1, 0], [], []>} : vector<8x8xf32>, vector<8x8xf32>, vector<8x8xf32> -> vector<8x8xf32>
    %111 = vector.broadcast %102 : vector<1x8xf32> to vector<8x8xf32>
    %112 = arith.addf %110, %111 : vector<8x8xf32>
    %cst_42 = arith.constant dense<0xFF800000> : vector<8xf32>
    %113 = vector.multi_reduction <maximumf>, %112, %cst_42 [1] : vector<8x8xf32> to vector<8xf32>
    %114 = vector.shape_cast %113 : vector<8xf32> to vector<8x1xf32>
    %115 = vector.broadcast %114 : vector<8x1xf32> to vector<8x8xf32>
    %116 = arith.subf %112, %115 : vector<8x8xf32>
    %117 = math.exp %116 : vector<8x8xf32>
    %cst_43 = arith.constant dense<0.000000e+00> : vector<8xf32>
    %118 = vector.multi_reduction <add>, %117, %cst_43 [1] : vector<8x8xf32> to vector<8xf32>
    %119 = vector.shape_cast %118 : vector<8xf32> to vector<8x1xf32>
    %120 = tpu.reciprocal %119 {approx = true} : vector<8x1xf32> -> vector<8x1xf32>
    %121 = vector.broadcast %120 : vector<8x1xf32> to vector<8x8xf32>
    %122 = arith.mulf %117, %121 : vector<8x8xf32>
    %cst_44 = arith.constant dense<0.000000e+00> : vector<8x8xf32>
    %123 = tpu.matmul %122, %109, %cst_44 {dimension_numbers = #tpu.dot_dimension_numbers<[1], [0], [0], [1], [0, 0, 1, 1], [], []>} : vector<8x8xf32>, vector<8x8xf32>, vector<8x8xf32> -> vector<8x8xf32>
    %c8_45 = arith.constant 8 : index
    %c0_46 = arith.constant 0 : index
    %124 = vector.load %arg10[%c8_45, %c0_46] : memref<16x32xf32, #tpu.memory_space<vmem>>, vector<8x8xf32>
    tpu.vector_store %arg10[%c8_45, %c0_46], %123 {strides = array<i32>} : memref<16x32xf32, #tpu.memory_space<vmem>>, vector<8x8xf32>,
    %125 = vector.extract_strided_slice %104 {offsets = [0, 8], sizes = [8, 8], strides = [1, 1]} : vector<8x32xf32> to vector<8x8xf32>
    %126 = vector.extract_strided_slice %105 {offsets = [0, 8], sizes = [8, 8], strides = [1, 1]} : vector<8x32xf32> to vector<8x8xf32>
    %127 = vector.extract_strided_slice %106 {offsets = [0, 8], sizes = [8, 8], strides = [1, 1]} : vector<8x32xf32> to vector<8x8xf32>
    %cst_47 = arith.constant dense<0.000000e+00> : vector<8x8xf32>
    %128 = tpu.matmul %125, %126, %cst_47 {dimension_numbers = #tpu.dot_dimension_numbers<[1], [1], [0], [0], [0, 0, 1, 0], [], []>} : vector<8x8xf32>, vector<8x8xf32>, vector<8x8xf32> -> vector<8x8xf32>
    %129 = vector.broadcast %102 : vector<1x8xf32> to vector<8x8xf32>
    %130 = arith.addf %128, %129 : vector<8x8xf32>
    %cst_48 = arith.constant dense<0xFF800000> : vector<8xf32>
    %131 = vector.multi_reduction <maximumf>, %130, %cst_48 [1] : vector<8x8xf32> to vector<8xf32>
    %132 = vector.shape_cast %131 : vector<8xf32> to vector<8x1xf32>
    %133 = vector.broadcast %132 : vector<8x1xf32> to vector<8x8xf32>
    %134 = arith.subf %130, %133 : vector<8x8xf32>
    %135 = math.exp %134 : vector<8x8xf32>
    %cst_49 = arith.constant dense<0.000000e+00> : vector<8xf32>
    %136 = vector.multi_reduction <add>, %135, %cst_49 [1] : vector<8x8xf32> to vector<8xf32>
    %137 = vector.shape_cast %136 : vector<8xf32> to vector<8x1xf32>
    %138 = tpu.reciprocal %137 {approx = true} : vector<8x1xf32> -> vector<8x1xf32>
    %139 = vector.broadcast %138 : vector<8x1xf32> to vector<8x8xf32>
    %140 = arith.mulf %135, %139 : vector<8x8xf32>
    %cst_50 = arith.constant dense<0.000000e+00> : vector<8x8xf32>
    %141 = tpu.matmul %140, %127, %cst_50 {dimension_numbers = #tpu.dot_dimension_numbers<[1], [0], [0], [1], [0, 0, 1, 1], [], []>} : vector<8x8xf32>, vector<8x8xf32>, vector<8x8xf32> -> vector<8x8xf32>
    %c8_51 = arith.constant 8 : index
    %c8_52 = arith.constant 8 : index
    %142 = vector.load %arg10[%c8_51, %c8_52] : memref<16x32xf32, #tpu.memory_space<vmem>>, vector<8x8xf32>
    tpu.vector_store %arg10[%c8_51, %c8_52], %141 {strides = array<i32>} : memref<16x32xf32, #tpu.memory_space<vmem>>, vector<8x8xf32>,
    %143 = vector.extract_strided_slice %104 {offsets = [0, 16], sizes = [8, 8], strides = [1, 1]} : vector<8x32xf32> to vector<8x8xf32>
    %144 = vector.extract_strided_slice %105 {offsets = [0, 16], sizes = [8, 8], strides = [1, 1]} : vector<8x32xf32> to vector<8x8xf32>
    %145 = vector.extract_strided_slice %106 {offsets = [0, 16], sizes = [8, 8], strides = [1, 1]} : vector<8x32xf32> to vector<8x8xf32>
    %cst_53 = arith.constant dense<0.000000e+00> : vector<8x8xf32>
    %146 = tpu.matmul %143, %144, %cst_53 {dimension_numbers = #tpu.dot_dimension_numbers<[1], [1], [0], [0], [0, 0, 1, 0], [], []>} : vector<8x8xf32>, vector<8x8xf32>, vector<8x8xf32> -> vector<8x8xf32>
    %147 = vector.broadcast %102 : vector<1x8xf32> to vector<8x8xf32>
    %148 = arith.addf %146, %147 : vector<8x8xf32>
    %cst_54 = arith.constant dense<0xFF800000> : vector<8xf32>
    %149 = vector.multi_reduction <maximumf>, %148, %cst_54 [1] : vector<8x8xf32> to vector<8xf32>
    %150 = vector.shape_cast %149 : vector<8xf32> to vector<8x1xf32>
    %151 = vector.broadcast %150 : vector<8x1xf32> to vector<8x8xf32>
    %152 = arith.subf %148, %151 : vector<8x8xf32>
    %153 = math.exp %152 : vector<8x8xf32>
    %cst_55 = arith.constant dense<0.000000e+00> : vector<8xf32>
    %154 = vector.multi_reduction <add>, %153, %cst_55 [1] : vector<8x8xf32> to vector<8xf32>
    %155 = vector.shape_cast %154 : vector<8xf32> to vector<8x1xf32>
    %156 = tpu.reciprocal %155 {approx = true} : vector<8x1xf32> -> vector<8x1xf32>
    %157 = vector.broadcast %156 : vector<8x1xf32> to vector<8x8xf32>
    %158 = arith.mulf %153, %157 : vector<8x8xf32>
    %cst_56 = arith.constant dense<0.000000e+00> : vector<8x8xf32>
    %159 = tpu.matmul %158, %145, %cst_56 {dimension_numbers = #tpu.dot_dimension_numbers<[1], [0], [0], [1], [0, 0, 1, 1], [], []>} : vector<8x8xf32>, vector<8x8xf32>, vector<8x8xf32> -> vector<8x8xf32>
    %c8_57 = arith.constant 8 : index
    %c16_58 = arith.constant 16 : index
    %160 = vector.load %arg10[%c8_57, %c16_58] : memref<16x32xf32, #tpu.memory_space<vmem>>, vector<8x8xf32>
    tpu.vector_store %arg10[%c8_57, %c16_58], %159 {strides = array<i32>} : memref<16x32xf32, #tpu.memory_space<vmem>>, vector<8x8xf32>,
    %161 = vector.extract_strided_slice %104 {offsets = [0, 24], sizes = [8, 8], strides = [1, 1]} : vector<8x32xf32> to vector<8x8xf32>
    %162 = vector.extract_strided_slice %105 {offsets = [0, 24], sizes = [8, 8], strides = [1, 1]} : vector<8x32xf32> to vector<8x8xf32>
    %163 = vector.extract_strided_slice %106 {offsets = [0, 24], sizes = [8, 8], strides = [1, 1]} : vector<8x32xf32> to vector<8x8xf32>
    %cst_59 = arith.constant dense<0.000000e+00> : vector<8x8xf32>
    %164 = tpu.matmul %161, %162, %cst_59 {dimension_numbers = #tpu.dot_dimension_numbers<[1], [1], [0], [0], [0, 0, 1, 0], [], []>} : vector<8x8xf32>, vector<8x8xf32>, vector<8x8xf32> -> vector<8x8xf32>
    %165 = vector.broadcast %102 : vector<1x8xf32> to vector<8x8xf32>
    %166 = arith.addf %164, %165 : vector<8x8xf32>
    %cst_60 = arith.constant dense<0xFF800000> : vector<8xf32>
    %167 = vector.multi_reduction <maximumf>, %166, %cst_60 [1] : vector<8x8xf32> to vector<8xf32>
    %168 = vector.shape_cast %167 : vector<8xf32> to vector<8x1xf32>
    %169 = vector.broadcast %168 : vector<8x1xf32> to vector<8x8xf32>
    %170 = arith.subf %166, %169 : vector<8x8xf32>
    %171 = math.exp %170 : vector<8x8xf32>
    %cst_61 = arith.constant dense<0.000000e+00> : vector<8xf32>
    %172 = vector.multi_reduction <add>, %171, %cst_61 [1] : vector<8x8xf32> to vector<8xf32>
    %173 = vector.shape_cast %172 : vector<8xf32> to vector<8x1xf32>
    %174 = tpu.reciprocal %173 {approx = true} : vector<8x1xf32> -> vector<8x1xf32>
    %175 = vector.broadcast %174 : vector<8x1xf32> to vector<8x8xf32>
    %176 = arith.mulf %171, %175 : vector<8x8xf32>
    %cst_62 = arith.constant dense<0.000000e+00> : vector<8x8xf32>
    %177 = tpu.matmul %176, %163, %cst_62 {dimension_numbers = #tpu.dot_dimension_numbers<[1], [0], [0], [1], [0, 0, 1, 1], [], []>} : vector<8x8xf32>, vector<8x8xf32>, vector<8x8xf32> -> vector<8x8xf32>
    %c8_63 = arith.constant 8 : index
    %c24_64 = arith.constant 24 : index
    %178 = vector.load %arg10[%c8_63, %c24_64] : memref<16x32xf32, #tpu.memory_space<vmem>>, vector<8x8xf32>
    tpu.vector_store %arg10[%c8_63, %c24_64], %177 {strides = array<i32>} : memref<16x32xf32, #tpu.memory_space<vmem>>, vector<8x8xf32>,
    %c0_65 = arith.constant 0 : index
    %c0_66 = arith.constant 0 : index
    %179 = vector.load %arg10[%c0_65, %c0_66] : memref<16x32xf32, #tpu.memory_space<vmem>>, vector<16x32xf32>
    %cst_67 = arith.constant dense<0.000000e+00> : vector<16x32xf32>
    %180 = tpu.matmul %179, %7, %cst_67 {dimension_numbers = #tpu.dot_dimension_numbers<[1], [0], [0], [1], [0, 0, 1, 1], [], []>} : vector<16x32xf32>, vector<32x32xf32>, vector<16x32xf32> -> vector<16x32xf32>
    %181 = vector.broadcast %15 : vector<1x32xf32> to vector<16x32xf32>
    %182 = arith.addf %180, %181 : vector<16x32xf32>
    %183 = arith.addf %2, %182 : vector<16x32xf32>
    %cst_68 = arith.constant dense<0.000000e+00> : vector<16xf32>
    %184 = vector.multi_reduction <add>, %183, %cst_68 [1] : vector<16x32xf32> to vector<16xf32>
    %185 = vector.shape_cast %184 : vector<16xf32> to vector<16x1xf32>
    %cst_69 = arith.constant 3.200000e+01 : f32
    %186 = vector.broadcast %cst_69 : f32 to vector<16x1xf32>
    %187 = arith.divf %185, %186 : vector<16x1xf32>
    %188 = vector.broadcast %187 : vector<16x1xf32> to vector<16x32xf32>
    %189 = arith.subf %183, %188 : vector<16x32xf32>
    %190 = arith.mulf %189, %189 : vector<16x32xf32>
    %cst_70 = arith.constant dense<0.000000e+00> : vector<16xf32>
    %191 = vector.multi_reduction <add>, %190, %cst_70 [1] : vector<16x32xf32> to vector<16xf32>
    %192 = vector.shape_cast %191 : vector<16xf32> to vector<16x1xf32>
    %cst_71 = arith.constant 3.200000e+01 : f32
    %193 = vector.broadcast %cst_71 : f32 to vector<16x1xf32>
    %194 = arith.divf %192, %193 : vector<16x1xf32>
    %195 = vector.broadcast %187 : vector<16x1xf32> to vector<16x32xf32>
    %196 = arith.subf %183, %195 : vector<16x32xf32>
    %cst_72 = arith.constant 9.99999974E-6 : f32
    %197 = vector.broadcast %cst_72 : f32 to vector<16x1xf32>
    %198 = arith.addf %194, %197 : vector<16x1xf32>
    %199 = math.rsqrt %198 : vector<16x1xf32>
    %200 = vector.broadcast %199 : vector<16x1xf32> to vector<16x32xf32>
    %201 = arith.mulf %196, %200 : vector<16x32xf32>
    %202 = vector.broadcast %16 : vector<1x32xf32> to vector<16x32xf32>
    %203 = arith.mulf %201, %202 : vector<16x32xf32>
    %204 = vector.broadcast %17 : vector<1x32xf32> to vector<16x32xf32>
    %205 = arith.addf %203, %204 : vector<16x32xf32>
    %cst_73 = arith.constant dense<0.000000e+00> : vector<16x64xf32>
    %206 = tpu.matmul %205, %9, %cst_73 {dimension_numbers = #tpu.dot_dimension_numbers<[1], [0], [0], [1], [0, 0, 1, 1], [], []>} : vector<16x32xf32>, vector<32x64xf32>, vector<16x64xf32> -> vector<16x64xf32>
    %207 = vector.broadcast %20 : vector<1x64xf32> to vector<16x64xf32>
    %208 = arith.addf %206, %207 : vector<16x64xf32>
    %cst_74 = arith.constant 0.000000e+00 : f32
    %209 = vector.broadcast %cst_74 : f32 to vector<16x64xf32>
    %210 = arith.maximumf %208, %209 : vector<16x64xf32>
    %cst_75 = arith.constant dense<0.000000e+00> : vector<16x32xf32>
    %211 = tpu.matmul %210, %11, %cst_75 {dimension_numbers = #tpu.dot_dimension_numbers<[1], [0], [0], [1], [0, 0, 1, 1], [], []>} : vector<16x64xf32>, vector<64x32xf32>, vector<16x32xf32> -> vector<16x32xf32>
    %212 = vector.broadcast %21 : vector<1x32xf32> to vector<16x32xf32>
    %213 = arith.addf %211, %212 : vector<16x32xf32>
    %214 = arith.addf %205, %213 : vector<16x32xf32>
    %cst_76 = arith.constant dense<0.000000e+00> : vector<16xf32>
    %215 = vector.multi_reduction <add>, %214, %cst_76 [1] : vector<16x32xf32> to vector<16xf32>
    %216 = vector.shape_cast %215 : vector<16xf32> to vector<16x1xf32>
    %cst_77 = arith.constant 3.200000e+01 : f32
    %217 = vector.broadcast %cst_77 : f32 to vector<16x1xf32>
    %218 = arith.divf %216, %217 : vector<16x1xf32>
    %219 = vector.broadcast %218 : vector<16x1xf32> to vector<16x32xf32>
    %220 = arith.subf %214, %219 : vector<16x32xf32>
    %221 = arith.mulf %220, %220 : vector<16x32xf32>
    %cst_78 = arith.constant dense<0.000000e+00> : vector<16xf32>
    %222 = vector.multi_reduction <add>, %221, %cst_78 [1] : vector<16x32xf32> to vector<16xf32>
    %223 = vector.shape_cast %222 : vector<16xf32> to vector<16x1xf32>
    %cst_79 = arith.constant 3.200000e+01 : f32
    %224 = vector.broadcast %cst_79 : f32 to vector<16x1xf32>
    %225 = arith.divf %223, %224 : vector<16x1xf32>
    %226 = vector.broadcast %218 : vector<16x1xf32> to vector<16x32xf32>
    %227 = arith.subf %214, %226 : vector<16x32xf32>
    %cst_80 = arith.constant 9.99999974E-6 : f32
    %228 = vector.broadcast %cst_80 : f32 to vector<16x1xf32>
    %229 = arith.addf %225, %228 : vector<16x1xf32>
    %230 = math.rsqrt %229 : vector<16x1xf32>
    %231 = vector.broadcast %230 : vector<16x1xf32> to vector<16x32xf32>
    %232 = arith.mulf %227, %231 : vector<16x32xf32>
    %233 = vector.broadcast %18 : vector<1x32xf32> to vector<16x32xf32>
    %234 = arith.mulf %232, %233 : vector<16x32xf32>
    %235 = vector.broadcast %19 : vector<1x32xf32> to vector<16x32xf32>
    %236 = arith.addf %234, %235 : vector<16x32xf32>
    %c1 = arith.constant 1 : index
    %c0_81 = arith.constant 0 : index
    %c0_82 = arith.constant 0 : index
    %237 = vector.load %arg3[%c1, %c0_81, %c0_82] : memref<2x32x96xf32, #tpu.memory_space<vmem>>, vector<1x32x96xf32>
    %238 = vector.shape_cast %237 : vector<1x32x96xf32> to vector<32x96xf32>
    %c1_83 = arith.constant 1 : index
    %c0_84 = arith.constant 0 : index
    %c0_85 = arith.constant 0 : index
    %239 = vector.load %arg4[%c1_83, %c0_84, %c0_85] : memref<2x32x32xf32, #tpu.memory_space<vmem>>, vector<1x32x32xf32>
    %240 = vector.shape_cast %239 : vector<1x32x32xf32> to vector<32x32xf32>
    %c1_86 = arith.constant 1 : index
    %c0_87 = arith.constant 0 : index
    %c0_88 = arith.constant 0 : index
    %241 = vector.load %arg5[%c1_86, %c0_87, %c0_88] : memref<2x32x64xf32, #tpu.memory_space<vmem>>, vector<1x32x64xf32>
    %242 = vector.shape_cast %241 : vector<1x32x64xf32> to vector<32x64xf32>
    %c1_89 = arith.constant 1 : index
    %c0_90 = arith.constant 0 : index
    %c0_91 = arith.constant 0 : index
    %243 = vector.load %arg6[%c1_89, %c0_90, %c0_91] : memref<2x64x32xf32, #tpu.memory_space<vmem>>, vector<1x64x32xf32>
    %244 = vector.shape_cast %243 : vector<1x64x32xf32> to vector<64x32xf32>
    %c1_92 = arith.constant 1 : index
    %c0_93 = arith.constant 0 : index
    %c0_94 = arith.constant 0 : index
    %245 = vector.load %arg7[%c1_92, %c0_93, %c0_94] : memref<2x8x96xf32, #tpu.memory_space<vmem>>, vector<1x8x96xf32>
    %246 = vector.shape_cast %245 : vector<1x8x96xf32> to vector<8x96xf32>
    %247 = vector.extract_strided_slice %246 {offsets = [0, 0], sizes = [1, 96], strides = [1, 1]} : vector<8x96xf32> to vector<1x96xf32>
    %248 = vector.extract_strided_slice %246 {offsets = [1, 0], sizes = [1, 32], strides = [1, 1]} : vector<8x96xf32> to vector<1x32xf32>
    %249 = vector.extract_strided_slice %246 {offsets = [2, 0], sizes = [1, 32], strides = [1, 1]} : vector<8x96xf32> to vector<1x32xf32>
    %250 = vector.extract_strided_slice %246 {offsets = [3, 0], sizes = [1, 32], strides = [1, 1]} : vector<8x96xf32> to vector<1x32xf32>
    %251 = vector.extract_strided_slice %246 {offsets = [4, 0], sizes = [1, 32], strides = [1, 1]} : vector<8x96xf32> to vector<1x32xf32>
    %252 = vector.extract_strided_slice %246 {offsets = [5, 0], sizes = [1, 32], strides = [1, 1]} : vector<8x96xf32> to vector<1x32xf32>
    %253 = vector.extract_strided_slice %246 {offsets = [6, 0], sizes = [1, 64], strides = [1, 1]} : vector<8x96xf32> to vector<1x64xf32>
    %254 = vector.extract_strided_slice %246 {offsets = [7, 0], sizes = [1, 32], strides = [1, 1]} : vector<8x96xf32> to vector<1x32xf32>
    %cst_95 = arith.constant dense<0.000000e+00> : vector<16x96xf32>
    %255 = tpu.matmul %236, %238, %cst_95 {dimension_numbers = #tpu.dot_dimension_numbers<[1], [0], [0], [1], [0, 0, 1, 1], [], []>} : vector<16x32xf32>, vector<32x96xf32>, vector<16x96xf32> -> vector<16x96xf32>
    %256 = vector.broadcast %247 : vector<1x96xf32> to vector<16x96xf32>
    %257 = arith.addf %255, %256 : vector<16x96xf32>
    %258 = vector.extract_strided_slice %3 {offsets = [0, 0], sizes = [1, 8], strides = [1, 1]} : vector<2x8xf32> to vector<1x8xf32>
    %259 = vector.extract_strided_slice %257 {offsets = [0, 0], sizes = [8, 96], strides = [1, 1]} : vector<16x96xf32> to vector<8x96xf32>
    %260 = vector.extract_strided_slice %259 {offsets = [0, 0], sizes = [8, 32], strides = [1, 1]} : vector<8x96xf32> to vector<8x32xf32>
    %261 = vector.extract_strided_slice %259 {offsets = [0, 32], sizes = [8, 32], strides = [1, 1]} : vector<8x96xf32> to vector<8x32xf32>
    %262 = vector.extract_strided_slice %259 {offsets = [0, 64], sizes = [8, 32], strides = [1, 1]} : vector<8x96xf32> to vector<8x32xf32>
    %263 = vector.extract_strided_slice %260 {offsets = [0, 0], sizes = [8, 8], strides = [1, 1]} : vector<8x32xf32> to vector<8x8xf32>
    %264 = vector.extract_strided_slice %261 {offsets = [0, 0], sizes = [8, 8], strides = [1, 1]} : vector<8x32xf32> to vector<8x8xf32>
    %265 = vector.extract_strided_slice %262 {offsets = [0, 0], sizes = [8, 8], strides = [1, 1]} : vector<8x32xf32> to vector<8x8xf32>
    %cst_96 = arith.constant dense<0.000000e+00> : vector<8x8xf32>
    %266 = tpu.matmul %263, %264, %cst_96 {dimension_numbers = #tpu.dot_dimension_numbers<[1], [1], [0], [0], [0, 0, 1, 0], [], []>} : vector<8x8xf32>, vector<8x8xf32>, vector<8x8xf32> -> vector<8x8xf32>
    %267 = vector.broadcast %258 : vector<1x8xf32> to vector<8x8xf32>
    %268 = arith.addf %266, %267 : vector<8x8xf32>
    %cst_97 = arith.constant dense<0xFF800000> : vector<8xf32>
    %269 = vector.multi_reduction <maximumf>, %268, %cst_97 [1] : vector<8x8xf32> to vector<8xf32>
    %270 = vector.shape_cast %269 : vector<8xf32> to vector<8x1xf32>
    %271 = vector.broadcast %270 : vector<8x1xf32> to vector<8x8xf32>
    %272 = arith.subf %268, %271 : vector<8x8xf32>
    %273 = math.exp %272 : vector<8x8xf32>
    %cst_98 = arith.constant dense<0.000000e+00> : vector<8xf32>
    %274 = vector.multi_reduction <add>, %273, %cst_98 [1] : vector<8x8xf32> to vector<8xf32>
    %275 = vector.shape_cast %274 : vector<8xf32> to vector<8x1xf32>
    %276 = tpu.reciprocal %275 {approx = true} : vector<8x1xf32> -> vector<8x1xf32>
    %277 = vector.broadcast %276 : vector<8x1xf32> to vector<8x8xf32>
    %278 = arith.mulf %273, %277 : vector<8x8xf32>
    %cst_99 = arith.constant dense<0.000000e+00> : vector<8x8xf32>
    %279 = tpu.matmul %278, %265, %cst_99 {dimension_numbers = #tpu.dot_dimension_numbers<[1], [0], [0], [1], [0, 0, 1, 1], [], []>} : vector<8x8xf32>, vector<8x8xf32>, vector<8x8xf32> -> vector<8x8xf32>
    %c0_100 = arith.constant 0 : index
    %c0_101 = arith.constant 0 : index
    %280 = vector.load %arg10[%c0_100, %c0_101] : memref<16x32xf32, #tpu.memory_space<vmem>>, vector<8x8xf32>
    tpu.vector_store %arg10[%c0_100, %c0_101], %279 {strides = array<i32>} : memref<16x32xf32, #tpu.memory_space<vmem>>, vector<8x8xf32>,
    %281 = vector.extract_strided_slice %260 {offsets = [0, 8], sizes = [8, 8], strides = [1, 1]} : vector<8x32xf32> to vector<8x8xf32>
    %282 = vector.extract_strided_slice %261 {offsets = [0, 8], sizes = [8, 8], strides = [1, 1]} : vector<8x32xf32> to vector<8x8xf32>
    %283 = vector.extract_strided_slice %262 {offsets = [0, 8], sizes = [8, 8], strides = [1, 1]} : vector<8x32xf32> to vector<8x8xf32>
    %cst_102 = arith.constant dense<0.000000e+00> : vector<8x8xf32>
    %284 = tpu.matmul %281, %282, %cst_102 {dimension_numbers = #tpu.dot_dimension_numbers<[1], [1], [0], [0], [0, 0, 1, 0], [], []>} : vector<8x8xf32>, vector<8x8xf32>, vector<8x8xf32> -> vector<8x8xf32>
    %285 = vector.broadcast %258 : vector<1x8xf32> to vector<8x8xf32>
    %286 = arith.addf %284, %285 : vector<8x8xf32>
    %cst_103 = arith.constant dense<0xFF800000> : vector<8xf32>
    %287 = vector.multi_reduction <maximumf>, %286, %cst_103 [1] : vector<8x8xf32> to vector<8xf32>
    %288 = vector.shape_cast %287 : vector<8xf32> to vector<8x1xf32>
    %289 = vector.broadcast %288 : vector<8x1xf32> to vector<8x8xf32>
    %290 = arith.subf %286, %289 : vector<8x8xf32>
    %291 = math.exp %290 : vector<8x8xf32>
    %cst_104 = arith.constant dense<0.000000e+00> : vector<8xf32>
    %292 = vector.multi_reduction <add>, %291, %cst_104 [1] : vector<8x8xf32> to vector<8xf32>
    %293 = vector.shape_cast %292 : vector<8xf32> to vector<8x1xf32>
    %294 = tpu.reciprocal %293 {approx = true} : vector<8x1xf32> -> vector<8x1xf32>
    %295 = vector.broadcast %294 : vector<8x1xf32> to vector<8x8xf32>
    %296 = arith.mulf %291, %295 : vector<8x8xf32>
    %cst_105 = arith.constant dense<0.000000e+00> : vector<8x8xf32>
    %297 = tpu.matmul %296, %283, %cst_105 {dimension_numbers = #tpu.dot_dimension_numbers<[1], [0], [0], [1], [0, 0, 1, 1], [], []>} : vector<8x8xf32>, vector<8x8xf32>, vector<8x8xf32> -> vector<8x8xf32>
    %c0_106 = arith.constant 0 : index
    %c8_107 = arith.constant 8 : index
    %298 = vector.load %arg10[%c0_106, %c8_107] : memref<16x32xf32, #tpu.memory_space<vmem>>, vector<8x8xf32>
    tpu.vector_store %arg10[%c0_106, %c8_107], %297 {strides = array<i32>} : memref<16x32xf32, #tpu.memory_space<vmem>>, vector<8x8xf32>,
    %299 = vector.extract_strided_slice %260 {offsets = [0, 16], sizes = [8, 8], strides = [1, 1]} : vector<8x32xf32> to vector<8x8xf32>
    %300 = vector.extract_strided_slice %261 {offsets = [0, 16], sizes = [8, 8], strides = [1, 1]} : vector<8x32xf32> to vector<8x8xf32>
    %301 = vector.extract_strided_slice %262 {offsets = [0, 16], sizes = [8, 8], strides = [1, 1]} : vector<8x32xf32> to vector<8x8xf32>
    %cst_108 = arith.constant dense<0.000000e+00> : vector<8x8xf32>
    %302 = tpu.matmul %299, %300, %cst_108 {dimension_numbers = #tpu.dot_dimension_numbers<[1], [1], [0], [0], [0, 0, 1, 0], [], []>} : vector<8x8xf32>, vector<8x8xf32>, vector<8x8xf32> -> vector<8x8xf32>
    %303 = vector.broadcast %258 : vector<1x8xf32> to vector<8x8xf32>
    %304 = arith.addf %302, %303 : vector<8x8xf32>
    %cst_109 = arith.constant dense<0xFF800000> : vector<8xf32>
    %305 = vector.multi_reduction <maximumf>, %304, %cst_109 [1] : vector<8x8xf32> to vector<8xf32>
    %306 = vector.shape_cast %305 : vector<8xf32> to vector<8x1xf32>
    %307 = vector.broadcast %306 : vector<8x1xf32> to vector<8x8xf32>
    %308 = arith.subf %304, %307 : vector<8x8xf32>
    %309 = math.exp %308 : vector<8x8xf32>
    %cst_110 = arith.constant dense<0.000000e+00> : vector<8xf32>
    %310 = vector.multi_reduction <add>, %309, %cst_110 [1] : vector<8x8xf32> to vector<8xf32>
    %311 = vector.shape_cast %310 : vector<8xf32> to vector<8x1xf32>
    %312 = tpu.reciprocal %311 {approx = true} : vector<8x1xf32> -> vector<8x1xf32>
    %313 = vector.broadcast %312 : vector<8x1xf32> to vector<8x8xf32>
    %314 = arith.mulf %309, %313 : vector<8x8xf32>
    %cst_111 = arith.constant dense<0.000000e+00> : vector<8x8xf32>
    %315 = tpu.matmul %314, %301, %cst_111 {dimension_numbers = #tpu.dot_dimension_numbers<[1], [0], [0], [1], [0, 0, 1, 1], [], []>} : vector<8x8xf32>, vector<8x8xf32>, vector<8x8xf32> -> vector<8x8xf32>
    %c0_112 = arith.constant 0 : index
    %c16_113 = arith.constant 16 : index
    %316 = vector.load %arg10[%c0_112, %c16_113] : memref<16x32xf32, #tpu.memory_space<vmem>>, vector<8x8xf32>
    tpu.vector_store %arg10[%c0_112, %c16_113], %315 {strides = array<i32>} : memref<16x32xf32, #tpu.memory_space<vmem>>, vector<8x8xf32>,
    %317 = vector.extract_strided_slice %260 {offsets = [0, 24], sizes = [8, 8], strides = [1, 1]} : vector<8x32xf32> to vector<8x8xf32>
    %318 = vector.extract_strided_slice %261 {offsets = [0, 24], sizes = [8, 8], strides = [1, 1]} : vector<8x32xf32> to vector<8x8xf32>
    %319 = vector.extract_strided_slice %262 {offsets = [0, 24], sizes = [8, 8], strides = [1, 1]} : vector<8x32xf32> to vector<8x8xf32>
    %cst_114 = arith.constant dense<0.000000e+00> : vector<8x8xf32>
    %320 = tpu.matmul %317, %318, %cst_114 {dimension_numbers = #tpu.dot_dimension_numbers<[1], [1], [0], [0], [0, 0, 1, 0], [], []>} : vector<8x8xf32>, vector<8x8xf32>, vector<8x8xf32> -> vector<8x8xf32>
    %321 = vector.broadcast %258 : vector<1x8xf32> to vector<8x8xf32>
    %322 = arith.addf %320, %321 : vector<8x8xf32>
    %cst_115 = arith.constant dense<0xFF800000> : vector<8xf32>
    %323 = vector.multi_reduction <maximumf>, %322, %cst_115 [1] : vector<8x8xf32> to vector<8xf32>
    %324 = vector.shape_cast %323 : vector<8xf32> to vector<8x1xf32>
    %325 = vector.broadcast %324 : vector<8x1xf32> to vector<8x8xf32>
    %326 = arith.subf %322, %325 : vector<8x8xf32>
    %327 = math.exp %326 : vector<8x8xf32>
    %cst_116 = arith.constant dense<0.000000e+00> : vector<8xf32>
    %328 = vector.multi_reduction <add>, %327, %cst_116 [1] : vector<8x8xf32> to vector<8xf32>
    %329 = vector.shape_cast %328 : vector<8xf32> to vector<8x1xf32>
    %330 = tpu.reciprocal %329 {approx = true} : vector<8x1xf32> -> vector<8x1xf32>
    %331 = vector.broadcast %330 : vector<8x1xf32> to vector<8x8xf32>
    %332 = arith.mulf %327, %331 : vector<8x8xf32>
    %cst_117 = arith.constant dense<0.000000e+00> : vector<8x8xf32>
    %333 = tpu.matmul %332, %319, %cst_117 {dimension_numbers = #tpu.dot_dimension_numbers<[1], [0], [0], [1], [0, 0, 1, 1], [], []>} : vector<8x8xf32>, vector<8x8xf32>, vector<8x8xf32> -> vector<8x8xf32>
    %c0_118 = arith.constant 0 : index
    %c24_119 = arith.constant 24 : index
    %334 = vector.load %arg10[%c0_118, %c24_119] : memref<16x32xf32, #tpu.memory_space<vmem>>, vector<8x8xf32>
    tpu.vector_store %arg10[%c0_118, %c24_119], %333 {strides = array<i32>} : memref<16x32xf32, #tpu.memory_space<vmem>>, vector<8x8xf32>,
    %335 = vector.extract_strided_slice %3 {offsets = [1, 0], sizes = [1, 8], strides = [1, 1]} : vector<2x8xf32> to vector<1x8xf32>
    %336 = vector.extract_strided_slice %257 {offsets = [8, 0], sizes = [8, 96], strides = [1, 1]} : vector<16x96xf32> to vector<8x96xf32>
    %337 = vector.extract_strided_slice %336 {offsets = [0, 0], sizes = [8, 32], strides = [1, 1]} : vector<8x96xf32> to vector<8x32xf32>
    %338 = vector.extract_strided_slice %336 {offsets = [0, 32], sizes = [8, 32], strides = [1, 1]} : vector<8x96xf32> to vector<8x32xf32>
    %339 = vector.extract_strided_slice %336 {offsets = [0, 64], sizes = [8, 32], strides = [1, 1]} : vector<8x96xf32> to vector<8x32xf32>
    %340 = vector.extract_strided_slice %337 {offsets = [0, 0], sizes = [8, 8], strides = [1, 1]} : vector<8x32xf32> to vector<8x8xf32>
    %341 = vector.extract_strided_slice %338 {offsets = [0, 0], sizes = [8, 8], strides = [1, 1]} : vector<8x32xf32> to vector<8x8xf32>
    %342 = vector.extract_strided_slice %339 {offsets = [0, 0], sizes = [8, 8], strides = [1, 1]} : vector<8x32xf32> to vector<8x8xf32>
    %cst_120 = arith.constant dense<0.000000e+00> : vector<8x8xf32>
    %343 = tpu.matmul %340, %341, %cst_120 {dimension_numbers = #tpu.dot_dimension_numbers<[1], [1], [0], [0], [0, 0, 1, 0], [], []>} : vector<8x8xf32>, vector<8x8xf32>, vector<8x8xf32> -> vector<8x8xf32>
    %344 = vector.broadcast %335 : vector<1x8xf32> to vector<8x8xf32>
    %345 = arith.addf %343, %344 : vector<8x8xf32>
    %cst_121 = arith.constant dense<0xFF800000> : vector<8xf32>
    %346 = vector.multi_reduction <maximumf>, %345, %cst_121 [1] : vector<8x8xf32> to vector<8xf32>
    %347 = vector.shape_cast %346 : vector<8xf32> to vector<8x1xf32>
    %348 = vector.broadcast %347 : vector<8x1xf32> to vector<8x8xf32>
    %349 = arith.subf %345, %348 : vector<8x8xf32>
    %350 = math.exp %349 : vector<8x8xf32>
    %cst_122 = arith.constant dense<0.000000e+00> : vector<8xf32>
    %351 = vector.multi_reduction <add>, %350, %cst_122 [1] : vector<8x8xf32> to vector<8xf32>
    %352 = vector.shape_cast %351 : vector<8xf32> to vector<8x1xf32>
    %353 = tpu.reciprocal %352 {approx = true} : vector<8x1xf32> -> vector<8x1xf32>
    %354 = vector.broadcast %353 : vector<8x1xf32> to vector<8x8xf32>
    %355 = arith.mulf %350, %354 : vector<8x8xf32>
    %cst_123 = arith.constant dense<0.000000e+00> : vector<8x8xf32>
    %356 = tpu.matmul %355, %342, %cst_123 {dimension_numbers = #tpu.dot_dimension_numbers<[1], [0], [0], [1], [0, 0, 1, 1], [], []>} : vector<8x8xf32>, vector<8x8xf32>, vector<8x8xf32> -> vector<8x8xf32>
    %c8_124 = arith.constant 8 : index
    %c0_125 = arith.constant 0 : index
    %357 = vector.load %arg10[%c8_124, %c0_125] : memref<16x32xf32, #tpu.memory_space<vmem>>, vector<8x8xf32>
    tpu.vector_store %arg10[%c8_124, %c0_125], %356 {strides = array<i32>} : memref<16x32xf32, #tpu.memory_space<vmem>>, vector<8x8xf32>,
    %358 = vector.extract_strided_slice %337 {offsets = [0, 8], sizes = [8, 8], strides = [1, 1]} : vector<8x32xf32> to vector<8x8xf32>
    %359 = vector.extract_strided_slice %338 {offsets = [0, 8], sizes = [8, 8], strides = [1, 1]} : vector<8x32xf32> to vector<8x8xf32>
    %360 = vector.extract_strided_slice %339 {offsets = [0, 8], sizes = [8, 8], strides = [1, 1]} : vector<8x32xf32> to vector<8x8xf32>
    %cst_126 = arith.constant dense<0.000000e+00> : vector<8x8xf32>
    %361 = tpu.matmul %358, %359, %cst_126 {dimension_numbers = #tpu.dot_dimension_numbers<[1], [1], [0], [0], [0, 0, 1, 0], [], []>} : vector<8x8xf32>, vector<8x8xf32>, vector<8x8xf32> -> vector<8x8xf32>
    %362 = vector.broadcast %335 : vector<1x8xf32> to vector<8x8xf32>
    %363 = arith.addf %361, %362 : vector<8x8xf32>
    %cst_127 = arith.constant dense<0xFF800000> : vector<8xf32>
    %364 = vector.multi_reduction <maximumf>, %363, %cst_127 [1] : vector<8x8xf32> to vector<8xf32>
    %365 = vector.shape_cast %364 : vector<8xf32> to vector<8x1xf32>
    %366 = vector.broadcast %365 : vector<8x1xf32> to vector<8x8xf32>
    %367 = arith.subf %363, %366 : vector<8x8xf32>
    %368 = math.exp %367 : vector<8x8xf32>
    %cst_128 = arith.constant dense<0.000000e+00> : vector<8xf32>
    %369 = vector.multi_reduction <add>, %368, %cst_128 [1] : vector<8x8xf32> to vector<8xf32>
    %370 = vector.shape_cast %369 : vector<8xf32> to vector<8x1xf32>
    %371 = tpu.reciprocal %370 {approx = true} : vector<8x1xf32> -> vector<8x1xf32>
    %372 = vector.broadcast %371 : vector<8x1xf32> to vector<8x8xf32>
    %373 = arith.mulf %368, %372 : vector<8x8xf32>
    %cst_129 = arith.constant dense<0.000000e+00> : vector<8x8xf32>
    %374 = tpu.matmul %373, %360, %cst_129 {dimension_numbers = #tpu.dot_dimension_numbers<[1], [0], [0], [1], [0, 0, 1, 1], [], []>} : vector<8x8xf32>, vector<8x8xf32>, vector<8x8xf32> -> vector<8x8xf32>
    %c8_130 = arith.constant 8 : index
    %c8_131 = arith.constant 8 : index
    %375 = vector.load %arg10[%c8_130, %c8_131] : memref<16x32xf32, #tpu.memory_space<vmem>>, vector<8x8xf32>
    tpu.vector_store %arg10[%c8_130, %c8_131], %374 {strides = array<i32>} : memref<16x32xf32, #tpu.memory_space<vmem>>, vector<8x8xf32>,
    %376 = vector.extract_strided_slice %337 {offsets = [0, 16], sizes = [8, 8], strides = [1, 1]} : vector<8x32xf32> to vector<8x8xf32>
    %377 = vector.extract_strided_slice %338 {offsets = [0, 16], sizes = [8, 8], strides = [1, 1]} : vector<8x32xf32> to vector<8x8xf32>
    %378 = vector.extract_strided_slice %339 {offsets = [0, 16], sizes = [8, 8], strides = [1, 1]} : vector<8x32xf32> to vector<8x8xf32>
    %cst_132 = arith.constant dense<0.000000e+00> : vector<8x8xf32>
    %379 = tpu.matmul %376, %377, %cst_132 {dimension_numbers = #tpu.dot_dimension_numbers<[1], [1], [0], [0], [0, 0, 1, 0], [], []>} : vector<8x8xf32>, vector<8x8xf32>, vector<8x8xf32> -> vector<8x8xf32>
    %380 = vector.broadcast %335 : vector<1x8xf32> to vector<8x8xf32>
    %381 = arith.addf %379, %380 : vector<8x8xf32>
    %cst_133 = arith.constant dense<0xFF800000> : vector<8xf32>
    %382 = vector.multi_reduction <maximumf>, %381, %cst_133 [1] : vector<8x8xf32> to vector<8xf32>
    %383 = vector.shape_cast %382 : vector<8xf32> to vector<8x1xf32>
    %384 = vector.broadcast %383 : vector<8x1xf32> to vector<8x8xf32>
    %385 = arith.subf %381, %384 : vector<8x8xf32>
    %386 = math.exp %385 : vector<8x8xf32>
    %cst_134 = arith.constant dense<0.000000e+00> : vector<8xf32>
    %387 = vector.multi_reduction <add>, %386, %cst_134 [1] : vector<8x8xf32> to vector<8xf32>
    %388 = vector.shape_cast %387 : vector<8xf32> to vector<8x1xf32>
    %389 = tpu.reciprocal %388 {approx = true} : vector<8x1xf32> -> vector<8x1xf32>
    %390 = vector.broadcast %389 : vector<8x1xf32> to vector<8x8xf32>
    %391 = arith.mulf %386, %390 : vector<8x8xf32>
    %cst_135 = arith.constant dense<0.000000e+00> : vector<8x8xf32>
    %392 = tpu.matmul %391, %378, %cst_135 {dimension_numbers = #tpu.dot_dimension_numbers<[1], [0], [0], [1], [0, 0, 1, 1], [], []>} : vector<8x8xf32>, vector<8x8xf32>, vector<8x8xf32> -> vector<8x8xf32>
    %c8_136 = arith.constant 8 : index
    %c16_137 = arith.constant 16 : index
    %393 = vector.load %arg10[%c8_136, %c16_137] : memref<16x32xf32, #tpu.memory_space<vmem>>, vector<8x8xf32>
    tpu.vector_store %arg10[%c8_136, %c16_137], %392 {strides = array<i32>} : memref<16x32xf32, #tpu.memory_space<vmem>>, vector<8x8xf32>,
    %394 = vector.extract_strided_slice %337 {offsets = [0, 24], sizes = [8, 8], strides = [1, 1]} : vector<8x32xf32> to vector<8x8xf32>
    %395 = vector.extract_strided_slice %338 {offsets = [0, 24], sizes = [8, 8], strides = [1, 1]} : vector<8x32xf32> to vector<8x8xf32>
    %396 = vector.extract_strided_slice %339 {offsets = [0, 24], sizes = [8, 8], strides = [1, 1]} : vector<8x32xf32> to vector<8x8xf32>
    %cst_138 = arith.constant dense<0.000000e+00> : vector<8x8xf32>
    %397 = tpu.matmul %394, %395, %cst_138 {dimension_numbers = #tpu.dot_dimension_numbers<[1], [1], [0], [0], [0, 0, 1, 0], [], []>} : vector<8x8xf32>, vector<8x8xf32>, vector<8x8xf32> -> vector<8x8xf32>
    %398 = vector.broadcast %335 : vector<1x8xf32> to vector<8x8xf32>
    %399 = arith.addf %397, %398 : vector<8x8xf32>
    %cst_139 = arith.constant dense<0xFF800000> : vector<8xf32>
    %400 = vector.multi_reduction <maximumf>, %399, %cst_139 [1] : vector<8x8xf32> to vector<8xf32>
    %401 = vector.shape_cast %400 : vector<8xf32> to vector<8x1xf32>
    %402 = vector.broadcast %401 : vector<8x1xf32> to vector<8x8xf32>
    %403 = arith.subf %399, %402 : vector<8x8xf32>
    %404 = math.exp %403 : vector<8x8xf32>
    %cst_140 = arith.constant dense<0.000000e+00> : vector<8xf32>
    %405 = vector.multi_reduction <add>, %404, %cst_140 [1] : vector<8x8xf32> to vector<8xf32>
    %406 = vector.shape_cast %405 : vector<8xf32> to vector<8x1xf32>
    %407 = tpu.reciprocal %406 {approx = true} : vector<8x1xf32> -> vector<8x1xf32>
    %408 = vector.broadcast %407 : vector<8x1xf32> to vector<8x8xf32>
    %409 = arith.mulf %404, %408 : vector<8x8xf32>
    %cst_141 = arith.constant dense<0.000000e+00> : vector<8x8xf32>
    %410 = tpu.matmul %409, %396, %cst_141 {dimension_numbers = #tpu.dot_dimension_numbers<[1], [0], [0], [1], [0, 0, 1, 1], [], []>} : vector<8x8xf32>, vector<8x8xf32>, vector<8x8xf32> -> vector<8x8xf32>
    %c8_142 = arith.constant 8 : index
    %c24_143 = arith.constant 24 : index
    %411 = vector.load %arg10[%c8_142, %c24_143] : memref<16x32xf32, #tpu.memory_space<vmem>>, vector<8x8xf32>
    tpu.vector_store %arg10[%c8_142, %c24_143], %410 {strides = array<i32>} : memref<16x32xf32, #tpu.memory_space<vmem>>, vector<8x8xf32>,
    %c0_144 = arith.constant 0 : index
    %c0_145 = arith.constant 0 : index
    %412 = vector.load %arg10[%c0_144, %c0_145] : memref<16x32xf32, #tpu.memory_space<vmem>>, vector<16x32xf32>
    %cst_146 = arith.constant dense<0.000000e+00> : vector<16x32xf32>
    %413 = tpu.matmul %412, %240, %cst_146 {dimension_numbers = #tpu.dot_dimension_numbers<[1], [0], [0], [1], [0, 0, 1, 1], [], []>} : vector<16x32xf32>, vector<32x32xf32>, vector<16x32xf32> -> vector<16x32xf32>
    %414 = vector.broadcast %248 : vector<1x32xf32> to vector<16x32xf32>
    %415 = arith.addf %413, %414 : vector<16x32xf32>
    %416 = arith.addf %236, %415 : vector<16x32xf32>
    %cst_147 = arith.constant dense<0.000000e+00> : vector<16xf32>
    %417 = vector.multi_reduction <add>, %416, %cst_147 [1] : vector<16x32xf32> to vector<16xf32>
    %418 = vector.shape_cast %417 : vector<16xf32> to vector<16x1xf32>
    %cst_148 = arith.constant 3.200000e+01 : f32
    %419 = vector.broadcast %cst_148 : f32 to vector<16x1xf32>
    %420 = arith.divf %418, %419 : vector<16x1xf32>
    %421 = vector.broadcast %420 : vector<16x1xf32> to vector<16x32xf32>
    %422 = arith.subf %416, %421 : vector<16x32xf32>
    %423 = arith.mulf %422, %422 : vector<16x32xf32>
    %cst_149 = arith.constant dense<0.000000e+00> : vector<16xf32>
    %424 = vector.multi_reduction <add>, %423, %cst_149 [1] : vector<16x32xf32> to vector<16xf32>
    %425 = vector.shape_cast %424 : vector<16xf32> to vector<16x1xf32>
    %cst_150 = arith.constant 3.200000e+01 : f32
    %426 = vector.broadcast %cst_150 : f32 to vector<16x1xf32>
    %427 = arith.divf %425, %426 : vector<16x1xf32>
    %428 = vector.broadcast %420 : vector<16x1xf32> to vector<16x32xf32>
    %429 = arith.subf %416, %428 : vector<16x32xf32>
    %cst_151 = arith.constant 9.99999974E-6 : f32
    %430 = vector.broadcast %cst_151 : f32 to vector<16x1xf32>
    %431 = arith.addf %427, %430 : vector<16x1xf32>
    %432 = math.rsqrt %431 : vector<16x1xf32>
    %433 = vector.broadcast %432 : vector<16x1xf32> to vector<16x32xf32>
    %434 = arith.mulf %429, %433 : vector<16x32xf32>
    %435 = vector.broadcast %249 : vector<1x32xf32> to vector<16x32xf32>
    %436 = arith.mulf %434, %435 : vector<16x32xf32>
    %437 = vector.broadcast %250 : vector<1x32xf32> to vector<16x32xf32>
    %438 = arith.addf %436, %437 : vector<16x32xf32>
    %cst_152 = arith.constant dense<0.000000e+00> : vector<16x64xf32>
    %439 = tpu.matmul %438, %242, %cst_152 {dimension_numbers = #tpu.dot_dimension_numbers<[1], [0], [0], [1], [0, 0, 1, 1], [], []>} : vector<16x32xf32>, vector<32x64xf32>, vector<16x64xf32> -> vector<16x64xf32>
    %440 = vector.broadcast %253 : vector<1x64xf32> to vector<16x64xf32>
    %441 = arith.addf %439, %440 : vector<16x64xf32>
    %cst_153 = arith.constant 0.000000e+00 : f32
    %442 = vector.broadcast %cst_153 : f32 to vector<16x64xf32>
    %443 = arith.maximumf %441, %442 : vector<16x64xf32>
    %cst_154 = arith.constant dense<0.000000e+00> : vector<16x32xf32>
    %444 = tpu.matmul %443, %244, %cst_154 {dimension_numbers = #tpu.dot_dimension_numbers<[1], [0], [0], [1], [0, 0, 1, 1], [], []>} : vector<16x64xf32>, vector<64x32xf32>, vector<16x32xf32> -> vector<16x32xf32>
    %445 = vector.broadcast %254 : vector<1x32xf32> to vector<16x32xf32>
    %446 = arith.addf %444, %445 : vector<16x32xf32>
    %447 = arith.addf %438, %446 : vector<16x32xf32>
    %cst_155 = arith.constant dense<0.000000e+00> : vector<16xf32>
    %448 = vector.multi_reduction <add>, %447, %cst_155 [1] : vector<16x32xf32> to vector<16xf32>
    %449 = vector.shape_cast %448 : vector<16xf32> to vector<16x1xf32>
    %cst_156 = arith.constant 3.200000e+01 : f32
    %450 = vector.broadcast %cst_156 : f32 to vector<16x1xf32>
    %451 = arith.divf %449, %450 : vector<16x1xf32>
    %452 = vector.broadcast %451 : vector<16x1xf32> to vector<16x32xf32>
    %453 = arith.subf %447, %452 : vector<16x32xf32>
    %454 = arith.mulf %453, %453 : vector<16x32xf32>
    %cst_157 = arith.constant dense<0.000000e+00> : vector<16xf32>
    %455 = vector.multi_reduction <add>, %454, %cst_157 [1] : vector<16x32xf32> to vector<16xf32>
    %456 = vector.shape_cast %455 : vector<16xf32> to vector<16x1xf32>
    %cst_158 = arith.constant 3.200000e+01 : f32
    %457 = vector.broadcast %cst_158 : f32 to vector<16x1xf32>
    %458 = arith.divf %456, %457 : vector<16x1xf32>
    %459 = vector.broadcast %451 : vector<16x1xf32> to vector<16x32xf32>
    %460 = arith.subf %447, %459 : vector<16x32xf32>
    %cst_159 = arith.constant 9.99999974E-6 : f32
    %461 = vector.broadcast %cst_159 : f32 to vector<16x1xf32>
    %462 = arith.addf %458, %461 : vector<16x1xf32>
    %463 = math.rsqrt %462 : vector<16x1xf32>
    %464 = vector.broadcast %463 : vector<16x1xf32> to vector<16x32xf32>
    %465 = arith.mulf %460, %464 : vector<16x32xf32>
    %466 = vector.broadcast %251 : vector<1x32xf32> to vector<16x32xf32>
    %467 = arith.mulf %465, %466 : vector<16x32xf32>
    %468 = vector.broadcast %252 : vector<1x32xf32> to vector<16x32xf32>
    %469 = arith.addf %467, %468 : vector<16x32xf32>
    %c0_160 = arith.constant 0 : index
    %c0_161 = arith.constant 0 : index
    %470 = vector.load %arg8[%c0_160, %c0_161] : memref<33x4xf32, #tpu.memory_space<vmem>>, vector<32x4xf32>
    %c32 = arith.constant 32 : index
    %c0_162 = arith.constant 0 : index
    %471 = vector.load %arg8[%c32, %c0_162] : memref<33x4xf32, #tpu.memory_space<vmem>>, vector<1x4xf32>
    %cst_163 = arith.constant dense<0.000000e+00> : vector<16x4xf32>
    %472 = tpu.matmul %469, %470, %cst_163 {dimension_numbers = #tpu.dot_dimension_numbers<[1], [0], [0], [1], [0, 0, 1, 1], [], []>} : vector<16x32xf32>, vector<32x4xf32>, vector<16x4xf32> -> vector<16x4xf32>
    %473 = vector.extract_strided_slice %472 {offsets = [0, 0], sizes = [8, 4], strides = [1, 1]} : vector<16x4xf32> to vector<8x4xf32>
    %cst_164 = arith.constant dense<0.000000e+00> : vector<4xf32>
    %474 = vector.multi_reduction <add>, %473, %cst_164 [0] : vector<8x4xf32> to vector<4xf32>
    %475 = vector.shape_cast %474 : vector<4xf32> to vector<1x4xf32>
    %476 = arith.addf %475, %471 : vector<1x4xf32>
    %c0_165 = arith.constant 0 : index
    %c0_166 = arith.constant 0 : index
    %477 = vector.load %arg9[%c0_165, %c0_166] : memref<2x4xf32, #tpu.memory_space<vmem>>, vector<1x4xf32>
    tpu.vector_store %arg9[%c0_165, %c0_166], %476 {strides = array<i32>} : memref<2x4xf32, #tpu.memory_space<vmem>>, vector<1x4xf32>,
    %478 = vector.extract_strided_slice %472 {offsets = [8, 0], sizes = [8, 4], strides = [1, 1]} : vector<16x4xf32> to vector<8x4xf32>
    %cst_167 = arith.constant dense<0.000000e+00> : vector<4xf32>
    %479 = vector.multi_reduction <add>, %478, %cst_167 [0] : vector<8x4xf32> to vector<4xf32>
    %480 = vector.shape_cast %479 : vector<4xf32> to vector<1x4xf32>
    %481 = arith.addf %480, %471 : vector<1x4xf32>
    %c1_168 = arith.constant 1 : index
    %c0_169 = arith.constant 0 : index
    %482 = vector.load %arg9[%c1_168, %c0_169] : memref<2x4xf32, #tpu.memory_space<vmem>>, vector<1x4xf32>
    tpu.vector_store %arg9[%c1_168, %c0_169], %481 {strides = array<i32>} : memref<2x4xf32, #tpu.memory_space<vmem>>, vector<1x4xf32>,
    return
  }
}

</mosaic_0001>

<llo_original>
// kernel: _lambda_.1
$region0: #{_lambda_.1}
  #allocation0 [shape = 'u32[]', space=smem, size = 0x4, offset = 0x4, fixed_abs, tag = 'smem constant byte address 0x4 - core index']
  #allocation1 [shape = 'u32[144,128]{1,0:T(1,128)}', space=vmem, size = 0x12000, scoped, tag = 'internal scratch']
  #allocation2 [shape = 'f32[16,32]{1,0:T(8,128)}', space=vmem, size = 0x2000, scoped, tag = 'scratch operand']
  %s0 = inlined_call_operand.vmem [shape: f32[16,32], index: 0, kind: input, shape index: {}]
  %s1 = inlined_call_operand.vmem [shape: f32[16,32], index: 1, kind: input, shape index: {}]
  %s2 = inlined_call_operand.vmem [shape: f32[2,8], index: 2, kind: input, shape index: {}]
  %s3 = inlined_call_operand.vmem [shape: f32[2,32,96], index: 3, kind: input, shape index: {}]
  %s4 = inlined_call_operand.hbm [shape: f32[2,32,32], index: 4, kind: input, shape index: {}]
  %s5 = inlined_call_operand.hbm [shape: f32[2,32,64], index: 5, kind: input, shape index: {}]
  %s6 = inlined_call_operand.vmem [shape: f32[2,64,32], index: 6, kind: input, shape index: {}]
  %s7 = inlined_call_operand.hbm [shape: f32[2,8,96], index: 7, kind: input, shape index: {}]
  %s8 = inlined_call_operand.hbm [shape: f32[33,4], index: 8, kind: input, shape index: {}]
  %s9 = inlined_call_operand.hbm [shape: f32[2,4], index: 9, kind: output, shape index: {}]
  %s10 = sld [smem:[#allocation0]]
  $region62: #{_lambda_.1} parent=0
    _
  %s12 = ssub.s32 1, %s10
  %s13 = scalar_select 0, %s12, %s10
  $region1: #{_lambda_.1} parent=0
    #allocation3 [shape = 'u8[32768]{0}', space=vmem, size = 0x8000, scoped, tag = 'input window, operand 4, single buffered']
    #allocation4 [shape = 's32[1]{0}', space=sflag, size = 0x4, scoped, tag = 'scoped memory for _lambda_.1']
    #allocation5 [shape = 's32[1]{0}', space=sflag, size = 0x4, scoped, tag = 'scoped memory for _lambda_.1']
    #allocation6 [shape = 'u8[32768]{0}', space=vmem, size = 0x8000, scoped, tag = 'input window, operand 5, single buffered']
    #allocation7 [shape = 's32[1]{0}', space=sflag, size = 0x4, scoped, tag = 'scoped memory for _lambda_.1']
    #allocation8 [shape = 'u8[8192]{0}', space=vmem, size = 0x2000, scoped, tag = 'input window, operand 7, single buffered']
    #allocation9 [shape = 'u8[20480]{0}', space=vmem, size = 0x5000, scoped, tag = 'input window, operand 8, single buffered']
    #allocation10 [shape = 's32[1]{0}', space=sflag, size = 0x4, scoped, tag = 'scoped memory for _lambda_.1']
    #allocation11 [shape = 'u8[1024]{0}', space=vmem, size = 0x400, scoped, tag = 'output window, operand 0, single buffered']
    %14 = vsyncpa [#allocation4], 0
    %15 = vsyncpa [#allocation7], 0
    %16 = vsyncpa [#allocation10], 0
    %17 = vsyncpa [#allocation5], 0
    // Predicated region
    $region2: #{_lambda_.1} parent=1 // pred_check
      _
    $region3: #{_lambda_.1} parent=1 // pred_check_branch
      %19 = sbr.rel (0) target = $region5
    $region4: #{_lambda_.1} parent=1 // pred_region
      _
    $region5: #{_lambda_.1} parent=1 // pred_fallthru
      _
    // Predicated region
    $region6: #{_lambda_.1} parent=1 // pred_check
      _
    $region7: #{_lambda_.1} parent=1 // pred_check_branch
      %21 = sbr.rel (0) target = $region9
    $region8: #{_lambda_.1} parent=1 // pred_region
      _
    $region9: #{_lambda_.1} parent=1 // pred_fallthru
      _
    // Predicated region
    $region10: #{_lambda_.1} parent=1 // pred_check
      _
    $region11: #{_lambda_.1} parent=1 // pred_check_branch
      %23 = sbr.rel (0) target = $region13
    $region12: #{_lambda_.1} parent=1 // pred_region
      _
    $region13: #{_lambda_.1} parent=1 // pred_fallthru
      _
    // Predicated region
    $region14: #{_lambda_.1} parent=1 // pred_check
      _
    $region15: #{_lambda_.1} parent=1 // pred_check_branch
      %25 = sbr.rel (0) target = $region17
    $region16: #{_lambda_.1} parent=1 // pred_region
      _
    $region17: #{_lambda_.1} parent=1 // pred_fallthru
      _
    // Predicated region
    $region18: #{_lambda_.1} parent=1 // pred_check
      _
    $region19: #{_lambda_.1} parent=1 // pred_check_branch
      %27 = sbr.rel (0) target = $region21
    $region20: #{_lambda_.1} parent=1 // pred_region
      %s29 = ssub.s32 1024, 1024
      %30 = vsyncadd [#allocation4], %s29
      %s31 = sshll.u32 [#allocation3], 4
      %s32 = int_to_ptr.vmem [resolvable:$true] %s31
      %37 = dma.hbm_to_vmem [thread:$0]  %s4, 1024, %s32, [#allocation4], 128, 128, 8
    $region21: #{_lambda_.1} parent=1 // pred_fallthru
      _
    // Predicated region
    $region22: #{_lambda_.1} parent=1 // pred_check
      _
    $region23: #{_lambda_.1} parent=1 // pred_check_branch
      %39 = sbr.rel (0) target = $region25
    $region24: #{_lambda_.1} parent=1 // pred_region
      %s41 = ssub.s32 1024, 1024
      %42 = vsyncadd [#allocation7], %s41
      %s43 = sshll.u32 [#allocation6], 4
      %s44 = int_to_ptr.vmem [resolvable:$true] %s43
      %49 = dma.hbm_to_vmem [thread:$0]  %s5, 1024, %s44, [#allocation7], 128, 128, 8
    $region25: #{_lambda_.1} parent=1 // pred_fallthru
      _
    // Predicated region
    $region26: #{_lambda_.1} parent=1 // pred_check
      _
    $region27: #{_lambda_.1} parent=1 // pred_check_branch
      %51 = sbr.rel (0) target = $region29
    $region28: #{_lambda_.1} parent=1 // pred_region
      _
    $region29: #{_lambda_.1} parent=1 // pred_fallthru
      _
    // Predicated region
    $region30: #{_lambda_.1} parent=1 // pred_check
      _
    $region31: #{_lambda_.1} parent=1 // pred_check_branch
      %53 = sbr.rel (0) target = $region33
    $region32: #{_lambda_.1} parent=1 // pred_region
      %s55 = ssub.s32 256, 256
      %56 = vsyncadd [#allocation7], %s55
      %s57 = sshll.u32 [#allocation8], 4
      %s58 = int_to_ptr.vmem [resolvable:$true] %s57
      %63 = dma.hbm_to_vmem [thread:$0]  %s7, 256, %s58, [#allocation7], 128, 128, 8
    $region33: #{_lambda_.1} parent=1 // pred_fallthru
      _
    // Predicated region
    $region34: #{_lambda_.1} parent=1 // pred_check
      _
    $region35: #{_lambda_.1} parent=1 // pred_check_branch
      %65 = sbr.rel (0) target = $region37
    $region36: #{_lambda_.1} parent=1 // pred_region
      %s67 = ssub.s32 640, 640
      %68 = vsyncadd [#allocation10], %s67
      %s69 = sshll.u32 [#allocation9], 4
      %s70 = int_to_ptr.vmem [resolvable:$true] %s69
      %75 = dma.hbm_to_vmem [thread:$0]  %s8, 640, %s70, [#allocation10], 128, 128, 8
    $region37: #{_lambda_.1} parent=1 // pred_fallthru
      _
    // Predicated region
    $region38: #{_lambda_.1} parent=1 // pred_check
      _
    $region39: #{_lambda_.1} parent=1 // pred_check_branch
      %77 = sbr.rel (0) target = $region41
    $region40: #{_lambda_.1} parent=1 // pred_region
      %78 = dma.done [#allocation4], 1024
    $region41: #{_lambda_.1} parent=1 // pred_fallthru
      _
    // Predicated region
    $region42: #{_lambda_.1} parent=1 // pred_check
      _
    $region43: #{_lambda_.1} parent=1 // pred_check_branch
      %80 = sbr.rel (0) target = $region45
    $region44: #{_lambda_.1} parent=1 // pred_region
      %81 = dma.done [#allocation7], 1024
    $region45: #{_lambda_.1} parent=1 // pred_fallthru
      _
    // Predicated region
    $region46: #{_lambda_.1} parent=1 // pred_check
      _
    $region47: #{_lambda_.1} parent=1 // pred_check_branch
      %83 = sbr.rel (0) target = $region49
    $region48: #{_lambda_.1} parent=1 // pred_region
      %84 = dma.done [#allocation7], 256
    $region49: #{_lambda_.1} parent=1 // pred_fallthru
      _
    // Predicated region
    $region50: #{_lambda_.1} parent=1 // pred_check
      _
    $region51: #{_lambda_.1} parent=1 // pred_check_branch
      %86 = sbr.rel (0) target = $region53
    $region52: #{_lambda_.1} parent=1 // pred_region
      %87 = dma.done [#allocation10], 640
    $region53: #{_lambda_.1} parent=1 // pred_fallthru
      _
    %v88 = vld [vmem:[%s0] sm:$0xff]
    %v89 = vld [vmem:[%s0 + $0x8] sm:$0xff]
    %v90 = vld [vmem:[%s1] sm:$0xff]
    %v91 = vld [vmem:[%s1 + $0x8] sm:$0xff]
    %v92 = vadd.f32 %v88, %v90
    %v93 = vadd.f32 %v89, %v91
    %v94 = vld [vmem:[%s2] sm:$0x3]
    %v95 = vld [vmem:[%s3] sm:$0xff]
    %v96 = vld [vmem:[%s3 + $0x8] sm:$0xff]
    %v97 = vld [vmem:[%s3 + $0x10] sm:$0xff]
    %v98 = vld [vmem:[%s3 + $0x18] sm:$0xff]
    %v99 = vld [vmem:[#allocation3] sm:$0xff]
    %v100 = vld [vmem:[#allocation3 + $0x8] sm:$0xff]
    %v101 = vld [vmem:[#allocation3 + $0x10] sm:$0xff]
    %v102 = vld [vmem:[#allocation3 + $0x18] sm:$0xff]
    %v103 = vld [vmem:[#allocation6] sm:$0xff]
    %v104 = vld [vmem:[#allocation6 + $0x8] sm:$0xff]
    %v105 = vld [vmem:[#allocation6 + $0x10] sm:$0xff]
    %v106 = vld [vmem:[#allocation6 + $0x18] sm:$0xff]
    %v107 = vld [vmem:[%s6] sm:$0xff]
    %v108 = vld [vmem:[%s6 + $0x8] sm:$0xff]
    %v109 = vld [vmem:[%s6 + $0x10] sm:$0xff]
    %v110 = vld [vmem:[%s6 + $0x18] sm:$0xff]
    %v111 = vld [vmem:[%s6 + $0x20] sm:$0xff]
    %v112 = vld [vmem:[%s6 + $0x28] sm:$0xff]
    %v113 = vld [vmem:[%s6 + $0x30] sm:$0xff]
    %v114 = vld [vmem:[%s6 + $0x38] sm:$0xff]
    %v115 = vld [vmem:[#allocation8] sm:$0xff]
    %v116 = vlaneseq
    %v117 = vshrl.u32 %v116, 7
    %v118 = vsub.s32 0, %v117
    %v119 = vrot.slane %v115, %v118
    %vm120 = vcmask 261120
    %v122 = vsel %vm120, %v92, 0
    %v125 = vsel %vm120, %v93, 0
    %127 = vmatprep.subr.mxu0 0.0
    %128 = vmatpush1.msra.mxu0 %v95
    %129 = vmatprep.subr.mxu0 0.0
    %130 = vmatpush1.msra.mxu0 %v96
    %131 = vmatprep.subr.mxu0 0.0
    %132 = vmatpush1.msra.mxu0 %v97
    %133 = vmatprep.subr.mxu0 0.0
    %134 = vmatpush1.msra.mxu0 %v98
    %135 = vmatprep.subr.mxu0 0.0
    %136 = vmatpush1.msra.mxu0 0.0
    %137 = vmatprep.subr.mxu0 0.0
    %138 = vmatpush1.msra.mxu0 0.0
    %139 = vmatprep.subr.mxu0 0.0
    %140 = vmatpush1.msra.mxu0 0.0
    %141 = vmatprep.subr.mxu0 0.0
    %142 = vmatpush1.msra.mxu0 0.0
    %143 = vmatprep.subr.mxu0 0.0
    %144 = vmatpush1.msra.mxu0 0.0
    %145 = vmatprep.subr.mxu0 0.0
    %146 = vmatpush1.msra.mxu0 0.0
    %147 = vmatprep.subr.mxu0 0.0
    %148 = vmatpush1.msra.mxu0 0.0
    %149 = vmatprep.subr.mxu0 0.0
    %150 = vmatpush1.msra.mxu0 0.0
    %151 = vmatprep.subr.mxu0 0.0
    %152 = vmatpush1.msra.mxu0 0.0
    %153 = vmatprep.subr.mxu0 0.0
    %154 = vmatpush1.msra.mxu0 0.0
    %155 = vmatprep.subr.mxu0 0.0
    %156 = vmatpush1.msra.mxu0 0.0
    %157 = vmatprep.subr.mxu0 0.0
    %158 = vmatpush1.msra.mxu0 0.0
    %159 = vmatprep.subr.mxu0 0.0
    %160 = vmatpush1.msra.mxu0 0.0
    %161 = vmatprep.subr.mxu0 0.0
    %162 = vmatpush1.msra.mxu0 0.0
    %163 = vmatprep.subr.mxu0 0.0
    %164 = vmatpush1.msra.mxu0 0.0
    %165 = vmatprep.subr.mxu0 0.0
    %166 = vmatpush1.msra.mxu0 0.0
    %167 = vmatprep.subr.mxu0 0.0
    %168 = vmatpush1.msra.mxu0 0.0
    %169 = vmatprep.subr.mxu0 0.0
    %170 = vmatpush1.msra.mxu0 0.0
    %171 = vmatprep.subr.mxu0 0.0
    %172 = vmatpush1.msra.mxu0 0.0
    %173 = vmatprep.subr.mxu0 0.0
    %174 = vmatpush1.msra.mxu0 0.0
    %175 = vmatprep.subr.mxu0 0.0
    %176 = vmatpush1.msra.mxu0 0.0
    %177 = vmatprep.subr.mxu0 0.0
    %178 = vmatpush1.msra.mxu0 0.0
    %179 = vmatprep.subr.mxu0 0.0
    %180 = vmatpush1.msra.mxu0 0.0
    %181 = vmatprep.subr.mxu0 0.0
    %182 = vmatpush1.msra.mxu0 0.0
    %183 = vmatprep.subr.mxu0 0.0
    %184 = vmatpush1.msra.mxu0 0.0
    %185 = vmatprep.subr.mxu0 0.0
    %186 = vmatpush1.msra.mxu0 0.0
    %187 = vmatprep.subr.mxu0 0.0
    %188 = vmatpush1.msra.mxu0 0.0
    %189 = vmatprep.subr.mxu0 0.0
    %190 = vmatpush1.msra.mxu0 0.0
    %191 = vmatprep.mubr.f32.mxu0 0.0
    %192 = vmatmul.mubr.f32.gmra.mrb[0].mxu0 %v122
    %v193 = vpop.f32.mrb[0].mxu0
    %v194 = vadd.f32 %v119, %v193
    %v195 = vpop.f32.mrb[0].mxu0
    %196 = vmatprep.mubr.f32.mxu0 0.0
    %197 = vmatmul.mubr.f32.gmra.mrb[0].mxu0 %v125
    %v198 = vpop.f32.mrb[0].mxu0
    %v199 = vadd.f32 %v119, %v198
    %v200 = vpop.f32.mrb[0].mxu0
    %201 = vdwg.mxu0
    %v202 = vlaneseq
    %v203 = vshrl.u32 %v202, 7
    %v204 = vsub.s32 0, %v203
    %v205 = vrot.slane %v94, %v204
    %207 = vrot.lane.b32.xlu0 %v194, 96
    %v208 = vpop.permute.xlu0 %207
    %vm209 = vcmask 64512
    %v210 = vsel %vm209, %v194, 0
    %v212 = vsel %vm209, %v208, 0
    %214 = vmatprep.subr.mxu0 0.0
    %215 = vmatpush1.xpose.msra.mxu0 %v212
    %216 = vmatprep.subr.mxu0 0.0
    %217 = vmatpush1.xpose.msra.mxu0 0.0
    %218 = vmatprep.subr.mxu0 0.0
    %219 = vmatpush1.xpose.msra.mxu0 0.0
    %220 = vmatprep.subr.mxu0 0.0
    %221 = vmatpush1.xpose.msra.mxu0 0.0
    %222 = vmatprep.subr.mxu0 0.0
    %223 = vmatpush1.xpose.msra.mxu0 0.0
    %224 = vmatprep.subr.mxu0 0.0
    %225 = vmatpush1.xpose.msra.mxu0 0.0
    %226 = vmatprep.subr.mxu0 0.0
    %227 = vmatpush1.xpose.msra.mxu0 0.0
    %228 = vmatprep.subr.mxu0 0.0
    %229 = vmatpush1.xpose.msra.mxu0 0.0
    %230 = vmatprep.subr.mxu0 0.0
    %231 = vmatpush1.xpose.msra.mxu0 0.0
    %232 = vmatprep.subr.mxu0 0.0
    %233 = vmatpush1.xpose.msra.mxu0 0.0
    %234 = vmatprep.subr.mxu0 0.0
    %235 = vmatpush1.xpose.msra.mxu0 0.0
    %236 = vmatprep.subr.mxu0 0.0
    %237 = vmatpush1.xpose.msra.mxu0 0.0
    %238 = vmatprep.subr.mxu0 0.0
    %239 = vmatpush1.xpose.msra.mxu0 0.0
    %240 = vmatprep.subr.mxu0 0.0
    %241 = vmatpush1.xpose.msra.mxu0 0.0
    %242 = vmatprep.subr.mxu0 0.0
    %243 = vmatpush1.xpose.msra.mxu0 0.0
    %244 = vmatprep.subr.mxu0 0.0
    %245 = vmatpush1.xpose.msra.mxu0 0.0
    %246 = vmatprep.subr.mxu0 0.0
    %247 = vmatpush1.xpose.msra.mxu0 0.0
    %248 = vmatprep.subr.mxu0 0.0
    %249 = vmatpush1.xpose.msra.mxu0 0.0
    %250 = vmatprep.subr.mxu0 0.0
    %251 = vmatpush1.xpose.msra.mxu0 0.0
    %252 = vmatprep.subr.mxu0 0.0
    %253 = vmatpush1.xpose.msra.mxu0 0.0
    %254 = vmatprep.subr.mxu0 0.0
    %255 = vmatpush1.xpose.msra.mxu0 0.0
    %256 = vmatprep.subr.mxu0 0.0
    %257 = vmatpush1.xpose.msra.mxu0 0.0
    %258 = vmatprep.subr.mxu0 0.0
    %259 = vmatpush1.xpose.msra.mxu0 0.0
    %260 = vmatprep.subr.mxu0 0.0
    %261 = vmatpush1.xpose.msra.mxu0 0.0
    %262 = vmatprep.subr.mxu0 0.0
    %263 = vmatpush1.xpose.msra.mxu0 0.0
    %264 = vmatprep.subr.mxu0 0.0
    %265 = vmatpush1.xpose.msra.mxu0 0.0
    %266 = vmatprep.subr.mxu0 0.0
    %267 = vmatpush1.xpose.msra.mxu0 0.0
    %268 = vmatprep.subr.mxu0 0.0
    %269 = vmatpush1.xpose.msra.mxu0 0.0
    %270 = vmatprep.subr.mxu0 0.0
    %271 = vmatpush1.xpose.msra.mxu0 0.0
    %272 = vmatprep.subr.mxu0 0.0
    %273 = vmatpush1.xpose.msra.mxu0 0.0
    %274 = vmatprep.subr.mxu0 0.0
    %275 = vmatpush1.xpose.msra.mxu0 0.0
    %276 = vmatprep.subr.mxu0 0.0
    %277 = vmatpush1.xpose.msra.mxu0 0.0
    %278 = vmatprep.mubr.f32.mxu0 0.0
    %279 = vmatmul.mubr.f32.gmra.mrb[0].mxu0 %v210
    %v280 = vpop.f32.mrb[0].mxu0
    %v281 = vadd.f32 %v205, %v280
    %v282 = vpop.f32.mrb[0].mxu0
    %283 = vdwg.mxu0
    %v284 = vsel %vm209, %v281, -inf
    %285 = vmax.xlane.f32.xlu0 %v284
    %v286 = vpop.xlane.xlu0 %285
    %v287 = vsub.f32 %v281, %v286
    %v288 = vmul.f32 %v287, 1.442695
    %v289 = vpow.pop %v288
    %v290 = vsel %vm209, %v289, 0.0
    %291 = vadd.xlane.f32.xlu0 %v290
    %v292 = vpop.xlane.xlu0 %291
    %v293 = vrcp.pop %v292
    %v294 = vmul.f32 %v289, %v293
    %295 = vrot.lane.b32.xlu0 %v194, 64
    %v296 = vpop.permute.xlu0 %295
    %v299 = vsel %vm209, %v294, 0
    %301 = vmatprep.subr.mxu0 0.0
    %302 = vmatpush1.msra.mxu0 %v296
    %303 = vmatprep.subr.mxu0 0.0
    %304 = vmatpush1.msra.mxu0 0.0
    %305 = vmatprep.subr.mxu0 0.0
    %306 = vmatpush1.msra.mxu0 0.0
    %307 = vmatprep.subr.mxu0 0.0
    %308 = vmatpush1.msra.mxu0 0.0
    %309 = vmatprep.subr.mxu0 0.0
    %310 = vmatpush1.msra.mxu0 0.0
    %311 = vmatprep.subr.mxu0 0.0
    %312 = vmatpush1.msra.mxu0 0.0
    %313 = vmatprep.subr.mxu0 0.0
    %314 = vmatpush1.msra.mxu0 0.0
    %315 = vmatprep.subr.mxu0 0.0
    %316 = vmatpush1.msra.mxu0 0.0
    %317 = vmatprep.subr.mxu0 0.0
    %318 = vmatpush1.msra.mxu0 0.0
    %319 = vmatprep.subr.mxu0 0.0
    %320 = vmatpush1.msra.mxu0 0.0
    %321 = vmatprep.subr.mxu0 0.0
    %322 = vmatpush1.msra.mxu0 0.0
    %323 = vmatprep.subr.mxu0 0.0
    %324 = vmatpush1.msra.mxu0 0.0
    %325 = vmatprep.subr.mxu0 0.0
    %326 = vmatpush1.msra.mxu0 0.0
    %327 = vmatprep.subr.mxu0 0.0
    %328 = vmatpush1.msra.mxu0 0.0
    %329 = vmatprep.subr.mxu0 0.0
    %330 = vmatpush1.msra.mxu0 0.0
    %331 = vmatprep.subr.mxu0 0.0
    %332 = vmatpush1.msra.mxu0 0.0
    %333 = vmatprep.subr.mxu0 0.0
    %334 = vmatpush1.msra.mxu0 0.0
    %335 = vmatprep.subr.mxu0 0.0
    %336 = vmatpush1.msra.mxu0 0.0
    %337 = vmatprep.subr.mxu0 0.0
    %338 = vmatpush1.msra.mxu0 0.0
    %339 = vmatprep.subr.mxu0 0.0
    %340 = vmatpush1.msra.mxu0 0.0
    %341 = vmatprep.subr.mxu0 0.0
    %342 = vmatpush1.msra.mxu0 0.0
    %343 = vmatprep.subr.mxu0 0.0
    %344 = vmatpush1.msra.mxu0 0.0
    %345 = vmatprep.subr.mxu0 0.0
    %346 = vmatpush1.msra.mxu0 0.0
    %347 = vmatprep.subr.mxu0 0.0
    %348 = vmatpush1.msra.mxu0 0.0
    %349 = vmatprep.subr.mxu0 0.0
    %350 = vmatpush1.msra.mxu0 0.0
    %351 = vmatprep.subr.mxu0 0.0
    %352 = vmatpush1.msra.mxu0 0.0
    %353 = vmatprep.subr.mxu0 0.0
    %354 = vmatpush1.msra.mxu0 0.0
    %355 = vmatprep.subr.mxu0 0.0
    %356 = vmatpush1.msra.mxu0 0.0
    %357 = vmatprep.subr.mxu0 0.0
    %358 = vmatpush1.msra.mxu0 0.0
    %359 = vmatprep.subr.mxu0 0.0
    %360 = vmatpush1.msra.mxu0 0.0
    %361 = vmatprep.subr.mxu0 0.0
    %362 = vmatpush1.msra.mxu0 0.0
    %363 = vmatprep.subr.mxu0 0.0
    %364 = vmatpush1.msra.mxu0 0.0
    %365 = vmatprep.mubr.f32.mxu0 0.0
    %366 = vmatmul.mubr.f32.gmra.mrb[0].mxu0 %v299
    %v367 = vpop.f32.mrb[0].mxu0
    %v368 = vadd.f32 0.0, %v367
    %v369 = vpop.f32.mrb[0].mxu0
    %370 = vdwg.mxu0
    %371 = vst.msk [vmem:[#allocation2] sm:$0xff] %vm209, %v368
    %372 = vrot.lane.b32.xlu0 %v194, 120
    %v373 = vpop.permute.xlu0 %372
    %374 = vrot.lane.b32.xlu0 %v194, 88
    %v375 = vpop.permute.xlu0 %374
    %v376 = vsel %vm209, %v373, 0
    %v378 = vsel %vm209, %v375, 0
    %380 = vmatprep.subr.mxu0 0.0
    %381 = vmatpush1.xpose.msra.mxu0 %v378
    %382 = vmatprep.subr.mxu0 0.0
    %383 = vmatpush1.xpose.msra.mxu0 0.0
    %384 = vmatprep.subr.mxu0 0.0
    %385 = vmatpush1.xpose.msra.mxu0 0.0
    %386 = vmatprep.subr.mxu0 0.0
    %387 = vmatpush1.xpose.msra.mxu0 0.0
    %388 = vmatprep.subr.mxu0 0.0
    %389 = vmatpush1.xpose.msra.mxu0 0.0
    %390 = vmatprep.subr.mxu0 0.0
    %391 = vmatpush1.xpose.msra.mxu0 0.0
    %392 = vmatprep.subr.mxu0 0.0
    %393 = vmatpush1.xpose.msra.mxu0 0.0
    %394 = vmatprep.subr.mxu0 0.0
    %395 = vmatpush1.xpose.msra.mxu0 0.0
    %396 = vmatprep.subr.mxu0 0.0
    %397 = vmatpush1.xpose.msra.mxu0 0.0
    %398 = vmatprep.subr.mxu0 0.0
    %399 = vmatpush1.xpose.msra.mxu0 0.0
    %400 = vmatprep.subr.mxu0 0.0
    %401 = vmatpush1.xpose.msra.mxu0 0.0
    %402 = vmatprep.subr.mxu0 0.0
    %403 = vmatpush1.xpose.msra.mxu0 0.0
    %404 = vmatprep.subr.mxu0 0.0
    %405 = vmatpush1.xpose.msra.mxu0 0.0
    %406 = vmatprep.subr.mxu0 0.0
    %407 = vmatpush1.xpose.msra.mxu0 0.0
    %408 = vmatprep.subr.mxu0 0.0
    %409 = vmatpush1.xpose.msra.mxu0 0.0
    %410 = vmatprep.subr.mxu0 0.0
    %411 = vmatpush1.xpose.msra.mxu0 0.0
    %412 = vmatprep.subr.mxu0 0.0
    %413 = vmatpush1.xpose.msra.mxu0 0.0
    %414 = vmatprep.subr.mxu0 0.0
    %415 = vmatpush1.xpose.msra.mxu0 0.0
    %416 = vmatprep.subr.mxu0 0.0
    %417 = vmatpush1.xpose.msra.mxu0 0.0
    %418 = vmatprep.subr.mxu0 0.0
    %419 = vmatpush1.xpose.msra.mxu0 0.0
    %420 = vmatprep.subr.mxu0 0.0
    %421 = vmatpush1.xpose.msra.mxu0 0.0
    %422 = vmatprep.subr.mxu0 0.0
    %423 = vmatpush1.xpose.msra.mxu0 0.0
    %424 = vmatprep.subr.mxu0 0.0
    %425 = vmatpush1.xpose.msra.mxu0 0.0
    %426 = vmatprep.subr.mxu0 0.0
    %427 = vmatpush1.xpose.msra.mxu0 0.0
    %428 = vmatprep.subr.mxu0 0.0
    %429 = vmatpush1.xpose.msra.mxu0 0.0
    %430 = vmatprep.subr.mxu0 0.0
    %431 = vmatpush1.xpose.msra.mxu0 0.0
    %432 = vmatprep.subr.mxu0 0.0
    %433 = vmatpush1.xpose.msra.mxu0 0.0
    %434 = vmatprep.subr.mxu0 0.0
    %435 = vmatpush1.xpose.msra.mxu0 0.0
    %436 = vmatprep.subr.mxu0 0.0
    %437 = vmatpush1.xpose.msra.mxu0 0.0
    %438 = vmatprep.subr.mxu0 0.0
    %439 = vmatpush1.xpose.msra.mxu0 0.0
    %440 = vmatprep.subr.mxu0 0.0
    %441 = vmatpush1.xpose.msra.mxu0 0.0
    %442 = vmatprep.subr.mxu0 0.0
    %443 = vmatpush1.xpose.msra.mxu0 0.0
    %444 = vmatprep.mubr.f32.mxu0 0.0
    %445 = vmatmul.mubr.f32.gmra.mrb[0].mxu0 %v376
    %v446 = vpop.f32.mrb[0].mxu0
    %v447 = vadd.f32 %v205, %v446
    %v448 = vpop.f32.mrb[0].mxu0
    %449 = vdwg.mxu0
    %v450 = vsel %vm209, %v447, -inf
    %451 = vmax.xlane.f32.xlu0 %v450
    %v452 = vpop.xlane.xlu0 %451
    %v453 = vsub.f32 %v447, %v452
    %v454 = vmul.f32 %v453, 1.442695
    %v455 = vpow.pop %v454
    %v456 = vsel %vm209, %v455, 0.0
    %457 = vadd.xlane.f32.xlu0 %v456
    %v458 = vpop.xlane.xlu0 %457
    %v459 = vrcp.pop %v458
    %v460 = vmul.f32 %v455, %v459
    %461 = vrot.lane.b32.xlu0 %v194, 56
    %v462 = vpop.permute.xlu0 %461
    %v465 = vsel %vm209, %v460, 0
    %467 = vmatprep.subr.mxu0 0.0
    %468 = vmatpush1.msra.mxu0 %v462
    %469 = vmatprep.subr.mxu0 0.0
    %470 = vmatpush1.msra.mxu0 0.0
    %471 = vmatprep.subr.mxu0 0.0
    %472 = vmatpush1.msra.mxu0 0.0
    %473 = vmatprep.subr.mxu0 0.0
    %474 = vmatpush1.msra.mxu0 0.0
    %475 = vmatprep.subr.mxu0 0.0
    %476 = vmatpush1.msra.mxu0 0.0
    %477 = vmatprep.subr.mxu0 0.0
    %478 = vmatpush1.msra.mxu0 0.0
    %479 = vmatprep.subr.mxu0 0.0
    %480 = vmatpush1.msra.mxu0 0.0
    %481 = vmatprep.subr.mxu0 0.0
    %482 = vmatpush1.msra.mxu0 0.0
    %483 = vmatprep.subr.mxu0 0.0
    %484 = vmatpush1.msra.mxu0 0.0
    %485 = vmatprep.subr.mxu0 0.0
    %486 = vmatpush1.msra.mxu0 0.0
    %487 = vmatprep.subr.mxu0 0.0
    %488 = vmatpush1.msra.mxu0 0.0
    %489 = vmatprep.subr.mxu0 0.0
    %490 = vmatpush1.msra.mxu0 0.0
    %491 = vmatprep.subr.mxu0 0.0
    %492 = vmatpush1.msra.mxu0 0.0
    %493 = vmatprep.subr.mxu0 0.0
    %494 = vmatpush1.msra.mxu0 0.0
    %495 = vmatprep.subr.mxu0 0.0
    %496 = vmatpush1.msra.mxu0 0.0
    %497 = vmatprep.subr.mxu0 0.0
    %498 = vmatpush1.msra.mxu0 0.0
    %499 = vmatprep.subr.mxu0 0.0
    %500 = vmatpush1.msra.mxu0 0.0
    %501 = vmatprep.subr.mxu0 0.0
    %502 = vmatpush1.msra.mxu0 0.0
    %503 = vmatprep.subr.mxu0 0.0
    %504 = vmatpush1.msra.mxu0 0.0
    %505 = vmatprep.subr.mxu0 0.0
    %506 = vmatpush1.msra.mxu0 0.0
    %507 = vmatprep.subr.mxu0 0.0
    %508 = vmatpush1.msra.mxu0 0.0
    %509 = vmatprep.subr.mxu0 0.0
    %510 = vmatpush1.msra.mxu0 0.0
    %511 = vmatprep.subr.mxu0 0.0
    %512 = vmatpush1.msra.mxu0 0.0
    %513 = vmatprep.subr.mxu0 0.0
    %514 = vmatpush1.msra.mxu0 0.0
    %515 = vmatprep.subr.mxu0 0.0
    %516 = vmatpush1.msra.mxu0 0.0
    %517 = vmatprep.subr.mxu0 0.0
    %518 = vmatpush1.msra.mxu0 0.0
    %519 = vmatprep.subr.mxu0 0.0
    %520 = vmatpush1.msra.mxu0 0.0
    %521 = vmatprep.subr.mxu0 0.0
    %522 = vmatpush1.msra.mxu0 0.0
    %523 = vmatprep.subr.mxu0 0.0
    %524 = vmatpush1.msra.mxu0 0.0
    %525 = vmatprep.subr.mxu0 0.0
    %526 = vmatpush1.msra.mxu0 0.0
    %527 = vmatprep.subr.mxu0 0.0
    %528 = vmatpush1.msra.mxu0 0.0
    %529 = vmatprep.subr.mxu0 0.0
    %530 = vmatpush1.msra.mxu0 0.0
    %531 = vmatprep.mubr.f32.mxu0 0.0
    %532 = vmatmul.mubr.f32.gmra.mrb[0].mxu0 %v465
    %v533 = vpop.f32.mrb[0].mxu0
    %v534 = vadd.f32 0.0, %v533
    %v535 = vpop.f32.mrb[0].mxu0
    %536 = vdwg.mxu0
    %538 = vrot.lane.b32.xlu0 %v534, 8
    %v539 = vpop.permute.xlu0 %538
    %vm541 = vcmask 130112
    %542 = vst.msk [vmem:[#allocation2] sm:$0xff] %vm541, %v539
    %543 = vrot.lane.b32.xlu0 %v194, 112
    %v544 = vpop.permute.xlu0 %543
    %545 = vrot.lane.b32.xlu0 %v194, 80
    %v546 = vpop.permute.xlu0 %545
    %v547 = vsel %vm209, %v544, 0
    %v549 = vsel %vm209, %v546, 0
    %551 = vmatprep.subr.mxu0 0.0
    %552 = vmatpush1.xpose.msra.mxu0 %v549
    %553 = vmatprep.subr.mxu0 0.0
    %554 = vmatpush1.xpose.msra.mxu0 0.0
    %555 = vmatprep.subr.mxu0 0.0
    %556 = vmatpush1.xpose.msra.mxu0 0.0
    %557 = vmatprep.subr.mxu0 0.0
    %558 = vmatpush1.xpose.msra.mxu0 0.0
    %559 = vmatprep.subr.mxu0 0.0
    %560 = vmatpush1.xpose.msra.mxu0 0.0
    %561 = vmatprep.subr.mxu0 0.0
    %562 = vmatpush1.xpose.msra.mxu0 0.0
    %563 = vmatprep.subr.mxu0 0.0
    %564 = vmatpush1.xpose.msra.mxu0 0.0
    %565 = vmatprep.subr.mxu0 0.0
    %566 = vmatpush1.xpose.msra.mxu0 0.0
    %567 = vmatprep.subr.mxu0 0.0
    %568 = vmatpush1.xpose.msra.mxu0 0.0
    %569 = vmatprep.subr.mxu0 0.0
    %570 = vmatpush1.xpose.msra.mxu0 0.0
    %571 = vmatprep.subr.mxu0 0.0
    %572 = vmatpush1.xpose.msra.mxu0 0.0
    %573 = vmatprep.subr.mxu0 0.0
    %574 = vmatpush1.xpose.msra.mxu0 0.0
    %575 = vmatprep.subr.mxu0 0.0
    %576 = vmatpush1.xpose.msra.mxu0 0.0
    %577 = vmatprep.subr.mxu0 0.0
    %578 = vmatpush1.xpose.msra.mxu0 0.0
    %579 = vmatprep.subr.mxu0 0.0
    %580 = vmatpush1.xpose.msra.mxu0 0.0
    %581 = vmatprep.subr.mxu0 0.0
    %582 = vmatpush1.xpose.msra.mxu0 0.0
    %583 = vmatprep.subr.mxu0 0.0
    %584 = vmatpush1.xpose.msra.mxu0 0.0
    %585 = vmatprep.subr.mxu0 0.0
    %586 = vmatpush1.xpose.msra.mxu0 0.0
    %587 = vmatprep.subr.mxu0 0.0
    %588 = vmatpush1.xpose.msra.mxu0 0.0
    %589 = vmatprep.subr.mxu0 0.0
    %590 = vmatpush1.xpose.msra.mxu0 0.0
    %591 = vmatprep.subr.mxu0 0.0
    %592 = vmatpush1.xpose.msra.mxu0 0.0
    %593 = vmatprep.subr.mxu0 0.0
    %594 = vmatpush1.xpose.msra.mxu0 0.0
    %595 = vmatprep.subr.mxu0 0.0
    %596 = vmatpush1.xpose.msra.mxu0 0.0
    %597 = vmatprep.subr.mxu0 0.0
    %598 = vmatpush1.xpose.msra.mxu0 0.0
    %599 = vmatprep.subr.mxu0 0.0
    %600 = vmatpush1.xpose.msra.mxu0 0.0
    %601 = vmatprep.subr.mxu0 0.0
    %602 = vmatpush1.xpose.msra.mxu0 0.0
    %603 = vmatprep.subr.mxu0 0.0
    %604 = vmatpush1.xpose.msra.mxu0 0.0
    %605 = vmatprep.subr.mxu0 0.0
    %606 = vmatpush1.xpose.msra.mxu0 0.0
    %607 = vmatprep.subr.mxu0 0.0
    %608 = vmatpush1.xpose.msra.mxu0 0.0
    %609 = vmatprep.subr.mxu0 0.0
    %610 = vmatpush1.xpose.msra.mxu0 0.0
    %611 = vmatprep.subr.mxu0 0.0
    %612 = vmatpush1.xpose.msra.mxu0 0.0
    %613 = vmatprep.subr.mxu0 0.0
    %614 = vmatpush1.xpose.msra.mxu0 0.0
    %615 = vmatprep.mubr.f32.mxu0 0.0
    %616 = vmatmul.mubr.f32.gmra.mrb[0].mxu0 %v547
    %v617 = vpop.f32.mrb[0].mxu0
    %v618 = vadd.f32 %v205, %v617
    %v619 = vpop.f32.mrb[0].mxu0
    %620 = vdwg.mxu0
    %v621 = vsel %vm209, %v618, -inf
    %622 = vmax.xlane.f32.xlu0 %v621
    %v623 = vpop.xlane.xlu0 %622
    %v624 = vsub.f32 %v618, %v623
    %v625 = vmul.f32 %v624, 1.442695
    %v626 = vpow.pop %v625
    %v627 = vsel %vm209, %v626, 0.0
    %628 = vadd.xlane.f32.xlu0 %v627
    %v629 = vpop.xlane.xlu0 %628
    %v630 = vrcp.pop %v629
    %v631 = vmul.f32 %v626, %v630
    %632 = vrot.lane.b32.xlu0 %v194, 48
    %v633 = vpop.permute.xlu0 %632
    %v636 = vsel %vm209, %v631, 0
    %638 = vmatprep.subr.mxu0 0.0
    %639 = vmatpush1.msra.mxu0 %v633
    %640 = vmatprep.subr.mxu0 0.0
    %641 = vmatpush1.msra.mxu0 0.0
    %642 = vmatprep.subr.mxu0 0.0
    %643 = vmatpush1.msra.mxu0 0.0
    %644 = vmatprep.subr.mxu0 0.0
    %645 = vmatpush1.msra.mxu0 0.0
    %646 = vmatprep.subr.mxu0 0.0
    %647 = vmatpush1.msra.mxu0 0.0
    %648 = vmatprep.subr.mxu0 0.0
    %649 = vmatpush1.msra.mxu0 0.0
    %650 = vmatprep.subr.mxu0 0.0
    %651 = vmatpush1.msra.mxu0 0.0
    %652 = vmatprep.subr.mxu0 0.0
    %653 = vmatpush1.msra.mxu0 0.0
    %654 = vmatprep.subr.mxu0 0.0
    %655 = vmatpush1.msra.mxu0 0.0
    %656 = vmatprep.subr.mxu0 0.0
    %657 = vmatpush1.msra.mxu0 0.0
    %658 = vmatprep.subr.mxu0 0.0
    %659 = vmatpush1.msra.mxu0 0.0
    %660 = vmatprep.subr.mxu0 0.0
    %661 = vmatpush1.msra.mxu0 0.0
    %662 = vmatprep.subr.mxu0 0.0
    %663 = vmatpush1.msra.mxu0 0.0
    %664 = vmatprep.subr.mxu0 0.0
    %665 = vmatpush1.msra.mxu0 0.0
    %666 = vmatprep.subr.mxu0 0.0
    %667 = vmatpush1.msra.mxu0 0.0
    %668 = vmatprep.subr.mxu0 0.0
    %669 = vmatpush1.msra.mxu0 0.0
    %670 = vmatprep.subr.mxu0 0.0
    %671 = vmatpush1.msra.mxu0 0.0
    %672 = vmatprep.subr.mxu0 0.0
    %673 = vmatpush1.msra.mxu0 0.0
    %674 = vmatprep.subr.mxu0 0.0
    %675 = vmatpush1.msra.mxu0 0.0
    %676 = vmatprep.subr.mxu0 0.0
    %677 = vmatpush1.msra.mxu0 0.0
    %678 = vmatprep.subr.mxu0 0.0
    %679 = vmatpush1.msra.mxu0 0.0
    %680 = vmatprep.subr.mxu0 0.0
    %681 = vmatpush1.msra.mxu0 0.0
    %682 = vmatprep.subr.mxu0 0.0
    %683 = vmatpush1.msra.mxu0 0.0
    %684 = vmatprep.subr.mxu0 0.0
    %685 = vmatpush1.msra.mxu0 0.0
    %686 = vmatprep.subr.mxu0 0.0
    %687 = vmatpush1.msra.mxu0 0.0
    %688 = vmatprep.subr.mxu0 0.0
    %689 = vmatpush1.msra.mxu0 0.0
    %690 = vmatprep.subr.mxu0 0.0
    %691 = vmatpush1.msra.mxu0 0.0
    %692 = vmatprep.subr.mxu0 0.0
    %693 = vmatpush1.msra.mxu0 0.0
    %694 = vmatprep.subr.mxu0 0.0
    %695 = vmatpush1.msra.mxu0 0.0
    %696 = vmatprep.subr.mxu0 0.0
    %697 = vmatpush1.msra.mxu0 0.0
    %698 = vmatprep.subr.mxu0 0.0
    %699 = vmatpush1.msra.mxu0 0.0
    %700 = vmatprep.subr.mxu0 0.0
    %701 = vmatpush1.msra.mxu0 0.0
    %702 = vmatprep.mubr.f32.mxu0 0.0
    %703 = vmatmul.mubr.f32.gmra.mrb[0].mxu0 %v636
    %v704 = vpop.f32.mrb[0].mxu0
    %v705 = vadd.f32 0.0, %v704
    %v706 = vpop.f32.mrb[0].mxu0
    %707 = vdwg.mxu0
    %709 = vrot.lane.b32.xlu0 %v705, 16
    %v710 = vpop.permute.xlu0 %709
    %vm712 = vcmask 195712
    %713 = vst.msk [vmem:[#allocation2] sm:$0xff] %vm712, %v710
    %714 = vrot.lane.b32.xlu0 %v194, 104
    %v715 = vpop.permute.xlu0 %714
    %716 = vrot.lane.b32.xlu0 %v194, 72
    %v717 = vpop.permute.xlu0 %716
    %v718 = vsel %vm209, %v715, 0
    %v720 = vsel %vm209, %v717, 0
    %722 = vmatprep.subr.mxu0 0.0
    %723 = vmatpush1.xpose.msra.mxu0 %v720
    %724 = vmatprep.subr.mxu0 0.0
    %725 = vmatpush1.xpose.msra.mxu0 0.0
    %726 = vmatprep.subr.mxu0 0.0
    %727 = vmatpush1.xpose.msra.mxu0 0.0
    %728 = vmatprep.subr.mxu0 0.0
    %729 = vmatpush1.xpose.msra.mxu0 0.0
    %730 = vmatprep.subr.mxu0 0.0
    %731 = vmatpush1.xpose.msra.mxu0 0.0
    %732 = vmatprep.subr.mxu0 0.0
    %733 = vmatpush1.xpose.msra.mxu0 0.0
    %734 = vmatprep.subr.mxu0 0.0
    %735 = vmatpush1.xpose.msra.mxu0 0.0
    %736 = vmatprep.subr.mxu0 0.0
    %737 = vmatpush1.xpose.msra.mxu0 0.0
    %738 = vmatprep.subr.mxu0 0.0
    %739 = vmatpush1.xpose.msra.mxu0 0.0
    %740 = vmatprep.subr.mxu0 0.0
    %741 = vmatpush1.xpose.msra.mxu0 0.0
    %742 = vmatprep.subr.mxu0 0.0
    %743 = vmatpush1.xpose.msra.mxu0 0.0
    %744 = vmatprep.subr.mxu0 0.0
    %745 = vmatpush1.xpose.msra.mxu0 0.0
    %746 = vmatprep.subr.mxu0 0.0
    %747 = vmatpush1.xpose.msra.mxu0 0.0
    %748 = vmatprep.subr.mxu0 0.0
    %749 = vmatpush1.xpose.msra.mxu0 0.0
    %750 = vmatprep.subr.mxu0 0.0
    %751 = vmatpush1.xpose.msra.mxu0 0.0
    %752 = vmatprep.subr.mxu0 0.0
    %753 = vmatpush1.xpose.msra.mxu0 0.0
    %754 = vmatprep.subr.mxu0 0.0
    %755 = vmatpush1.xpose.msra.mxu0 0.0
    %756 = vmatprep.subr.mxu0 0.0
    %757 = vmatpush1.xpose.msra.mxu0 0.0
    %758 = vmatprep.subr.mxu0 0.0
    %759 = vmatpush1.xpose.msra.mxu0 0.0
    %760 = vmatprep.subr.mxu0 0.0
    %761 = vmatpush1.xpose.msra.mxu0 0.0
    %762 = vmatprep.subr.mxu0 0.0
    %763 = vmatpush1.xpose.msra.mxu0 0.0
    %764 = vmatprep.subr.mxu0 0.0
    %765 = vmatpush1.xpose.msra.mxu0 0.0
    %766 = vmatprep.subr.mxu0 0.0
    %767 = vmatpush1.xpose.msra.mxu0 0.0
    %768 = vmatprep.subr.mxu0 0.0
    %769 = vmatpush1.xpose.msra.mxu0 0.0
    %770 = vmatprep.subr.mxu0 0.0
    %771 = vmatpush1.xpose.msra.mxu0 0.0
    %772 = vmatprep.subr.mxu0 0.0
    %773 = vmatpush1.xpose.msra.mxu0 0.0
    %774 = vmatprep.subr.mxu0 0.0
    %775 = vmatpush1.xpose.msra.mxu0 0.0
    %776 = vmatprep.subr.mxu0 0.0
    %777 = vmatpush1.xpose.msra.mxu0 0.0
    %778 = vmatprep.subr.mxu0 0.0
    %779 = vmatpush1.xpose.msra.mxu0 0.0
    %780 = vmatprep.subr.mxu0 0.0
    %781 = vmatpush1.xpose.msra.mxu0 0.0
    %782 = vmatprep.subr.mxu0 0.0
    %783 = vmatpush1.xpose.msra.mxu0 0.0
    %784 = vmatprep.subr.mxu0 0.0
    %785 = vmatpush1.xpose.msra.mxu0 0.0
    %786 = vmatprep.mubr.f32.mxu0 0.0
    %787 = vmatmul.mubr.f32.gmra.mrb[0].mxu0 %v718
    %v788 = vpop.f32.mrb[0].mxu0
    %v789 = vadd.f32 %v205, %v788
    %v790 = vpop.f32.mrb[0].mxu0
    %791 = vdwg.mxu0
    %v792 = vsel %vm209, %v789, -inf
    %793 = vmax.xlane.f32.xlu0 %v792
    %v794 = vpop.xlane.xlu0 %793
    %v795 = vsub.f32 %v789, %v794
    %v796 = vmul.f32 %v795, 1.442695
    %v797 = vpow.pop %v796
    %v798 = vsel %vm209, %v797, 0.0
    %799 = vadd.xlane.f32.xlu0 %v798
    %v800 = vpop.xlane.xlu0 %799
    %v801 = vrcp.pop %v800
    %v802 = vmul.f32 %v797, %v801
    %803 = vrot.lane.b32.xlu0 %v194, 40
    %v804 = vpop.permute.xlu0 %803
    %v807 = vsel %vm209, %v802, 0
    %809 = vmatprep.subr.mxu0 0.0
    %810 = vmatpush1.msra.mxu0 %v804
    %811 = vmatprep.subr.mxu0 0.0
    %812 = vmatpush1.msra.mxu0 0.0
    %813 = vmatprep.subr.mxu0 0.0
    %814 = vmatpush1.msra.mxu0 0.0
    %815 = vmatprep.subr.mxu0 0.0
    %816 = vmatpush1.msra.mxu0 0.0
    %817 = vmatprep.subr.mxu0 0.0
    %818 = vmatpush1.msra.mxu0 0.0
    %819 = vmatprep.subr.mxu0 0.0
    %820 = vmatpush1.msra.mxu0 0.0
    %821 = vmatprep.subr.mxu0 0.0
    %822 = vmatpush1.msra.mxu0 0.0
    %823 = vmatprep.subr.mxu0 0.0
    %824 = vmatpush1.msra.mxu0 0.0
    %825 = vmatprep.subr.mxu0 0.0
    %826 = vmatpush1.msra.mxu0 0.0
    %827 = vmatprep.subr.mxu0 0.0
    %828 = vmatpush1.msra.mxu0 0.0
    %829 = vmatprep.subr.mxu0 0.0
    %830 = vmatpush1.msra.mxu0 0.0
    %831 = vmatprep.subr.mxu0 0.0
    %832 = vmatpush1.msra.mxu0 0.0
    %833 = vmatprep.subr.mxu0 0.0
    %834 = vmatpush1.msra.mxu0 0.0
    %835 = vmatprep.subr.mxu0 0.0
    %836 = vmatpush1.msra.mxu0 0.0
    %837 = vmatprep.subr.mxu0 0.0
    %838 = vmatpush1.msra.mxu0 0.0
    %839 = vmatprep.subr.mxu0 0.0
    %840 = vmatpush1.msra.mxu0 0.0
    %841 = vmatprep.subr.mxu0 0.0
    %842 = vmatpush1.msra.mxu0 0.0
    %843 = vmatprep.subr.mxu0 0.0
    %844 = vmatpush1.msra.mxu0 0.0
    %845 = vmatprep.subr.mxu0 0.0
    %846 = vmatpush1.msra.mxu0 0.0
    %847 = vmatprep.subr.mxu0 0.0
    %848 = vmatpush1.msra.mxu0 0.0
    %849 = vmatprep.subr.mxu0 0.0
    %850 = vmatpush1.msra.mxu0 0.0
    %851 = vmatprep.subr.mxu0 0.0
    %852 = vmatpush1.msra.mxu0 0.0
    %853 = vmatprep.subr.mxu0 0.0
    %854 = vmatpush1.msra.mxu0 0.0
    %855 = vmatprep.subr.mxu0 0.0
    %856 = vmatpush1.msra.mxu0 0.0
    %857 = vmatprep.subr.mxu0 0.0
    %858 = vmatpush1.msra.mxu0 0.0
    %859 = vmatprep.subr.mxu0 0.0
    %860 = vmatpush1.msra.mxu0 0.0
    %861 = vmatprep.subr.mxu0 0.0
    %862 = vmatpush1.msra.mxu0 0.0
    %863 = vmatprep.subr.mxu0 0.0
    %864 = vmatpush1.msra.mxu0 0.0
    %865 = vmatprep.subr.mxu0 0.0
    %866 = vmatpush1.msra.mxu0 0.0
    %867 = vmatprep.subr.mxu0 0.0
    %868 = vmatpush1.msra.mxu0 0.0
    %869 = vmatprep.subr.mxu0 0.0
    %870 = vmatpush1.msra.mxu0 0.0
    %871 = vmatprep.subr.mxu0 0.0
    %872 = vmatpush1.msra.mxu0 0.0
    %873 = vmatprep.mubr.f32.mxu0 0.0
    %874 = vmatmul.mubr.f32.gmra.mrb[0].mxu0 %v807
    %v875 = vpop.f32.mrb[0].mxu0
    %v876 = vadd.f32 0.0, %v875
    %v877 = vpop.f32.mrb[0].mxu0
    %878 = vdwg.mxu0
    %880 = vrot.lane.b32.xlu0 %v876, 24
    %v881 = vpop.permute.xlu0 %880
    %vm883 = vcmask 261312
    %884 = vst.msk [vmem:[#allocation2] sm:$0xff] %vm883, %v881
    %v885 = vlaneseq
    %v886 = vshrl.u32 %v885, 7
    %v887 = vsub.s32 1, %v886
    %v888 = vrot.slane %v94, %v887
    %890 = vrot.lane.b32.xlu0 %v199, 96
    %v891 = vpop.permute.xlu0 %890
    %v892 = vsel %vm209, %v199, 0
    %v894 = vsel %vm209, %v891, 0
    %896 = vmatprep.subr.mxu0 0.0
    %897 = vmatpush1.xpose.msra.mxu0 %v894
    %898 = vmatprep.subr.mxu0 0.0
    %899 = vmatpush1.xpose.msra.mxu0 0.0
    %900 = vmatprep.subr.mxu0 0.0
    %901 = vmatpush1.xpose.msra.mxu0 0.0
    %902 = vmatprep.subr.mxu0 0.0
    %903 = vmatpush1.xpose.msra.mxu0 0.0
    %904 = vmatprep.subr.mxu0 0.0
    %905 = vmatpush1.xpose.msra.mxu0 0.0
    %906 = vmatprep.subr.mxu0 0.0
    %907 = vmatpush1.xpose.msra.mxu0 0.0
    %908 = vmatprep.subr.mxu0 0.0
    %909 = vmatpush1.xpose.msra.mxu0 0.0
    %910 = vmatprep.subr.mxu0 0.0
    %911 = vmatpush1.xpose.msra.mxu0 0.0
    %912 = vmatprep.subr.mxu0 0.0
    %913 = vmatpush1.xpose.msra.mxu0 0.0
    %914 = vmatprep.subr.mxu0 0.0
    %915 = vmatpush1.xpose.msra.mxu0 0.0
    %916 = vmatprep.subr.mxu0 0.0
    %917 = vmatpush1.xpose.msra.mxu0 0.0
    %918 = vmatprep.subr.mxu0 0.0
    %919 = vmatpush1.xpose.msra.mxu0 0.0
    %920 = vmatprep.subr.mxu0 0.0
    %921 = vmatpush1.xpose.msra.mxu0 0.0
    %922 = vmatprep.subr.mxu0 0.0
    %923 = vmatpush1.xpose.msra.mxu0 0.0
    %924 = vmatprep.subr.mxu0 0.0
    %925 = vmatpush1.xpose.msra.mxu0 0.0
    %926 = vmatprep.subr.mxu0 0.0
    %927 = vmatpush1.xpose.msra.mxu0 0.0
    %928 = vmatprep.subr.mxu0 0.0
    %929 = vmatpush1.xpose.msra.mxu0 0.0
    %930 = vmatprep.subr.mxu0 0.0
    %931 = vmatpush1.xpose.msra.mxu0 0.0
    %932 = vmatprep.subr.mxu0 0.0
    %933 = vmatpush1.xpose.msra.mxu0 0.0
    %934 = vmatprep.subr.mxu0 0.0
    %935 = vmatpush1.xpose.msra.mxu0 0.0
    %936 = vmatprep.subr.mxu0 0.0
    %937 = vmatpush1.xpose.msra.mxu0 0.0
    %938 = vmatprep.subr.mxu0 0.0
    %939 = vmatpush1.xpose.msra.mxu0 0.0
    %940 = vmatprep.subr.mxu0 0.0
    %941 = vmatpush1.xpose.msra.mxu0 0.0
    %942 = vmatprep.subr.mxu0 0.0
    %943 = vmatpush1.xpose.msra.mxu0 0.0
    %944 = vmatprep.subr.mxu0 0.0
    %945 = vmatpush1.xpose.msra.mxu0 0.0
    %946 = vmatprep.subr.mxu0 0.0
    %947 = vmatpush1.xpose.msra.mxu0 0.0
    %948 = vmatprep.subr.mxu0 0.0
    %949 = vmatpush1.xpose.msra.mxu0 0.0
    %950 = vmatprep.subr.mxu0 0.0
    %951 = vmatpush1.xpose.msra.mxu0 0.0
    %952 = vmatprep.subr.mxu0 0.0
    %953 = vmatpush1.xpose.msra.mxu0 0.0
    %954 = vmatprep.subr.mxu0 0.0
    %955 = vmatpush1.xpose.msra.mxu0 0.0
    %956 = vmatprep.subr.mxu0 0.0
    %957 = vmatpush1.xpose.msra.mxu0 0.0
    %958 = vmatprep.subr.mxu0 0.0
    %959 = vmatpush1.xpose.msra.mxu0 0.0
    %960 = vmatprep.mubr.f32.mxu0 0.0
    %961 = vmatmul.mubr.f32.gmra.mrb[0].mxu0 %v892
    %v962 = vpop.f32.mrb[0].mxu0
    %v963 = vadd.f32 %v888, %v962
    %v964 = vpop.f32.mrb[0].mxu0
    %965 = vdwg.mxu0
    %v966 = vsel %vm209, %v963, -inf
    %967 = vmax.xlane.f32.xlu0 %v966
    %v968 = vpop.xlane.xlu0 %967
    %v969 = vsub.f32 %v963, %v968
    %v970 = vmul.f32 %v969, 1.442695
    %v971 = vpow.pop %v970
    %v972 = vsel %vm209, %v971, 0.0
    %973 = vadd.xlane.f32.xlu0 %v972
    %v974 = vpop.xlane.xlu0 %973
    %v975 = vrcp.pop %v974
    %v976 = vmul.f32 %v971, %v975
    %977 = vrot.lane.b32.xlu0 %v199, 64
    %v978 = vpop.permute.xlu0 %977
    %v981 = vsel %vm209, %v976, 0
    %983 = vmatprep.subr.mxu0 0.0
    %984 = vmatpush1.msra.mxu0 %v978
    %985 = vmatprep.subr.mxu0 0.0
    %986 = vmatpush1.msra.mxu0 0.0
    %987 = vmatprep.subr.mxu0 0.0
    %988 = vmatpush1.msra.mxu0 0.0
    %989 = vmatprep.subr.mxu0 0.0
    %990 = vmatpush1.msra.mxu0 0.0
    %991 = vmatprep.subr.mxu0 0.0
    %992 = vmatpush1.msra.mxu0 0.0
    %993 = vmatprep.subr.mxu0 0.0
    %994 = vmatpush1.msra.mxu0 0.0
    %995 = vmatprep.subr.mxu0 0.0
    %996 = vmatpush1.msra.mxu0 0.0
    %997 = vmatprep.subr.mxu0 0.0
    %998 = vmatpush1.msra.mxu0 0.0
    %999 = vmatprep.subr.mxu0 0.0
    %1000 = vmatpush1.msra.mxu0 0.0
    %1001 = vmatprep.subr.mxu0 0.0
    %1002 = vmatpush1.msra.mxu0 0.0
    %1003 = vmatprep.subr.mxu0 0.0
    %1004 = vmatpush1.msra.mxu0 0.0
    %1005 = vmatprep.subr.mxu0 0.0
    %1006 = vmatpush1.msra.mxu0 0.0
    %1007 = vmatprep.subr.mxu0 0.0
    %1008 = vmatpush1.msra.mxu0 0.0
    %1009 = vmatprep.subr.mxu0 0.0
    %1010 = vmatpush1.msra.mxu0 0.0
    %1011 = vmatprep.subr.mxu0 0.0
    %1012 = vmatpush1.msra.mxu0 0.0
    %1013 = vmatprep.subr.mxu0 0.0
    %1014 = vmatpush1.msra.mxu0 0.0
    %1015 = vmatprep.subr.mxu0 0.0
    %1016 = vmatpush1.msra.mxu0 0.0
    %1017 = vmatprep.subr.mxu0 0.0
    %1018 = vmatpush1.msra.mxu0 0.0
    %1019 = vmatprep.subr.mxu0 0.0
    %1020 = vmatpush1.msra.mxu0 0.0
    %1021 = vmatprep.subr.mxu0 0.0
    %1022 = vmatpush1.msra.mxu0 0.0
    %1023 = vmatprep.subr.mxu0 0.0
    %1024 = vmatpush1.msra.mxu0 0.0
    %1025 = vmatprep.subr.mxu0 0.0
    %1026 = vmatpush1.msra.mxu0 0.0
    %1027 = vmatprep.subr.mxu0 0.0
    %1028 = vmatpush1.msra.mxu0 0.0
    %1029 = vmatprep.subr.mxu0 0.0
    %1030 = vmatpush1.msra.mxu0 0.0
    %1031 = vmatprep.subr.mxu0 0.0
    %1032 = vmatpush1.msra.mxu0 0.0
    %1033 = vmatprep.subr.mxu0 0.0
    %1034 = vmatpush1.msra.mxu0 0.0
    %1035 = vmatprep.subr.mxu0 0.0
    %1036 = vmatpush1.msra.mxu0 0.0
    %1037 = vmatprep.subr.mxu0 0.0
    %1038 = vmatpush1.msra.mxu0 0.0
    %1039 = vmatprep.subr.mxu0 0.0
    %1040 = vmatpush1.msra.mxu0 0.0
    %1041 = vmatprep.subr.mxu0 0.0
    %1042 = vmatpush1.msra.mxu0 0.0
    %1043 = vmatprep.subr.mxu0 0.0
    %1044 = vmatpush1.msra.mxu0 0.0
    %1045 = vmatprep.subr.mxu0 0.0
    %1046 = vmatpush1.msra.mxu0 0.0
    %1047 = vmatprep.mubr.f32.mxu0 0.0
    %1048 = vmatmul.mubr.f32.gmra.mrb[0].mxu0 %v981
    %v1049 = vpop.f32.mrb[0].mxu0
    %v1050 = vadd.f32 0.0, %v1049
    %v1051 = vpop.f32.mrb[0].mxu0
    %1052 = vdwg.mxu0
    %1053 = vst.msk [vmem:[#allocation2 + $0x8] sm:$0xff] %vm209, %v1050
    %1054 = vrot.lane.b32.xlu0 %v199, 120
    %v1055 = vpop.permute.xlu0 %1054
    %1056 = vrot.lane.b32.xlu0 %v199, 88
    %v1057 = vpop.permute.xlu0 %1056
    %v1058 = vsel %vm209, %v1055, 0
    %v1060 = vsel %vm209, %v1057, 0
    %1062 = vmatprep.subr.mxu0 0.0
    %1063 = vmatpush1.xpose.msra.mxu0 %v1060
    %1064 = vmatprep.subr.mxu0 0.0
    %1065 = vmatpush1.xpose.msra.mxu0 0.0
    %1066 = vmatprep.subr.mxu0 0.0
    %1067 = vmatpush1.xpose.msra.mxu0 0.0
    %1068 = vmatprep.subr.mxu0 0.0
    %1069 = vmatpush1.xpose.msra.mxu0 0.0
    %1070 = vmatprep.subr.mxu0 0.0
    %1071 = vmatpush1.xpose.msra.mxu0 0.0
    %1072 = vmatprep.subr.mxu0 0.0
    %1073 = vmatpush1.xpose.msra.mxu0 0.0
    %1074 = vmatprep.subr.mxu0 0.0
    %1075 = vmatpush1.xpose.msra.mxu0 0.0
    %1076 = vmatprep.subr.mxu0 0.0
    %1077 = vmatpush1.xpose.msra.mxu0 0.0
    %1078 = vmatprep.subr.mxu0 0.0
    %1079 = vmatpush1.xpose.msra.mxu0 0.0
    %1080 = vmatprep.subr.mxu0 0.0
    %1081 = vmatpush1.xpose.msra.mxu0 0.0
    %1082 = vmatprep.subr.mxu0 0.0
    %1083 = vmatpush1.xpose.msra.mxu0 0.0
    %1084 = vmatprep.subr.mxu0 0.0
    %1085 = vmatpush1.xpose.msra.mxu0 0.0
    %1086 = vmatprep.subr.mxu0 0.0
    %1087 = vmatpush1.xpose.msra.mxu0 0.0
    %1088 = vmatprep.subr.mxu0 0.0
    %1089 = vmatpush1.xpose.msra.mxu0 0.0
    %1090 = vmatprep.subr.mxu0 0.0
    %1091 = vmatpush1.xpose.msra.mxu0 0.0
    %1092 = vmatprep.subr.mxu0 0.0
    %1093 = vmatpush1.xpose.msra.mxu0 0.0
    %1094 = vmatprep.subr.mxu0 0.0
    %1095 = vmatpush1.xpose.msra.mxu0 0.0
    %1096 = vmatprep.subr.mxu0 0.0
    %1097 = vmatpush1.xpose.msra.mxu0 0.0
    %1098 = vmatprep.subr.mxu0 0.0
    %1099 = vmatpush1.xpose.msra.mxu0 0.0
    %1100 = vmatprep.subr.mxu0 0.0
    %1101 = vmatpush1.xpose.msra.mxu0 0.0
    %1102 = vmatprep.subr.mxu0 0.0
    %1103 = vmatpush1.xpose.msra.mxu0 0.0
    %1104 = vmatprep.subr.mxu0 0.0
    %1105 = vmatpush1.xpose.msra.mxu0 0.0
    %1106 = vmatprep.subr.mxu0 0.0
    %1107 = vmatpush1.xpose.msra.mxu0 0.0
    %1108 = vmatprep.subr.mxu0 0.0
    %1109 = vmatpush1.xpose.msra.mxu0 0.0
    %1110 = vmatprep.subr.mxu0 0.0
    %1111 = vmatpush1.xpose.msra.mxu0 0.0
    %1112 = vmatprep.subr.mxu0 0.0
    %1113 = vmatpush1.xpose.msra.mxu0 0.0
    %1114 = vmatprep.subr.mxu0 0.0
    %1115 = vmatpush1.xpose.msra.mxu0 0.0
    %1116 = vmatprep.subr.mxu0 0.0
    %1117 = vmatpush1.xpose.msra.mxu0 0.0
    %1118 = vmatprep.subr.mxu0 0.0
    %1119 = vmatpush1.xpose.msra.mxu0 0.0
    %1120 = vmatprep.subr.mxu0 0.0
    %1121 = vmatpush1.xpose.msra.mxu0 0.0
    %1122 = vmatprep.subr.mxu0 0.0
    %1123 = vmatpush1.xpose.msra.mxu0 0.0
    %1124 = vmatprep.subr.mxu0 0.0
    %1125 = vmatpush1.xpose.msra.mxu0 0.0
    %1126 = vmatprep.mubr.f32.mxu0 0.0
    %1127 = vmatmul.mubr.f32.gmra.mrb[0].mxu0 %v1058
    %v1128 = vpop.f32.mrb[0].mxu0
    %v1129 = vadd.f32 %v888, %v1128
    %v1130 = vpop.f32.mrb[0].mxu0
    %1131 = vdwg.mxu0
    %v1132 = vsel %vm209, %v1129, -inf
    %1133 = vmax.xlane.f32.xlu0 %v1132
    %v1134 = vpop.xlane.xlu0 %1133
    %v1135 = vsub.f32 %v1129, %v1134
    %v1136 = vmul.f32 %v1135, 1.442695
    %v1137 = vpow.pop %v1136
    %v1138 = vsel %vm209, %v1137, 0.0
    %1139 = vadd.xlane.f32.xlu0 %v1138
    %v1140 = vpop.xlane.xlu0 %1139
    %v1141 = vrcp.pop %v1140
    %v1142 = vmul.f32 %v1137, %v1141
    %1143 = vrot.lane.b32.xlu0 %v199, 56
    %v1144 = vpop.permute.xlu0 %1143
    %v1147 = vsel %vm209, %v1142, 0
    %1149 = vmatprep.subr.mxu0 0.0
    %1150 = vmatpush1.msra.mxu0 %v1144
    %1151 = vmatprep.subr.mxu0 0.0
    %1152 = vmatpush1.msra.mxu0 0.0
    %1153 = vmatprep.subr.mxu0 0.0
    %1154 = vmatpush1.msra.mxu0 0.0
    %1155 = vmatprep.subr.mxu0 0.0
    %1156 = vmatpush1.msra.mxu0 0.0
    %1157 = vmatprep.subr.mxu0 0.0
    %1158 = vmatpush1.msra.mxu0 0.0
    %1159 = vmatprep.subr.mxu0 0.0
    %1160 = vmatpush1.msra.mxu0 0.0
    %1161 = vmatprep.subr.mxu0 0.0
    %1162 = vmatpush1.msra.mxu0 0.0
    %1163 = vmatprep.subr.mxu0 0.0
    %1164 = vmatpush1.msra.mxu0 0.0
    %1165 = vmatprep.subr.mxu0 0.0
    %1166 = vmatpush1.msra.mxu0 0.0
    %1167 = vmatprep.subr.mxu0 0.0
    %1168 = vmatpush1.msra.mxu0 0.0
    %1169 = vmatprep.subr.mxu0 0.0
    %1170 = vmatpush1.msra.mxu0 0.0
    %1171 = vmatprep.subr.mxu0 0.0
    %1172 = vmatpush1.msra.mxu0 0.0
    %1173 = vmatprep.subr.mxu0 0.0
    %1174 = vmatpush1.msra.mxu0 0.0
    %1175 = vmatprep.subr.mxu0 0.0
    %1176 = vmatpush1.msra.mxu0 0.0
    %1177 = vmatprep.subr.mxu0 0.0
    %1178 = vmatpush1.msra.mxu0 0.0
    %1179 = vmatprep.subr.mxu0 0.0
    %1180 = vmatpush1.msra.mxu0 0.0
    %1181 = vmatprep.subr.mxu0 0.0
    %1182 = vmatpush1.msra.mxu0 0.0
    %1183 = vmatprep.subr.mxu0 0.0
    %1184 = vmatpush1.msra.mxu0 0.0
    %1185 = vmatprep.subr.mxu0 0.0
    %1186 = vmatpush1.msra.mxu0 0.0
    %1187 = vmatprep.subr.mxu0 0.0
    %1188 = vmatpush1.msra.mxu0 0.0
    %1189 = vmatprep.subr.mxu0 0.0
    %1190 = vmatpush1.msra.mxu0 0.0
    %1191 = vmatprep.subr.mxu0 0.0
    %1192 = vmatpush1.msra.mxu0 0.0
    %1193 = vmatprep.subr.mxu0 0.0
    %1194 = vmatpush1.msra.mxu0 0.0
    %1195 = vmatprep.subr.mxu0 0.0
    %1196 = vmatpush1.msra.mxu0 0.0
    %1197 = vmatprep.subr.mxu0 0.0
    %1198 = vmatpush1.msra.mxu0 0.0
    %1199 = vmatprep.subr.mxu0 0.0
    %1200 = vmatpush1.msra.mxu0 0.0
    %1201 = vmatprep.subr.mxu0 0.0
    %1202 = vmatpush1.msra.mxu0 0.0
    %1203 = vmatprep.subr.mxu0 0.0
    %1204 = vmatpush1.msra.mxu0 0.0
    %1205 = vmatprep.subr.mxu0 0.0
    %1206 = vmatpush1.msra.mxu0 0.0
    %1207 = vmatprep.subr.mxu0 0.0
    %1208 = vmatpush1.msra.mxu0 0.0
    %1209 = vmatprep.subr.mxu0 0.0
    %1210 = vmatpush1.msra.mxu0 0.0
    %1211 = vmatprep.subr.mxu0 0.0
    %1212 = vmatpush1.msra.mxu0 0.0
    %1213 = vmatprep.mubr.f32.mxu0 0.0
    %1214 = vmatmul.mubr.f32.gmra.mrb[0].mxu0 %v1147
    %v1215 = vpop.f32.mrb[0].mxu0
    %v1216 = vadd.f32 0.0, %v1215
    %v1217 = vpop.f32.mrb[0].mxu0
    %1218 = vdwg.mxu0
    %1220 = vrot.lane.b32.xlu0 %v1216, 8
    %v1221 = vpop.permute.xlu0 %1220
    %1223 = vst.msk [vmem:[#allocation2 + $0x8] sm:$0xff] %vm541, %v1221
    %1224 = vrot.lane.b32.xlu0 %v199, 112
    %v1225 = vpop.permute.xlu0 %1224
    %1226 = vrot.lane.b32.xlu0 %v199, 80
    %v1227 = vpop.permute.xlu0 %1226
    %v1228 = vsel %vm209, %v1225, 0
    %v1230 = vsel %vm209, %v1227, 0
    %1232 = vmatprep.subr.mxu0 0.0
    %1233 = vmatpush1.xpose.msra.mxu0 %v1230
    %1234 = vmatprep.subr.mxu0 0.0
    %1235 = vmatpush1.xpose.msra.mxu0 0.0
    %1236 = vmatprep.subr.mxu0 0.0
    %1237 = vmatpush1.xpose.msra.mxu0 0.0
    %1238 = vmatprep.subr.mxu0 0.0
    %1239 = vmatpush1.xpose.msra.mxu0 0.0
    %1240 = vmatprep.subr.mxu0 0.0
    %1241 = vmatpush1.xpose.msra.mxu0 0.0
    %1242 = vmatprep.subr.mxu0 0.0
    %1243 = vmatpush1.xpose.msra.mxu0 0.0
    %1244 = vmatprep.subr.mxu0 0.0
    %1245 = vmatpush1.xpose.msra.mxu0 0.0
    %1246 = vmatprep.subr.mxu0 0.0
    %1247 = vmatpush1.xpose.msra.mxu0 0.0
    %1248 = vmatprep.subr.mxu0 0.0
    %1249 = vmatpush1.xpose.msra.mxu0 0.0
    %1250 = vmatprep.subr.mxu0 0.0
    %1251 = vmatpush1.xpose.msra.mxu0 0.0
    %1252 = vmatprep.subr.mxu0 0.0
    %1253 = vmatpush1.xpose.msra.mxu0 0.0
    %1254 = vmatprep.subr.mxu0 0.0
    %1255 = vmatpush1.xpose.msra.mxu0 0.0
    %1256 = vmatprep.subr.mxu0 0.0
    %1257 = vmatpush1.xpose.msra.mxu0 0.0
    %1258 = vmatprep.subr.mxu0 0.0
    %1259 = vmatpush1.xpose.msra.mxu0 0.0
    %1260 = vmatprep.subr.mxu0 0.0
    %1261 = vmatpush1.xpose.msra.mxu0 0.0
    %1262 = vmatprep.subr.mxu0 0.0
    %1263 = vmatpush1.xpose.msra.mxu0 0.0
    %1264 = vmatprep.subr.mxu0 0.0
    %1265 = vmatpush1.xpose.msra.mxu0 0.0
    %1266 = vmatprep.subr.mxu0 0.0
    %1267 = vmatpush1.xpose.msra.mxu0 0.0
    %1268 = vmatprep.subr.mxu0 0.0
    %1269 = vmatpush1.xpose.msra.mxu0 0.0
    %1270 = vmatprep.subr.mxu0 0.0
    %1271 = vmatpush1.xpose.msra.mxu0 0.0
    %1272 = vmatprep.subr.mxu0 0.0
    %1273 = vmatpush1.xpose.msra.mxu0 0.0
    %1274 = vmatprep.subr.mxu0 0.0
    %1275 = vmatpush1.xpose.msra.mxu0 0.0
    %1276 = vmatprep.subr.mxu0 0.0
    %1277 = vmatpush1.xpose.msra.mxu0 0.0
    %1278 = vmatprep.subr.mxu0 0.0
    %1279 = vmatpush1.xpose.msra.mxu0 0.0
    %1280 = vmatprep.subr.mxu0 0.0
    %1281 = vmatpush1.xpose.msra.mxu0 0.0
    %1282 = vmatprep.subr.mxu0 0.0
    %1283 = vmatpush1.xpose.msra.mxu0 0.0
    %1284 = vmatprep.subr.mxu0 0.0
    %1285 = vmatpush1.xpose.msra.mxu0 0.0
    %1286 = vmatprep.subr.mxu0 0.0
    %1287 = vmatpush1.xpose.msra.mxu0 0.0
    %1288 = vmatprep.subr.mxu0 0.0
    %1289 = vmatpush1.xpose.msra.mxu0 0.0
    %1290 = vmatprep.subr.mxu0 0.0
    %1291 = vmatpush1.xpose.msra.mxu0 0.0
    %1292 = vmatprep.subr.mxu0 0.0
    %1293 = vmatpush1.xpose.msra.mxu0 0.0
    %1294 = vmatprep.subr.mxu0 0.0
    %1295 = vmatpush1.xpose.msra.mxu0 0.0
    %1296 = vmatprep.mubr.f32.mxu0 0.0
    %1297 = vmatmul.mubr.f32.gmra.mrb[0].mxu0 %v1228
    %v1298 = vpop.f32.mrb[0].mxu0
    %v1299 = vadd.f32 %v888, %v1298
    %v1300 = vpop.f32.mrb[0].mxu0
    %1301 = vdwg.mxu0
    %v1302 = vsel %vm209, %v1299, -inf
    %1303 = vmax.xlane.f32.xlu0 %v1302
    %v1304 = vpop.xlane.xlu0 %1303
    %v1305 = vsub.f32 %v1299, %v1304
    %v1306 = vmul.f32 %v1305, 1.442695
    %v1307 = vpow.pop %v1306
    %v1308 = vsel %vm209, %v1307, 0.0
    %1309 = vadd.xlane.f32.xlu0 %v1308
    %v1310 = vpop.xlane.xlu0 %1309
    %v1311 = vrcp.pop %v1310
    %v1312 = vmul.f32 %v1307, %v1311
    %1313 = vrot.lane.b32.xlu0 %v199, 48
    %v1314 = vpop.permute.xlu0 %1313
    %v1317 = vsel %vm209, %v1312, 0
    %1319 = vmatprep.subr.mxu0 0.0
    %1320 = vmatpush1.msra.mxu0 %v1314
    %1321 = vmatprep.subr.mxu0 0.0
    %1322 = vmatpush1.msra.mxu0 0.0
    %1323 = vmatprep.subr.mxu0 0.0
    %1324 = vmatpush1.msra.mxu0 0.0
    %1325 = vmatprep.subr.mxu0 0.0
    %1326 = vmatpush1.msra.mxu0 0.0
    %1327 = vmatprep.subr.mxu0 0.0
    %1328 = vmatpush1.msra.mxu0 0.0
    %1329 = vmatprep.subr.mxu0 0.0
    %1330 = vmatpush1.msra.mxu0 0.0
    %1331 = vmatprep.subr.mxu0 0.0
    %1332 = vmatpush1.msra.mxu0 0.0
    %1333 = vmatprep.subr.mxu0 0.0
    %1334 = vmatpush1.msra.mxu0 0.0
    %1335 = vmatprep.subr.mxu0 0.0
    %1336 = vmatpush1.msra.mxu0 0.0
    %1337 = vmatprep.subr.mxu0 0.0
    %1338 = vmatpush1.msra.mxu0 0.0
    %1339 = vmatprep.subr.mxu0 0.0
    %1340 = vmatpush1.msra.mxu0 0.0
    %1341 = vmatprep.subr.mxu0 0.0
    %1342 = vmatpush1.msra.mxu0 0.0
    %1343 = vmatprep.subr.mxu0 0.0
    %1344 = vmatpush1.msra.mxu0 0.0
    %1345 = vmatprep.subr.mxu0 0.0
    %1346 = vmatpush1.msra.mxu0 0.0
    %1347 = vmatprep.subr.mxu0 0.0
    %1348 = vmatpush1.msra.mxu0 0.0
    %1349 = vmatprep.subr.mxu0 0.0
    %1350 = vmatpush1.msra.mxu0 0.0
    %1351 = vmatprep.subr.mxu0 0.0
    %1352 = vmatpush1.msra.mxu0 0.0
    %1353 = vmatprep.subr.mxu0 0.0
    %1354 = vmatpush1.msra.mxu0 0.0
    %1355 = vmatprep.subr.mxu0 0.0
    %1356 = vmatpush1.msra.mxu0 0.0
    %1357 = vmatprep.subr.mxu0 0.0
    %1358 = vmatpush1.msra.mxu0 0.0
    %1359 = vmatprep.subr.mxu0 0.0
    %1360 = vmatpush1.msra.mxu0 0.0
    %1361 = vmatprep.subr.mxu0 0.0
    %1362 = vmatpush1.msra.mxu0 0.0
    %1363 = vmatprep.subr.mxu0 0.0
    %1364 = vmatpush1.msra.mxu0 0.0
    %1365 = vmatprep.subr.mxu0 0.0
    %1366 = vmatpush1.msra.mxu0 0.0
    %1367 = vmatprep.subr.mxu0 0.0
    %1368 = vmatpush1.msra.mxu0 0.0
    %1369 = vmatprep.subr.mxu0 0.0
    %1370 = vmatpush1.msra.mxu0 0.0
    %1371 = vmatprep.subr.mxu0 0.0
    %1372 = vmatpush1.msra.mxu0 0.0
    %1373 = vmatprep.subr.mxu0 0.0
    %1374 = vmatpush1.msra.mxu0 0.0
    %1375 = vmatprep.subr.mxu0 0.0
    %1376 = vmatpush1.msra.mxu0 0.0
    %1377 = vmatprep.subr.mxu0 0.0
    %1378 = vmatpush1.msra.mxu0 0.0
    %1379 = vmatprep.subr.mxu0 0.0
    %1380 = vmatpush1.msra.mxu0 0.0
    %1381 = vmatprep.subr.mxu0 0.0
    %1382 = vmatpush1.msra.mxu0 0.0
    %1383 = vmatprep.mubr.f32.mxu0 0.0
    %1384 = vmatmul.mubr.f32.gmra.mrb[0].mxu0 %v1317
    %v1385 = vpop.f32.mrb[0].mxu0
    %v1386 = vadd.f32 0.0, %v1385
    %v1387 = vpop.f32.mrb[0].mxu0
    %1388 = vdwg.mxu0
    %1390 = vrot.lane.b32.xlu0 %v1386, 16
    %v1391 = vpop.permute.xlu0 %1390
    %1393 = vst.msk [vmem:[#allocation2 + $0x8] sm:$0xff] %vm712, %v1391
    %1394 = vrot.lane.b32.xlu0 %v199, 104
    %v1395 = vpop.permute.xlu0 %1394
    %1396 = vrot.lane.b32.xlu0 %v199, 72
    %v1397 = vpop.permute.xlu0 %1396
    %v1398 = vsel %vm209, %v1395, 0
    %v1400 = vsel %vm209, %v1397, 0
    %1402 = vmatprep.subr.mxu0 0.0
    %1403 = vmatpush1.xpose.msra.mxu0 %v1400
    %1404 = vmatprep.subr.mxu0 0.0
    %1405 = vmatpush1.xpose.msra.mxu0 0.0
    %1406 = vmatprep.subr.mxu0 0.0
    %1407 = vmatpush1.xpose.msra.mxu0 0.0
    %1408 = vmatprep.subr.mxu0 0.0
    %1409 = vmatpush1.xpose.msra.mxu0 0.0
    %1410 = vmatprep.subr.mxu0 0.0
    %1411 = vmatpush1.xpose.msra.mxu0 0.0
    %1412 = vmatprep.subr.mxu0 0.0
    %1413 = vmatpush1.xpose.msra.mxu0 0.0
    %1414 = vmatprep.subr.mxu0 0.0
    %1415 = vmatpush1.xpose.msra.mxu0 0.0
    %1416 = vmatprep.subr.mxu0 0.0
    %1417 = vmatpush1.xpose.msra.mxu0 0.0
    %1418 = vmatprep.subr.mxu0 0.0
    %1419 = vmatpush1.xpose.msra.mxu0 0.0
    %1420 = vmatprep.subr.mxu0 0.0
    %1421 = vmatpush1.xpose.msra.mxu0 0.0
    %1422 = vmatprep.subr.mxu0 0.0
    %1423 = vmatpush1.xpose.msra.mxu0 0.0
    %1424 = vmatprep.subr.mxu0 0.0
    %1425 = vmatpush1.xpose.msra.mxu0 0.0
    %1426 = vmatprep.subr.mxu0 0.0
    %1427 = vmatpush1.xpose.msra.mxu0 0.0
    %1428 = vmatprep.subr.mxu0 0.0
    %1429 = vmatpush1.xpose.msra.mxu0 0.0
    %1430 = vmatprep.subr.mxu0 0.0
    %1431 = vmatpush1.xpose.msra.mxu0 0.0
    %1432 = vmatprep.subr.mxu0 0.0
    %1433 = vmatpush1.xpose.msra.mxu0 0.0
    %1434 = vmatprep.subr.mxu0 0.0
    %1435 = vmatpush1.xpose.msra.mxu0 0.0
    %1436 = vmatprep.subr.mxu0 0.0
    %1437 = vmatpush1.xpose.msra.mxu0 0.0
    %1438 = vmatprep.subr.mxu0 0.0
    %1439 = vmatpush1.xpose.msra.mxu0 0.0
    %1440 = vmatprep.subr.mxu0 0.0
    %1441 = vmatpush1.xpose.msra.mxu0 0.0
    %1442 = vmatprep.subr.mxu0 0.0
    %1443 = vmatpush1.xpose.msra.mxu0 0.0
    %1444 = vmatprep.subr.mxu0 0.0
    %1445 = vmatpush1.xpose.msra.mxu0 0.0
    %1446 = vmatprep.subr.mxu0 0.0
    %1447 = vmatpush1.xpose.msra.mxu0 0.0
    %1448 = vmatprep.subr.mxu0 0.0
    %1449 = vmatpush1.xpose.msra.mxu0 0.0
    %1450 = vmatprep.subr.mxu0 0.0
    %1451 = vmatpush1.xpose.msra.mxu0 0.0
    %1452 = vmatprep.subr.mxu0 0.0
    %1453 = vmatpush1.xpose.msra.mxu0 0.0
    %1454 = vmatprep.subr.mxu0 0.0
    %1455 = vmatpush1.xpose.msra.mxu0 0.0
    %1456 = vmatprep.subr.mxu0 0.0
    %1457 = vmatpush1.xpose.msra.mxu0 0.0
    %1458 = vmatprep.subr.mxu0 0.0
    %1459 = vmatpush1.xpose.msra.mxu0 0.0
    %1460 = vmatprep.subr.mxu0 0.0
    %1461 = vmatpush1.xpose.msra.mxu0 0.0
    %1462 = vmatprep.subr.mxu0 0.0
    %1463 = vmatpush1.xpose.msra.mxu0 0.0
    %1464 = vmatprep.subr.mxu0 0.0
    %1465 = vmatpush1.xpose.msra.mxu0 0.0
    %1466 = vmatprep.mubr.f32.mxu0 0.0
    %1467 = vmatmul.mubr.f32.gmra.mrb[0].mxu0 %v1398
    %v1468 = vpop.f32.mrb[0].mxu0
    %v1469 = vadd.f32 %v888, %v1468
    %v1470 = vpop.f32.mrb[0].mxu0
    %1471 = vdwg.mxu0
    %v1472 = vsel %vm209, %v1469, -inf
    %1473 = vmax.xlane.f32.xlu0 %v1472
    %v1474 = vpop.xlane.xlu0 %1473
    %v1475 = vsub.f32 %v1469, %v1474
    %v1476 = vmul.f32 %v1475, 1.442695
    %v1477 = vpow.pop %v1476
    %v1478 = vsel %vm209, %v1477, 0.0
    %1479 = vadd.xlane.f32.xlu0 %v1478
    %v1480 = vpop.xlane.xlu0 %1479
    %v1481 = vrcp.pop %v1480
    %v1482 = vmul.f32 %v1477, %v1481
    %1483 = vrot.lane.b32.xlu0 %v199, 40
    %v1484 = vpop.permute.xlu0 %1483
    %v1487 = vsel %vm209, %v1482, 0
    %1489 = vmatprep.subr.mxu0 0.0
    %1490 = vmatpush1.msra.mxu0 %v1484
    %1491 = vmatprep.subr.mxu0 0.0
    %1492 = vmatpush1.msra.mxu0 0.0
    %1493 = vmatprep.subr.mxu0 0.0
    %1494 = vmatpush1.msra.mxu0 0.0
    %1495 = vmatprep.subr.mxu0 0.0
    %1496 = vmatpush1.msra.mxu0 0.0
    %1497 = vmatprep.subr.mxu0 0.0
    %1498 = vmatpush1.msra.mxu0 0.0
    %1499 = vmatprep.subr.mxu0 0.0
    %1500 = vmatpush1.msra.mxu0 0.0
    %1501 = vmatprep.subr.mxu0 0.0
    %1502 = vmatpush1.msra.mxu0 0.0
    %1503 = vmatprep.subr.mxu0 0.0
    %1504 = vmatpush1.msra.mxu0 0.0
    %1505 = vmatprep.subr.mxu0 0.0
    %1506 = vmatpush1.msra.mxu0 0.0
    %1507 = vmatprep.subr.mxu0 0.0
    %1508 = vmatpush1.msra.mxu0 0.0
    %1509 = vmatprep.subr.mxu0 0.0
    %1510 = vmatpush1.msra.mxu0 0.0
    %1511 = vmatprep.subr.mxu0 0.0
    %1512 = vmatpush1.msra.mxu0 0.0
    %1513 = vmatprep.subr.mxu0 0.0
    %1514 = vmatpush1.msra.mxu0 0.0
    %1515 = vmatprep.subr.mxu0 0.0
    %1516 = vmatpush1.msra.mxu0 0.0
    %1517 = vmatprep.subr.mxu0 0.0
    %1518 = vmatpush1.msra.mxu0 0.0
    %1519 = vmatprep.subr.mxu0 0.0
    %1520 = vmatpush1.msra.mxu0 0.0
    %1521 = vmatprep.subr.mxu0 0.0
    %1522 = vmatpush1.msra.mxu0 0.0
    %1523 = vmatprep.subr.mxu0 0.0
    %1524 = vmatpush1.msra.mxu0 0.0
    %1525 = vmatprep.subr.mxu0 0.0
    %1526 = vmatpush1.msra.mxu0 0.0
    %1527 = vmatprep.subr.mxu0 0.0
    %1528 = vmatpush1.msra.mxu0 0.0
    %1529 = vmatprep.subr.mxu0 0.0
    %1530 = vmatpush1.msra.mxu0 0.0
    %1531 = vmatprep.subr.mxu0 0.0
    %1532 = vmatpush1.msra.mxu0 0.0
    %1533 = vmatprep.subr.mxu0 0.0
    %1534 = vmatpush1.msra.mxu0 0.0
    %1535 = vmatprep.subr.mxu0 0.0
    %1536 = vmatpush1.msra.mxu0 0.0
    %1537 = vmatprep.subr.mxu0 0.0
    %1538 = vmatpush1.msra.mxu0 0.0
    %1539 = vmatprep.subr.mxu0 0.0
    %1540 = vmatpush1.msra.mxu0 0.0
    %1541 = vmatprep.subr.mxu0 0.0
    %1542 = vmatpush1.msra.mxu0 0.0
    %1543 = vmatprep.subr.mxu0 0.0
    %1544 = vmatpush1.msra.mxu0 0.0
    %1545 = vmatprep.subr.mxu0 0.0
    %1546 = vmatpush1.msra.mxu0 0.0
    %1547 = vmatprep.subr.mxu0 0.0
    %1548 = vmatpush1.msra.mxu0 0.0
    %1549 = vmatprep.subr.mxu0 0.0
    %1550 = vmatpush1.msra.mxu0 0.0
    %1551 = vmatprep.subr.mxu0 0.0
    %1552 = vmatpush1.msra.mxu0 0.0
    %1553 = vmatprep.mubr.f32.mxu0 0.0
    %1554 = vmatmul.mubr.f32.gmra.mrb[0].mxu0 %v1487
    %v1555 = vpop.f32.mrb[0].mxu0
    %v1556 = vadd.f32 0.0, %v1555
    %v1557 = vpop.f32.mrb[0].mxu0
    %1558 = vdwg.mxu0
    %1560 = vrot.lane.b32.xlu0 %v1556, 24
    %v1561 = vpop.permute.xlu0 %1560
    %1563 = vst.msk [vmem:[#allocation2 + $0x8] sm:$0xff] %vm883, %v1561
    %v1564 = vld [vmem:[#allocation2] sm:$0xff]
    %v1565 = vld [vmem:[#allocation2 + $0x8] sm:$0xff]
    %v1566 = vlaneseq
    %v1567 = vshrl.u32 %v1566, 7
    %v1568 = vsub.s32 1, %v1567
    %v1569 = vrot.slane %v115, %v1568
    %v1571 = vsel %vm120, %v1564, 0
    %v1574 = vsel %vm120, %v1565, 0
    %1576 = vmatprep.subr.mxu0 0.0
    %1577 = vmatpush1.msra.mxu0 %v99
    %1578 = vmatprep.subr.mxu0 0.0
    %1579 = vmatpush1.msra.mxu0 %v100
    %1580 = vmatprep.subr.mxu0 0.0
    %1581 = vmatpush1.msra.mxu0 %v101
    %1582 = vmatprep.subr.mxu0 0.0
    %1583 = vmatpush1.msra.mxu0 %v102
    %1584 = vmatprep.subr.mxu0 0.0
    %1585 = vmatpush1.msra.mxu0 0.0
    %1586 = vmatprep.subr.mxu0 0.0
    %1587 = vmatpush1.msra.mxu0 0.0
    %1588 = vmatprep.subr.mxu0 0.0
    %1589 = vmatpush1.msra.mxu0 0.0
    %1590 = vmatprep.subr.mxu0 0.0
    %1591 = vmatpush1.msra.mxu0 0.0
    %1592 = vmatprep.subr.mxu0 0.0
    %1593 = vmatpush1.msra.mxu0 0.0
    %1594 = vmatprep.subr.mxu0 0.0
    %1595 = vmatpush1.msra.mxu0 0.0
    %1596 = vmatprep.subr.mxu0 0.0
    %1597 = vmatpush1.msra.mxu0 0.0
    %1598 = vmatprep.subr.mxu0 0.0
    %1599 = vmatpush1.msra.mxu0 0.0
    %1600 = vmatprep.subr.mxu0 0.0
    %1601 = vmatpush1.msra.mxu0 0.0
    %1602 = vmatprep.subr.mxu0 0.0
    %1603 = vmatpush1.msra.mxu0 0.0
    %1604 = vmatprep.subr.mxu0 0.0
    %1605 = vmatpush1.msra.mxu0 0.0
    %1606 = vmatprep.subr.mxu0 0.0
    %1607 = vmatpush1.msra.mxu0 0.0
    %1608 = vmatprep.subr.mxu0 0.0
    %1609 = vmatpush1.msra.mxu0 0.0
    %1610 = vmatprep.subr.mxu0 0.0
    %1611 = vmatpush1.msra.mxu0 0.0
    %1612 = vmatprep.subr.mxu0 0.0
    %1613 = vmatpush1.msra.mxu0 0.0
    %1614 = vmatprep.subr.mxu0 0.0
    %1615 = vmatpush1.msra.mxu0 0.0
    %1616 = vmatprep.subr.mxu0 0.0
    %1617 = vmatpush1.msra.mxu0 0.0
    %1618 = vmatprep.subr.mxu0 0.0
    %1619 = vmatpush1.msra.mxu0 0.0
    %1620 = vmatprep.subr.mxu0 0.0
    %1621 = vmatpush1.msra.mxu0 0.0
    %1622 = vmatprep.subr.mxu0 0.0
    %1623 = vmatpush1.msra.mxu0 0.0
    %1624 = vmatprep.subr.mxu0 0.0
    %1625 = vmatpush1.msra.mxu0 0.0
    %1626 = vmatprep.subr.mxu0 0.0
    %1627 = vmatpush1.msra.mxu0 0.0
    %1628 = vmatprep.subr.mxu0 0.0
    %1629 = vmatpush1.msra.mxu0 0.0
    %1630 = vmatprep.subr.mxu0 0.0
    %1631 = vmatpush1.msra.mxu0 0.0
    %1632 = vmatprep.subr.mxu0 0.0
    %1633 = vmatpush1.msra.mxu0 0.0
    %1634 = vmatprep.subr.mxu0 0.0
    %1635 = vmatpush1.msra.mxu0 0.0
    %1636 = vmatprep.subr.mxu0 0.0
    %1637 = vmatpush1.msra.mxu0 0.0
    %1638 = vmatprep.subr.mxu0 0.0
    %1639 = vmatpush1.msra.mxu0 0.0
    %1640 = vmatprep.mubr.f32.mxu0 0.0
    %1641 = vmatmul.mubr.f32.gmra.mrb[0].mxu0 %v1571
    %v1642 = vpop.f32.mrb[0].mxu0
    %v1643 = vadd.f32 %v1569, %v1642
    %v1644 = vpop.f32.mrb[0].mxu0
    %1645 = vmatprep.mubr.f32.mxu0 0.0
    %1646 = vmatmul.mubr.f32.gmra.mrb[0].mxu0 %v1574
    %v1647 = vpop.f32.mrb[0].mxu0
    %v1648 = vadd.f32 %v1569, %v1647
    %v1649 = vpop.f32.mrb[0].mxu0
    %1650 = vdwg.mxu0
    %v1651 = vadd.f32 %v92, %v1643
    %v1652 = vadd.f32 %v93, %v1648
    %v1653 = vsel %vm120, %v1651, 0.0
    %1654 = vadd.xlane.f32.xlu0 %v1653
    %v1655 = vpop.xlane.xlu0 %1654
    %v1656 = vsel %vm120, %v1652, 0.0
    %1657 = vadd.xlane.f32.xlu0 %v1656
    %v1658 = vpop.xlane.xlu0 %1657
    %v1659 = vrcp.pop 32.0
    %v1660 = vmul.f32 %v1655, %v1659
    %v1661 = vmul.f32 %v1658, %v1659
    %v1662 = vsub.f32 %v1651, %v1660
    %v1663 = vsub.f32 %v1652, %v1661
    %v1664 = vmul.f32 %v1662, %v1662
    %v1665 = vmul.f32 %v1663, %v1663
    %v1666 = vsel %vm120, %v1664, 0.0
    %1667 = vadd.xlane.f32.xlu0 %v1666
    %v1668 = vpop.xlane.xlu0 %1667
    %v1669 = vsel %vm120, %v1665, 0.0
    %1670 = vadd.xlane.f32.xlu0 %v1669
    %v1671 = vpop.xlane.xlu0 %1670
    %v1672 = vmul.f32 %v1668, %v1659
    %v1673 = vmul.f32 %v1671, %v1659
    %v1674 = vadd.f32 %v1672, 1e-05
    %v1675 = vadd.f32 %v1673, 1e-05
    %v1676 = vrsqrt.pop %v1674
    %v1677 = vrsqrt.pop %v1675
    %v1678 = vmul.f32 %v1662, %v1676
    %v1679 = vmul.f32 %v1663, %v1677
    %v1680 = vlaneseq
    %v1681 = vshrl.u32 %v1680, 7
    %v1682 = vsub.s32 2, %v1681
    %v1683 = vrot.slane %v115, %v1682
    %v1684 = vmul.f32 %v1678, %v1683
    %v1685 = vmul.f32 %v1679, %v1683
    %v1686 = vlaneseq
    %v1687 = vshrl.u32 %v1686, 7
    %v1688 = vsub.s32 3, %v1687
    %v1689 = vrot.slane %v115, %v1688
    %v1690 = vadd.f32 %v1684, %v1689
    %v1691 = vadd.f32 %v1685, %v1689
    %v1692 = vlaneseq
    %v1693 = vshrl.u32 %v1692, 7
    %v1694 = vsub.s32 6, %v1693
    %v1695 = vrot.slane %v115, %v1694
    %v1697 = vsel %vm120, %v1690, 0
    %v1700 = vsel %vm120, %v1691, 0
    %1702 = vmatprep.subr.mxu0 0.0
    %1703 = vmatpush1.msra.mxu0 %v103
    %1704 = vmatprep.subr.mxu0 0.0
    %1705 = vmatpush1.msra.mxu0 %v104
    %1706 = vmatprep.subr.mxu0 0.0
    %1707 = vmatpush1.msra.mxu0 %v105
    %1708 = vmatprep.subr.mxu0 0.0
    %1709 = vmatpush1.msra.mxu0 %v106
    %1710 = vmatprep.subr.mxu0 0.0
    %1711 = vmatpush1.msra.mxu0 0.0
    %1712 = vmatprep.subr.mxu0 0.0
    %1713 = vmatpush1.msra.mxu0 0.0
    %1714 = vmatprep.subr.mxu0 0.0
    %1715 = vmatpush1.msra.mxu0 0.0
    %1716 = vmatprep.subr.mxu0 0.0
    %1717 = vmatpush1.msra.mxu0 0.0
    %1718 = vmatprep.subr.mxu0 0.0
    %1719 = vmatpush1.msra.mxu0 0.0
    %1720 = vmatprep.subr.mxu0 0.0
    %1721 = vmatpush1.msra.mxu0 0.0
    %1722 = vmatprep.subr.mxu0 0.0
    %1723 = vmatpush1.msra.mxu0 0.0
    %1724 = vmatprep.subr.mxu0 0.0
    %1725 = vmatpush1.msra.mxu0 0.0
    %1726 = vmatprep.subr.mxu0 0.0
    %1727 = vmatpush1.msra.mxu0 0.0
    %1728 = vmatprep.subr.mxu0 0.0
    %1729 = vmatpush1.msra.mxu0 0.0
    %1730 = vmatprep.subr.mxu0 0.0
    %1731 = vmatpush1.msra.mxu0 0.0
    %1732 = vmatprep.subr.mxu0 0.0
    %1733 = vmatpush1.msra.mxu0 0.0
    %1734 = vmatprep.subr.mxu0 0.0
    %1735 = vmatpush1.msra.mxu0 0.0
    %1736 = vmatprep.subr.mxu0 0.0
    %1737 = vmatpush1.msra.mxu0 0.0
    %1738 = vmatprep.subr.mxu0 0.0
    %1739 = vmatpush1.msra.mxu0 0.0
    %1740 = vmatprep.subr.mxu0 0.0
    %1741 = vmatpush1.msra.mxu0 0.0
    %1742 = vmatprep.subr.mxu0 0.0
    %1743 = vmatpush1.msra.mxu0 0.0
    %1744 = vmatprep.subr.mxu0 0.0
    %1745 = vmatpush1.msra.mxu0 0.0
    %1746 = vmatprep.subr.mxu0 0.0
    %1747 = vmatpush1.msra.mxu0 0.0
    %1748 = vmatprep.subr.mxu0 0.0
    %1749 = vmatpush1.msra.mxu0 0.0
    %1750 = vmatprep.subr.mxu0 0.0
    %1751 = vmatpush1.msra.mxu0 0.0
    %1752 = vmatprep.subr.mxu0 0.0
    %1753 = vmatpush1.msra.mxu0 0.0
    %1754 = vmatprep.subr.mxu0 0.0
    %1755 = vmatpush1.msra.mxu0 0.0
    %1756 = vmatprep.subr.mxu0 0.0
    %1757 = vmatpush1.msra.mxu0 0.0
    %1758 = vmatprep.subr.mxu0 0.0
    %1759 = vmatpush1.msra.mxu0 0.0
    %1760 = vmatprep.subr.mxu0 0.0
    %1761 = vmatpush1.msra.mxu0 0.0
    %1762 = vmatprep.subr.mxu0 0.0
    %1763 = vmatpush1.msra.mxu0 0.0
    %1764 = vmatprep.subr.mxu0 0.0
    %1765 = vmatpush1.msra.mxu0 0.0
    %1766 = vmatprep.mubr.f32.mxu0 0.0
    %1767 = vmatmul.mubr.f32.gmra.mrb[0].mxu0 %v1697
    %v1768 = vpop.f32.mrb[0].mxu0
    %v1769 = vadd.f32 %v1695, %v1768
    %v1770 = vpop.f32.mrb[0].mxu0
    %1771 = vmatprep.mubr.f32.mxu0 0.0
    %1772 = vmatmul.mubr.f32.gmra.mrb[0].mxu0 %v1700
    %v1773 = vpop.f32.mrb[0].mxu0
    %v1774 = vadd.f32 %v1695, %v1773
    %v1775 = vpop.f32.mrb[0].mxu0
    %1776 = vdwg.mxu0
    %v1777 = vmax.f32 %v1769, 0.0
    %v1778 = vmax.f32 %v1774, 0.0
    %v1779 = vlaneseq
    %v1780 = vshrl.u32 %v1779, 7
    %v1781 = vsub.s32 7, %v1780
    %v1782 = vrot.slane %v115, %v1781
    %vm1783 = vcmask 523264
    %v1785 = vsel %vm1783, %v1777, 0
    %v1788 = vsel %vm1783, %v1778, 0
    %1790 = vmatprep.subr.mxu0 0.0
    %1791 = vmatpush1.msra.mxu0 %v107
    %1792 = vmatprep.subr.mxu0 0.0
    %1793 = vmatpush1.msra.mxu0 %v108
    %1794 = vmatprep.subr.mxu0 0.0
    %1795 = vmatpush1.msra.mxu0 %v109
    %1796 = vmatprep.subr.mxu0 0.0
    %1797 = vmatpush1.msra.mxu0 %v110
    %1798 = vmatprep.subr.mxu0 0.0
    %1799 = vmatpush1.msra.mxu0 %v111
    %1800 = vmatprep.subr.mxu0 0.0
    %1801 = vmatpush1.msra.mxu0 %v112
    %1802 = vmatprep.subr.mxu0 0.0
    %1803 = vmatpush1.msra.mxu0 %v113
    %1804 = vmatprep.subr.mxu0 0.0
    %1805 = vmatpush1.msra.mxu0 %v114
    %1806 = vmatprep.subr.mxu0 0.0
    %1807 = vmatpush1.msra.mxu0 0.0
    %1808 = vmatprep.subr.mxu0 0.0
    %1809 = vmatpush1.msra.mxu0 0.0
    %1810 = vmatprep.subr.mxu0 0.0
    %1811 = vmatpush1.msra.mxu0 0.0
    %1812 = vmatprep.subr.mxu0 0.0
    %1813 = vmatpush1.msra.mxu0 0.0
    %1814 = vmatprep.subr.mxu0 0.0
    %1815 = vmatpush1.msra.mxu0 0.0
    %1816 = vmatprep.subr.mxu0 0.0
    %1817 = vmatpush1.msra.mxu0 0.0
    %1818 = vmatprep.subr.mxu0 0.0
    %1819 = vmatpush1.msra.mxu0 0.0
    %1820 = vmatprep.subr.mxu0 0.0
    %1821 = vmatpush1.msra.mxu0 0.0
    %1822 = vmatprep.subr.mxu0 0.0
    %1823 = vmatpush1.msra.mxu0 0.0
    %1824 = vmatprep.subr.mxu0 0.0
    %1825 = vmatpush1.msra.mxu0 0.0
    %1826 = vmatprep.subr.mxu0 0.0
    %1827 = vmatpush1.msra.mxu0 0.0
    %1828 = vmatprep.subr.mxu0 0.0
    %1829 = vmatpush1.msra.mxu0 0.0
    %1830 = vmatprep.subr.mxu0 0.0
    %1831 = vmatpush1.msra.mxu0 0.0
    %1832 = vmatprep.subr.mxu0 0.0
    %1833 = vmatpush1.msra.mxu0 0.0
    %1834 = vmatprep.subr.mxu0 0.0
    %1835 = vmatpush1.msra.mxu0 0.0
    %1836 = vmatprep.subr.mxu0 0.0
    %1837 = vmatpush1.msra.mxu0 0.0
    %1838 = vmatprep.subr.mxu0 0.0
    %1839 = vmatpush1.msra.mxu0 0.0
    %1840 = vmatprep.subr.mxu0 0.0
    %1841 = vmatpush1.msra.mxu0 0.0
    %1842 = vmatprep.subr.mxu0 0.0
    %1843 = vmatpush1.msra.mxu0 0.0
    %1844 = vmatprep.subr.mxu0 0.0
    %1845 = vmatpush1.msra.mxu0 0.0
    %1846 = vmatprep.subr.mxu0 0.0
    %1847 = vmatpush1.msra.mxu0 0.0
    %1848 = vmatprep.subr.mxu0 0.0
    %1849 = vmatpush1.msra.mxu0 0.0
    %1850 = vmatprep.subr.mxu0 0.0
    %1851 = vmatpush1.msra.mxu0 0.0
    %1852 = vmatprep.subr.mxu0 0.0
    %1853 = vmatpush1.msra.mxu0 0.0
    %1854 = vmatprep.mubr.f32.mxu0 0.0
    %1855 = vmatmul.mubr.f32.gmra.mrb[0].mxu0 %v1785
    %v1856 = vpop.f32.mrb[0].mxu0
    %v1857 = vadd.f32 %v1782, %v1856
    %v1858 = vpop.f32.mrb[0].mxu0
    %1859 = vmatprep.mubr.f32.mxu0 0.0
    %1860 = vmatmul.mubr.f32.gmra.mrb[0].mxu0 %v1788
    %v1861 = vpop.f32.mrb[0].mxu0
    %v1862 = vadd.f32 %v1782, %v1861
    %v1863 = vpop.f32.mrb[0].mxu0
    %1864 = vdwg.mxu0
    %v1865 = vadd.f32 %v1690, %v1857
    %v1866 = vadd.f32 %v1691, %v1862
    %v1867 = vsel %vm120, %v1865, 0.0
    %1868 = vadd.xlane.f32.xlu0 %v1867
    %v1869 = vpop.xlane.xlu0 %1868
    %v1870 = vsel %vm120, %v1866, 0.0
    %1871 = vadd.xlane.f32.xlu0 %v1870
    %v1872 = vpop.xlane.xlu0 %1871
    %v1873 = vmul.f32 %v1869, %v1659
    %v1874 = vmul.f32 %v1872, %v1659
    %v1875 = vsub.f32 %v1865, %v1873
    %v1876 = vsub.f32 %v1866, %v1874
    %v1877 = vmul.f32 %v1875, %v1875
    %v1878 = vmul.f32 %v1876, %v1876
    %v1879 = vsel %vm120, %v1877, 0.0
    %1880 = vadd.xlane.f32.xlu0 %v1879
    %v1881 = vpop.xlane.xlu0 %1880
    %v1882 = vsel %vm120, %v1878, 0.0
    %1883 = vadd.xlane.f32.xlu0 %v1882
    %v1884 = vpop.xlane.xlu0 %1883
    %v1885 = vmul.f32 %v1881, %v1659
    %v1886 = vmul.f32 %v1884, %v1659
    %v1887 = vadd.f32 %v1885, 1e-05
    %v1888 = vadd.f32 %v1886, 1e-05
    %v1889 = vrsqrt.pop %v1887
    %v1890 = vrsqrt.pop %v1888
    %v1891 = vmul.f32 %v1875, %v1889
    %v1892 = vmul.f32 %v1876, %v1890
    %v1893 = vlaneseq
    %v1894 = vshrl.u32 %v1893, 7
    %v1895 = vsub.s32 4, %v1894
    %v1896 = vrot.slane %v115, %v1895
    %v1897 = vmul.f32 %v1891, %v1896
    %v1898 = vmul.f32 %v1892, %v1896
    %v1899 = vlaneseq
    %v1900 = vshrl.u32 %v1899, 7
    %v1901 = vsub.s32 5, %v1900
    %v1902 = vrot.slane %v115, %v1901
    %v1903 = vadd.f32 %v1897, %v1902
    %v1904 = vadd.f32 %v1898, %v1902
    %s1905 = scalar_lea.vmem %s3, 32
    %v1906 = vld [vmem:[%s1905] sm:$0xff]
    %v1907 = vld [vmem:[%s1905 + $0x8] sm:$0xff]
    %v1908 = vld [vmem:[%s1905 + $0x10] sm:$0xff]
    %v1909 = vld [vmem:[%s1905 + $0x18] sm:$0xff]
    %s1910 = scalar_lea.vmem [#allocation3], 32
    %v1911 = vld [vmem:[%s1910] sm:$0xff]
    %v1912 = vld [vmem:[%s1910 + $0x8] sm:$0xff]
    %v1913 = vld [vmem:[%s1910 + $0x10] sm:$0xff]
    %v1914 = vld [vmem:[%s1910 + $0x18] sm:$0xff]
    %s1915 = scalar_lea.vmem [#allocation6], 32
    %v1916 = vld [vmem:[%s1915] sm:$0xff]
    %v1917 = vld [vmem:[%s1915 + $0x8] sm:$0xff]
    %v1918 = vld [vmem:[%s1915 + $0x10] sm:$0xff]
    %v1919 = vld [vmem:[%s1915 + $0x18] sm:$0xff]
    %s1920 = scalar_lea.vmem %s6, 64
    %v1921 = vld [vmem:[%s1920] sm:$0xff]
    %v1922 = vld [vmem:[%s1920 + $0x8] sm:$0xff]
    %v1923 = vld [vmem:[%s1920 + $0x10] sm:$0xff]
    %v1924 = vld [vmem:[%s1920 + $0x18] sm:$0xff]
    %v1925 = vld [vmem:[%s1920 + $0x20] sm:$0xff]
    %v1926 = vld [vmem:[%s1920 + $0x28] sm:$0xff]
    %v1927 = vld [vmem:[%s1920 + $0x30] sm:$0xff]
    %v1928 = vld [vmem:[%s1920 + $0x38] sm:$0xff]
    %s1929 = scalar_lea.vmem [#allocation8], 8
    %v1930 = vld [vmem:[%s1929] sm:$0xff]
    %v1931 = vlaneseq
    %v1932 = vshrl.u32 %v1931, 7
    %v1933 = vsub.s32 0, %v1932
    %v1934 = vrot.slane %v1930, %v1933
    %v1936 = vsel %vm120, %v1903, 0
    %v1939 = vsel %vm120, %v1904, 0
    %1941 = vmatprep.subr.mxu0 0.0
    %1942 = vmatpush1.msra.mxu0 %v1906
    %1943 = vmatprep.subr.mxu0 0.0
    %1944 = vmatpush1.msra.mxu0 %v1907
    %1945 = vmatprep.subr.mxu0 0.0
    %1946 = vmatpush1.msra.mxu0 %v1908
    %1947 = vmatprep.subr.mxu0 0.0
    %1948 = vmatpush1.msra.mxu0 %v1909
    %1949 = vmatprep.subr.mxu0 0.0
    %1950 = vmatpush1.msra.mxu0 0.0
    %1951 = vmatprep.subr.mxu0 0.0
    %1952 = vmatpush1.msra.mxu0 0.0
    %1953 = vmatprep.subr.mxu0 0.0
    %1954 = vmatpush1.msra.mxu0 0.0
    %1955 = vmatprep.subr.mxu0 0.0
    %1956 = vmatpush1.msra.mxu0 0.0
    %1957 = vmatprep.subr.mxu0 0.0
    %1958 = vmatpush1.msra.mxu0 0.0
    %1959 = vmatprep.subr.mxu0 0.0
    %1960 = vmatpush1.msra.mxu0 0.0
    %1961 = vmatprep.subr.mxu0 0.0
    %1962 = vmatpush1.msra.mxu0 0.0
    %1963 = vmatprep.subr.mxu0 0.0
    %1964 = vmatpush1.msra.mxu0 0.0
    %1965 = vmatprep.subr.mxu0 0.0
    %1966 = vmatpush1.msra.mxu0 0.0
    %1967 = vmatprep.subr.mxu0 0.0
    %1968 = vmatpush1.msra.mxu0 0.0
    %1969 = vmatprep.subr.mxu0 0.0
    %1970 = vmatpush1.msra.mxu0 0.0
    %1971 = vmatprep.subr.mxu0 0.0
    %1972 = vmatpush1.msra.mxu0 0.0
    %1973 = vmatprep.subr.mxu0 0.0
    %1974 = vmatpush1.msra.mxu0 0.0
    %1975 = vmatprep.subr.mxu0 0.0
    %1976 = vmatpush1.msra.mxu0 0.0
    %1977 = vmatprep.subr.mxu0 0.0
    %1978 = vmatpush1.msra.mxu0 0.0
    %1979 = vmatprep.subr.mxu0 0.0
    %1980 = vmatpush1.msra.mxu0 0.0
    %1981 = vmatprep.subr.mxu0 0.0
    %1982 = vmatpush1.msra.mxu0 0.0
    %1983 = vmatprep.subr.mxu0 0.0
    %1984 = vmatpush1.msra.mxu0 0.0
    %1985 = vmatprep.subr.mxu0 0.0
    %1986 = vmatpush1.msra.mxu0 0.0
    %1987 = vmatprep.subr.mxu0 0.0
    %1988 = vmatpush1.msra.mxu0 0.0
    %1989 = vmatprep.subr.mxu0 0.0
    %1990 = vmatpush1.msra.mxu0 0.0
    %1991 = vmatprep.subr.mxu0 0.0
    %1992 = vmatpush1.msra.mxu0 0.0
    %1993 = vmatprep.subr.mxu0 0.0
    %1994 = vmatpush1.msra.mxu0 0.0
    %1995 = vmatprep.subr.mxu0 0.0
    %1996 = vmatpush1.msra.mxu0 0.0
    %1997 = vmatprep.subr.mxu0 0.0
    %1998 = vmatpush1.msra.mxu0 0.0
    %1999 = vmatprep.subr.mxu0 0.0
    %2000 = vmatpush1.msra.mxu0 0.0
    %2001 = vmatprep.subr.mxu0 0.0
    %2002 = vmatpush1.msra.mxu0 0.0
    %2003 = vmatprep.subr.mxu0 0.0
    %2004 = vmatpush1.msra.mxu0 0.0
    %2005 = vmatprep.mubr.f32.mxu0 0.0
    %2006 = vmatmul.mubr.f32.gmra.mrb[0].mxu0 %v1936
    %v2007 = vpop.f32.mrb[0].mxu0
    %v2008 = vadd.f32 %v1934, %v2007
    %v2009 = vpop.f32.mrb[0].mxu0
    %2010 = vmatprep.mubr.f32.mxu0 0.0
    %2011 = vmatmul.mubr.f32.gmra.mrb[0].mxu0 %v1939
    %v2012 = vpop.f32.mrb[0].mxu0
    %v2013 = vadd.f32 %v1934, %v2012
    %v2014 = vpop.f32.mrb[0].mxu0
    %2015 = vdwg.mxu0
    %2017 = vrot.lane.b32.xlu0 %v2008, 96
    %v2018 = vpop.permute.xlu0 %2017
    %v2019 = vsel %vm209, %v2008, 0
    %v2021 = vsel %vm209, %v2018, 0
    %2023 = vmatprep.subr.mxu0 0.0
    %2024 = vmatpush1.xpose.msra.mxu0 %v2021
    %2025 = vmatprep.subr.mxu0 0.0
    %2026 = vmatpush1.xpose.msra.mxu0 0.0
    %2027 = vmatprep.subr.mxu0 0.0
    %2028 = vmatpush1.xpose.msra.mxu0 0.0
    %2029 = vmatprep.subr.mxu0 0.0
    %2030 = vmatpush1.xpose.msra.mxu0 0.0
    %2031 = vmatprep.subr.mxu0 0.0
    %2032 = vmatpush1.xpose.msra.mxu0 0.0
    %2033 = vmatprep.subr.mxu0 0.0
    %2034 = vmatpush1.xpose.msra.mxu0 0.0
    %2035 = vmatprep.subr.mxu0 0.0
    %2036 = vmatpush1.xpose.msra.mxu0 0.0
    %2037 = vmatprep.subr.mxu0 0.0
    %2038 = vmatpush1.xpose.msra.mxu0 0.0
    %2039 = vmatprep.subr.mxu0 0.0
    %2040 = vmatpush1.xpose.msra.mxu0 0.0
    %2041 = vmatprep.subr.mxu0 0.0
    %2042 = vmatpush1.xpose.msra.mxu0 0.0
    %2043 = vmatprep.subr.mxu0 0.0
    %2044 = vmatpush1.xpose.msra.mxu0 0.0
    %2045 = vmatprep.subr.mxu0 0.0
    %2046 = vmatpush1.xpose.msra.mxu0 0.0
    %2047 = vmatprep.subr.mxu0 0.0
    %2048 = vmatpush1.xpose.msra.mxu0 0.0
    %2049 = vmatprep.subr.mxu0 0.0
    %2050 = vmatpush1.xpose.msra.mxu0 0.0
    %2051 = vmatprep.subr.mxu0 0.0
    %2052 = vmatpush1.xpose.msra.mxu0 0.0
    %2053 = vmatprep.subr.mxu0 0.0
    %2054 = vmatpush1.xpose.msra.mxu0 0.0
    %2055 = vmatprep.subr.mxu0 0.0
    %2056 = vmatpush1.xpose.msra.mxu0 0.0
    %2057 = vmatprep.subr.mxu0 0.0
    %2058 = vmatpush1.xpose.msra.mxu0 0.0
    %2059 = vmatprep.subr.mxu0 0.0
    %2060 = vmatpush1.xpose.msra.mxu0 0.0
    %2061 = vmatprep.subr.mxu0 0.0
    %2062 = vmatpush1.xpose.msra.mxu0 0.0
    %2063 = vmatprep.subr.mxu0 0.0
    %2064 = vmatpush1.xpose.msra.mxu0 0.0
    %2065 = vmatprep.subr.mxu0 0.0
    %2066 = vmatpush1.xpose.msra.mxu0 0.0
    %2067 = vmatprep.subr.mxu0 0.0
    %2068 = vmatpush1.xpose.msra.mxu0 0.0
    %2069 = vmatprep.subr.mxu0 0.0
    %2070 = vmatpush1.xpose.msra.mxu0 0.0
    %2071 = vmatprep.subr.mxu0 0.0
    %2072 = vmatpush1.xpose.msra.mxu0 0.0
    %2073 = vmatprep.subr.mxu0 0.0
    %2074 = vmatpush1.xpose.msra.mxu0 0.0
    %2075 = vmatprep.subr.mxu0 0.0
    %2076 = vmatpush1.xpose.msra.mxu0 0.0
    %2077 = vmatprep.subr.mxu0 0.0
    %2078 = vmatpush1.xpose.msra.mxu0 0.0
    %2079 = vmatprep.subr.mxu0 0.0
    %2080 = vmatpush1.xpose.msra.mxu0 0.0
    %2081 = vmatprep.subr.mxu0 0.0
    %2082 = vmatpush1.xpose.msra.mxu0 0.0
    %2083 = vmatprep.subr.mxu0 0.0
    %2084 = vmatpush1.xpose.msra.mxu0 0.0
    %2085 = vmatprep.subr.mxu0 0.0
    %2086 = vmatpush1.xpose.msra.mxu0 0.0
    %2087 = vmatprep.mubr.f32.mxu0 0.0
    %2088 = vmatmul.mubr.f32.gmra.mrb[0].mxu0 %v2019
    %v2089 = vpop.f32.mrb[0].mxu0
    %v2090 = vadd.f32 %v205, %v2089
    %v2091 = vpop.f32.mrb[0].mxu0
    %2092 = vdwg.mxu0
    %v2093 = vsel %vm209, %v2090, -inf
    %2094 = vmax.xlane.f32.xlu0 %v2093
    %v2095 = vpop.xlane.xlu0 %2094
    %v2096 = vsub.f32 %v2090, %v2095
    %v2097 = vmul.f32 %v2096, 1.442695
    %v2098 = vpow.pop %v2097
    %v2099 = vsel %vm209, %v2098, 0.0
    %2100 = vadd.xlane.f32.xlu0 %v2099
    %v2101 = vpop.xlane.xlu0 %2100
    %v2102 = vrcp.pop %v2101
    %v2103 = vmul.f32 %v2098, %v2102
    %2104 = vrot.lane.b32.xlu0 %v2008, 64
    %v2105 = vpop.permute.xlu0 %2104
    %v2108 = vsel %vm209, %v2103, 0
    %2110 = vmatprep.subr.mxu0 0.0
    %2111 = vmatpush1.msra.mxu0 %v2105
    %2112 = vmatprep.subr.mxu0 0.0
    %2113 = vmatpush1.msra.mxu0 0.0
    %2114 = vmatprep.subr.mxu0 0.0
    %2115 = vmatpush1.msra.mxu0 0.0
    %2116 = vmatprep.subr.mxu0 0.0
    %2117 = vmatpush1.msra.mxu0 0.0
    %2118 = vmatprep.subr.mxu0 0.0
    %2119 = vmatpush1.msra.mxu0 0.0
    %2120 = vmatprep.subr.mxu0 0.0
    %2121 = vmatpush1.msra.mxu0 0.0
    %2122 = vmatprep.subr.mxu0 0.0
    %2123 = vmatpush1.msra.mxu0 0.0
    %2124 = vmatprep.subr.mxu0 0.0
    %2125 = vmatpush1.msra.mxu0 0.0
    %2126 = vmatprep.subr.mxu0 0.0
    %2127 = vmatpush1.msra.mxu0 0.0
    %2128 = vmatprep.subr.mxu0 0.0
    %2129 = vmatpush1.msra.mxu0 0.0
    %2130 = vmatprep.subr.mxu0 0.0
    %2131 = vmatpush1.msra.mxu0 0.0
    %2132 = vmatprep.subr.mxu0 0.0
    %2133 = vmatpush1.msra.mxu0 0.0
    %2134 = vmatprep.subr.mxu0 0.0
    %2135 = vmatpush1.msra.mxu0 0.0
    %2136 = vmatprep.subr.mxu0 0.0
    %2137 = vmatpush1.msra.mxu0 0.0
    %2138 = vmatprep.subr.mxu0 0.0
    %2139 = vmatpush1.msra.mxu0 0.0
    %2140 = vmatprep.subr.mxu0 0.0
    %2141 = vmatpush1.msra.mxu0 0.0
    %2142 = vmatprep.subr.mxu0 0.0
    %2143 = vmatpush1.msra.mxu0 0.0
    %2144 = vmatprep.subr.mxu0 0.0
    %2145 = vmatpush1.msra.mxu0 0.0
    %2146 = vmatprep.subr.mxu0 0.0
    %2147 = vmatpush1.msra.mxu0 0.0
    %2148 = vmatprep.subr.mxu0 0.0
    %2149 = vmatpush1.msra.mxu0 0.0
    %2150 = vmatprep.subr.mxu0 0.0
    %2151 = vmatpush1.msra.mxu0 0.0
    %2152 = vmatprep.subr.mxu0 0.0
    %2153 = vmatpush1.msra.mxu0 0.0
    %2154 = vmatprep.subr.mxu0 0.0
    %2155 = vmatpush1.msra.mxu0 0.0
    %2156 = vmatprep.subr.mxu0 0.0
    %2157 = vmatpush1.msra.mxu0 0.0
    %2158 = vmatprep.subr.mxu0 0.0
    %2159 = vmatpush1.msra.mxu0 0.0
    %2160 = vmatprep.subr.mxu0 0.0
    %2161 = vmatpush1.msra.mxu0 0.0
    %2162 = vmatprep.subr.mxu0 0.0
    %2163 = vmatpush1.msra.mxu0 0.0
    %2164 = vmatprep.subr.mxu0 0.0
    %2165 = vmatpush1.msra.mxu0 0.0
    %2166 = vmatprep.subr.mxu0 0.0
    %2167 = vmatpush1.msra.mxu0 0.0
    %2168 = vmatprep.subr.mxu0 0.0
    %2169 = vmatpush1.msra.mxu0 0.0
    %2170 = vmatprep.subr.mxu0 0.0
    %2171 = vmatpush1.msra.mxu0 0.0
    %2172 = vmatprep.subr.mxu0 0.0
    %2173 = vmatpush1.msra.mxu0 0.0
    %2174 = vmatprep.mubr.f32.mxu0 0.0
    %2175 = vmatmul.mubr.f32.gmra.mrb[0].mxu0 %v2108
    %v2176 = vpop.f32.mrb[0].mxu0
    %v2177 = vadd.f32 0.0, %v2176
    %v2178 = vpop.f32.mrb[0].mxu0
    %2179 = vdwg.mxu0
    %2180 = vst.msk [vmem:[#allocation2] sm:$0xff] %vm209, %v2177
    %2181 = vrot.lane.b32.xlu0 %v2008, 120
    %v2182 = vpop.permute.xlu0 %2181
    %2183 = vrot.lane.b32.xlu0 %v2008, 88
    %v2184 = vpop.permute.xlu0 %2183
    %v2185 = vsel %vm209, %v2182, 0
    %v2187 = vsel %vm209, %v2184, 0
    %2189 = vmatprep.subr.mxu0 0.0
    %2190 = vmatpush1.xpose.msra.mxu0 %v2187
    %2191 = vmatprep.subr.mxu0 0.0
    %2192 = vmatpush1.xpose.msra.mxu0 0.0
    %2193 = vmatprep.subr.mxu0 0.0
    %2194 = vmatpush1.xpose.msra.mxu0 0.0
    %2195 = vmatprep.subr.mxu0 0.0
    %2196 = vmatpush1.xpose.msra.mxu0 0.0
    %2197 = vmatprep.subr.mxu0 0.0
    %2198 = vmatpush1.xpose.msra.mxu0 0.0
    %2199 = vmatprep.subr.mxu0 0.0
    %2200 = vmatpush1.xpose.msra.mxu0 0.0
    %2201 = vmatprep.subr.mxu0 0.0
    %2202 = vmatpush1.xpose.msra.mxu0 0.0
    %2203 = vmatprep.subr.mxu0 0.0
    %2204 = vmatpush1.xpose.msra.mxu0 0.0
    %2205 = vmatprep.subr.mxu0 0.0
    %2206 = vmatpush1.xpose.msra.mxu0 0.0
    %2207 = vmatprep.subr.mxu0 0.0
    %2208 = vmatpush1.xpose.msra.mxu0 0.0
    %2209 = vmatprep.subr.mxu0 0.0
    %2210 = vmatpush1.xpose.msra.mxu0 0.0
    %2211 = vmatprep.subr.mxu0 0.0
    %2212 = vmatpush1.xpose.msra.mxu0 0.0
    %2213 = vmatprep.subr.mxu0 0.0
    %2214 = vmatpush1.xpose.msra.mxu0 0.0
    %2215 = vmatprep.subr.mxu0 0.0
    %2216 = vmatpush1.xpose.msra.mxu0 0.0
    %2217 = vmatprep.subr.mxu0 0.0
    %2218 = vmatpush1.xpose.msra.mxu0 0.0
    %2219 = vmatprep.subr.mxu0 0.0
    %2220 = vmatpush1.xpose.msra.mxu0 0.0
    %2221 = vmatprep.subr.mxu0 0.0
    %2222 = vmatpush1.xpose.msra.mxu0 0.0
    %2223 = vmatprep.subr.mxu0 0.0
    %2224 = vmatpush1.xpose.msra.mxu0 0.0
    %2225 = vmatprep.subr.mxu0 0.0
    %2226 = vmatpush1.xpose.msra.mxu0 0.0
    %2227 = vmatprep.subr.mxu0 0.0
    %2228 = vmatpush1.xpose.msra.mxu0 0.0
    %2229 = vmatprep.subr.mxu0 0.0
    %2230 = vmatpush1.xpose.msra.mxu0 0.0
    %2231 = vmatprep.subr.mxu0 0.0
    %2232 = vmatpush1.xpose.msra.mxu0 0.0
    %2233 = vmatprep.subr.mxu0 0.0
    %2234 = vmatpush1.xpose.msra.mxu0 0.0
    %2235 = vmatprep.subr.mxu0 0.0
    %2236 = vmatpush1.xpose.msra.mxu0 0.0
    %2237 = vmatprep.subr.mxu0 0.0
    %2238 = vmatpush1.xpose.msra.mxu0 0.0
    %2239 = vmatprep.subr.mxu0 0.0
    %2240 = vmatpush1.xpose.msra.mxu0 0.0
    %2241 = vmatprep.subr.mxu0 0.0
    %2242 = vmatpush1.xpose.msra.mxu0 0.0
    %2243 = vmatprep.subr.mxu0 0.0
    %2244 = vmatpush1.xpose.msra.mxu0 0.0
    %2245 = vmatprep.subr.mxu0 0.0
    %2246 = vmatpush1.xpose.msra.mxu0 0.0
    %2247 = vmatprep.subr.mxu0 0.0
    %2248 = vmatpush1.xpose.msra.mxu0 0.0
    %2249 = vmatprep.subr.mxu0 0.0
    %2250 = vmatpush1.xpose.msra.mxu0 0.0
    %2251 = vmatprep.subr.mxu0 0.0
    %2252 = vmatpush1.xpose.msra.mxu0 0.0
    %2253 = vmatprep.mubr.f32.mxu0 0.0
    %2254 = vmatmul.mubr.f32.gmra.mrb[0].mxu0 %v2185
    %v2255 = vpop.f32.mrb[0].mxu0
    %v2256 = vadd.f32 %v205, %v2255
    %v2257 = vpop.f32.mrb[0].mxu0
    %2258 = vdwg.mxu0
    %v2259 = vsel %vm209, %v2256, -inf
    %2260 = vmax.xlane.f32.xlu0 %v2259
    %v2261 = vpop.xlane.xlu0 %2260
    %v2262 = vsub.f32 %v2256, %v2261
    %v2263 = vmul.f32 %v2262, 1.442695
    %v2264 = vpow.pop %v2263
    %v2265 = vsel %vm209, %v2264, 0.0
    %2266 = vadd.xlane.f32.xlu0 %v2265
    %v2267 = vpop.xlane.xlu0 %2266
    %v2268 = vrcp.pop %v2267
    %v2269 = vmul.f32 %v2264, %v2268
    %2270 = vrot.lane.b32.xlu0 %v2008, 56
    %v2271 = vpop.permute.xlu0 %2270
    %v2274 = vsel %vm209, %v2269, 0
    %2276 = vmatprep.subr.mxu0 0.0
    %2277 = vmatpush1.msra.mxu0 %v2271
    %2278 = vmatprep.subr.mxu0 0.0
    %2279 = vmatpush1.msra.mxu0 0.0
    %2280 = vmatprep.subr.mxu0 0.0
    %2281 = vmatpush1.msra.mxu0 0.0
    %2282 = vmatprep.subr.mxu0 0.0
    %2283 = vmatpush1.msra.mxu0 0.0
    %2284 = vmatprep.subr.mxu0 0.0
    %2285 = vmatpush1.msra.mxu0 0.0
    %2286 = vmatprep.subr.mxu0 0.0
    %2287 = vmatpush1.msra.mxu0 0.0
    %2288 = vmatprep.subr.mxu0 0.0
    %2289 = vmatpush1.msra.mxu0 0.0
    %2290 = vmatprep.subr.mxu0 0.0
    %2291 = vmatpush1.msra.mxu0 0.0
    %2292 = vmatprep.subr.mxu0 0.0
    %2293 = vmatpush1.msra.mxu0 0.0
    %2294 = vmatprep.subr.mxu0 0.0
    %2295 = vmatpush1.msra.mxu0 0.0
    %2296 = vmatprep.subr.mxu0 0.0
    %2297 = vmatpush1.msra.mxu0 0.0
    %2298 = vmatprep.subr.mxu0 0.0
    %2299 = vmatpush1.msra.mxu0 0.0
    %2300 = vmatprep.subr.mxu0 0.0
    %2301 = vmatpush1.msra.mxu0 0.0
    %2302 = vmatprep.subr.mxu0 0.0
    %2303 = vmatpush1.msra.mxu0 0.0
    %2304 = vmatprep.subr.mxu0 0.0
    %2305 = vmatpush1.msra.mxu0 0.0
    %2306 = vmatprep.subr.mxu0 0.0
    %2307 = vmatpush1.msra.mxu0 0.0
    %2308 = vmatprep.subr.mxu0 0.0
    %2309 = vmatpush1.msra.mxu0 0.0
    %2310 = vmatprep.subr.mxu0 0.0
    %2311 = vmatpush1.msra.mxu0 0.0
    %2312 = vmatprep.subr.mxu0 0.0
    %2313 = vmatpush1.msra.mxu0 0.0
    %2314 = vmatprep.subr.mxu0 0.0
    %2315 = vmatpush1.msra.mxu0 0.0
    %2316 = vmatprep.subr.mxu0 0.0
    %2317 = vmatpush1.msra.mxu0 0.0
    %2318 = vmatprep.subr.mxu0 0.0
    %2319 = vmatpush1.msra.mxu0 0.0
    %2320 = vmatprep.subr.mxu0 0.0
    %2321 = vmatpush1.msra.mxu0 0.0
    %2322 = vmatprep.subr.mxu0 0.0
    %2323 = vmatpush1.msra.mxu0 0.0
    %2324 = vmatprep.subr.mxu0 0.0
    %2325 = vmatpush1.msra.mxu0 0.0
    %2326 = vmatprep.subr.mxu0 0.0
    %2327 = vmatpush1.msra.mxu0 0.0
    %2328 = vmatprep.subr.mxu0 0.0
    %2329 = vmatpush1.msra.mxu0 0.0
    %2330 = vmatprep.subr.mxu0 0.0
    %2331 = vmatpush1.msra.mxu0 0.0
    %2332 = vmatprep.subr.mxu0 0.0
    %2333 = vmatpush1.msra.mxu0 0.0
    %2334 = vmatprep.subr.mxu0 0.0
    %2335 = vmatpush1.msra.mxu0 0.0
    %2336 = vmatprep.subr.mxu0 0.0
    %2337 = vmatpush1.msra.mxu0 0.0
    %2338 = vmatprep.subr.mxu0 0.0
    %2339 = vmatpush1.msra.mxu0 0.0
    %2340 = vmatprep.mubr.f32.mxu0 0.0
    %2341 = vmatmul.mubr.f32.gmra.mrb[0].mxu0 %v2274
    %v2342 = vpop.f32.mrb[0].mxu0
    %v2343 = vadd.f32 0.0, %v2342
    %v2344 = vpop.f32.mrb[0].mxu0
    %2345 = vdwg.mxu0
    %2347 = vrot.lane.b32.xlu0 %v2343, 8
    %v2348 = vpop.permute.xlu0 %2347
    %2350 = vst.msk [vmem:[#allocation2] sm:$0xff] %vm541, %v2348
    %2351 = vrot.lane.b32.xlu0 %v2008, 112
    %v2352 = vpop.permute.xlu0 %2351
    %2353 = vrot.lane.b32.xlu0 %v2008, 80
    %v2354 = vpop.permute.xlu0 %2353
    %v2355 = vsel %vm209, %v2352, 0
    %v2357 = vsel %vm209, %v2354, 0
    %2359 = vmatprep.subr.mxu0 0.0
    %2360 = vmatpush1.xpose.msra.mxu0 %v2357
    %2361 = vmatprep.subr.mxu0 0.0
    %2362 = vmatpush1.xpose.msra.mxu0 0.0
    %2363 = vmatprep.subr.mxu0 0.0
    %2364 = vmatpush1.xpose.msra.mxu0 0.0
    %2365 = vmatprep.subr.mxu0 0.0
    %2366 = vmatpush1.xpose.msra.mxu0 0.0
    %2367 = vmatprep.subr.mxu0 0.0
    %2368 = vmatpush1.xpose.msra.mxu0 0.0
    %2369 = vmatprep.subr.mxu0 0.0
    %2370 = vmatpush1.xpose.msra.mxu0 0.0
    %2371 = vmatprep.subr.mxu0 0.0
    %2372 = vmatpush1.xpose.msra.mxu0 0.0
    %2373 = vmatprep.subr.mxu0 0.0
    %2374 = vmatpush1.xpose.msra.mxu0 0.0
    %2375 = vmatprep.subr.mxu0 0.0
    %2376 = vmatpush1.xpose.msra.mxu0 0.0
    %2377 = vmatprep.subr.mxu0 0.0
    %2378 = vmatpush1.xpose.msra.mxu0 0.0
    %2379 = vmatprep.subr.mxu0 0.0
    %2380 = vmatpush1.xpose.msra.mxu0 0.0
    %2381 = vmatprep.subr.mxu0 0.0
    %2382 = vmatpush1.xpose.msra.mxu0 0.0
    %2383 = vmatprep.subr.mxu0 0.0
    %2384 = vmatpush1.xpose.msra.mxu0 0.0
    %2385 = vmatprep.subr.mxu0 0.0
    %2386 = vmatpush1.xpose.msra.mxu0 0.0
    %2387 = vmatprep.subr.mxu0 0.0
    %2388 = vmatpush1.xpose.msra.mxu0 0.0
    %2389 = vmatprep.subr.mxu0 0.0
    %2390 = vmatpush1.xpose.msra.mxu0 0.0
    %2391 = vmatprep.subr.mxu0 0.0
    %2392 = vmatpush1.xpose.msra.mxu0 0.0
    %2393 = vmatprep.subr.mxu0 0.0
    %2394 = vmatpush1.xpose.msra.mxu0 0.0
    %2395 = vmatprep.subr.mxu0 0.0
    %2396 = vmatpush1.xpose.msra.mxu0 0.0
    %2397 = vmatprep.subr.mxu0 0.0
    %2398 = vmatpush1.xpose.msra.mxu0 0.0
    %2399 = vmatprep.subr.mxu0 0.0
    %2400 = vmatpush1.xpose.msra.mxu0 0.0
    %2401 = vmatprep.subr.mxu0 0.0
    %2402 = vmatpush1.xpose.msra.mxu0 0.0
    %2403 = vmatprep.subr.mxu0 0.0
    %2404 = vmatpush1.xpose.msra.mxu0 0.0
    %2405 = vmatprep.subr.mxu0 0.0
    %2406 = vmatpush1.xpose.msra.mxu0 0.0
    %2407 = vmatprep.subr.mxu0 0.0
    %2408 = vmatpush1.xpose.msra.mxu0 0.0
    %2409 = vmatprep.subr.mxu0 0.0
    %2410 = vmatpush1.xpose.msra.mxu0 0.0
    %2411 = vmatprep.subr.mxu0 0.0
    %2412 = vmatpush1.xpose.msra.mxu0 0.0
    %2413 = vmatprep.subr.mxu0 0.0
    %2414 = vmatpush1.xpose.msra.mxu0 0.0
    %2415 = vmatprep.subr.mxu0 0.0
    %2416 = vmatpush1.xpose.msra.mxu0 0.0
    %2417 = vmatprep.subr.mxu0 0.0
    %2418 = vmatpush1.xpose.msra.mxu0 0.0
    %2419 = vmatprep.subr.mxu0 0.0
    %2420 = vmatpush1.xpose.msra.mxu0 0.0
    %2421 = vmatprep.subr.mxu0 0.0
    %2422 = vmatpush1.xpose.msra.mxu0 0.0
    %2423 = vmatprep.mubr.f32.mxu0 0.0
    %2424 = vmatmul.mubr.f32.gmra.mrb[0].mxu0 %v2355
    %v2425 = vpop.f32.mrb[0].mxu0
    %v2426 = vadd.f32 %v205, %v2425
    %v2427 = vpop.f32.mrb[0].mxu0
    %2428 = vdwg.mxu0
    %v2429 = vsel %vm209, %v2426, -inf
    %2430 = vmax.xlane.f32.xlu0 %v2429
    %v2431 = vpop.xlane.xlu0 %2430
    %v2432 = vsub.f32 %v2426, %v2431
    %v2433 = vmul.f32 %v2432, 1.442695
    %v2434 = vpow.pop %v2433
    %v2435 = vsel %vm209, %v2434, 0.0
    %2436 = vadd.xlane.f32.xlu0 %v2435
    %v2437 = vpop.xlane.xlu0 %2436
    %v2438 = vrcp.pop %v2437
    %v2439 = vmul.f32 %v2434, %v2438
    %2440 = vrot.lane.b32.xlu0 %v2008, 48
    %v2441 = vpop.permute.xlu0 %2440
    %v2444 = vsel %vm209, %v2439, 0
    %2446 = vmatprep.subr.mxu0 0.0
    %2447 = vmatpush1.msra.mxu0 %v2441
    %2448 = vmatprep.subr.mxu0 0.0
    %2449 = vmatpush1.msra.mxu0 0.0
    %2450 = vmatprep.subr.mxu0 0.0
    %2451 = vmatpush1.msra.mxu0 0.0
    %2452 = vmatprep.subr.mxu0 0.0
    %2453 = vmatpush1.msra.mxu0 0.0
    %2454 = vmatprep.subr.mxu0 0.0
    %2455 = vmatpush1.msra.mxu0 0.0
    %2456 = vmatprep.subr.mxu0 0.0
    %2457 = vmatpush1.msra.mxu0 0.0
    %2458 = vmatprep.subr.mxu0 0.0
    %2459 = vmatpush1.msra.mxu0 0.0
    %2460 = vmatprep.subr.mxu0 0.0
    %2461 = vmatpush1.msra.mxu0 0.0
    %2462 = vmatprep.subr.mxu0 0.0
    %2463 = vmatpush1.msra.mxu0 0.0
    %2464 = vmatprep.subr.mxu0 0.0
    %2465 = vmatpush1.msra.mxu0 0.0
    %2466 = vmatprep.subr.mxu0 0.0
    %2467 = vmatpush1.msra.mxu0 0.0
    %2468 = vmatprep.subr.mxu0 0.0
    %2469 = vmatpush1.msra.mxu0 0.0
    %2470 = vmatprep.subr.mxu0 0.0
    %2471 = vmatpush1.msra.mxu0 0.0
    %2472 = vmatprep.subr.mxu0 0.0
    %2473 = vmatpush1.msra.mxu0 0.0
    %2474 = vmatprep.subr.mxu0 0.0
    %2475 = vmatpush1.msra.mxu0 0.0
    %2476 = vmatprep.subr.mxu0 0.0
    %2477 = vmatpush1.msra.mxu0 0.0
    %2478 = vmatprep.subr.mxu0 0.0
    %2479 = vmatpush1.msra.mxu0 0.0
    %2480 = vmatprep.subr.mxu0 0.0
    %2481 = vmatpush1.msra.mxu0 0.0
    %2482 = vmatprep.subr.mxu0 0.0
    %2483 = vmatpush1.msra.mxu0 0.0
    %2484 = vmatprep.subr.mxu0 0.0
    %2485 = vmatpush1.msra.mxu0 0.0
    %2486 = vmatprep.subr.mxu0 0.0
    %2487 = vmatpush1.msra.mxu0 0.0
    %2488 = vmatprep.subr.mxu0 0.0
    %2489 = vmatpush1.msra.mxu0 0.0
    %2490 = vmatprep.subr.mxu0 0.0
    %2491 = vmatpush1.msra.mxu0 0.0
    %2492 = vmatprep.subr.mxu0 0.0
    %2493 = vmatpush1.msra.mxu0 0.0
    %2494 = vmatprep.subr.mxu0 0.0
    %2495 = vmatpush1.msra.mxu0 0.0
    %2496 = vmatprep.subr.mxu0 0.0
    %2497 = vmatpush1.msra.mxu0 0.0
    %2498 = vmatprep.subr.mxu0 0.0
    %2499 = vmatpush1.msra.mxu0 0.0
    %2500 = vmatprep.subr.mxu0 0.0
    %2501 = vmatpush1.msra.mxu0 0.0
    %2502 = vmatprep.subr.mxu0 0.0
    %2503 = vmatpush1.msra.mxu0 0.0
    %2504 = vmatprep.subr.mxu0 0.0
    %2505 = vmatpush1.msra.mxu0 0.0
    %2506 = vmatprep.subr.mxu0 0.0
    %2507 = vmatpush1.msra.mxu0 0.0
    %2508 = vmatprep.subr.mxu0 0.0
    %2509 = vmatpush1.msra.mxu0 0.0
    %2510 = vmatprep.mubr.f32.mxu0 0.0
    %2511 = vmatmul.mubr.f32.gmra.mrb[0].mxu0 %v2444
    %v2512 = vpop.f32.mrb[0].mxu0
    %v2513 = vadd.f32 0.0, %v2512
    %v2514 = vpop.f32.mrb[0].mxu0
    %2515 = vdwg.mxu0
    %2517 = vrot.lane.b32.xlu0 %v2513, 16
    %v2518 = vpop.permute.xlu0 %2517
    %2520 = vst.msk [vmem:[#allocation2] sm:$0xff] %vm712, %v2518
    %2521 = vrot.lane.b32.xlu0 %v2008, 104
    %v2522 = vpop.permute.xlu0 %2521
    %2523 = vrot.lane.b32.xlu0 %v2008, 72
    %v2524 = vpop.permute.xlu0 %2523
    %v2525 = vsel %vm209, %v2522, 0
    %v2527 = vsel %vm209, %v2524, 0
    %2529 = vmatprep.subr.mxu0 0.0
    %2530 = vmatpush1.xpose.msra.mxu0 %v2527
    %2531 = vmatprep.subr.mxu0 0.0
    %2532 = vmatpush1.xpose.msra.mxu0 0.0
    %2533 = vmatprep.subr.mxu0 0.0
    %2534 = vmatpush1.xpose.msra.mxu0 0.0
    %2535 = vmatprep.subr.mxu0 0.0
    %2536 = vmatpush1.xpose.msra.mxu0 0.0
    %2537 = vmatprep.subr.mxu0 0.0
    %2538 = vmatpush1.xpose.msra.mxu0 0.0
    %2539 = vmatprep.subr.mxu0 0.0
    %2540 = vmatpush1.xpose.msra.mxu0 0.0
    %2541 = vmatprep.subr.mxu0 0.0
    %2542 = vmatpush1.xpose.msra.mxu0 0.0
    %2543 = vmatprep.subr.mxu0 0.0
    %2544 = vmatpush1.xpose.msra.mxu0 0.0
    %2545 = vmatprep.subr.mxu0 0.0
    %2546 = vmatpush1.xpose.msra.mxu0 0.0
    %2547 = vmatprep.subr.mxu0 0.0
    %2548 = vmatpush1.xpose.msra.mxu0 0.0
    %2549 = vmatprep.subr.mxu0 0.0
    %2550 = vmatpush1.xpose.msra.mxu0 0.0
    %2551 = vmatprep.subr.mxu0 0.0
    %2552 = vmatpush1.xpose.msra.mxu0 0.0
    %2553 = vmatprep.subr.mxu0 0.0
    %2554 = vmatpush1.xpose.msra.mxu0 0.0
    %2555 = vmatprep.subr.mxu0 0.0
    %2556 = vmatpush1.xpose.msra.mxu0 0.0
    %2557 = vmatprep.subr.mxu0 0.0
    %2558 = vmatpush1.xpose.msra.mxu0 0.0
    %2559 = vmatprep.subr.mxu0 0.0
    %2560 = vmatpush1.xpose.msra.mxu0 0.0
    %2561 = vmatprep.subr.mxu0 0.0
    %2562 = vmatpush1.xpose.msra.mxu0 0.0
    %2563 = vmatprep.subr.mxu0 0.0
    %2564 = vmatpush1.xpose.msra.mxu0 0.0
    %2565 = vmatprep.subr.mxu0 0.0
    %2566 = vmatpush1.xpose.msra.mxu0 0.0
    %2567 = vmatprep.subr.mxu0 0.0
    %2568 = vmatpush1.xpose.msra.mxu0 0.0
    %2569 = vmatprep.subr.mxu0 0.0
    %2570 = vmatpush1.xpose.msra.mxu0 0.0
    %2571 = vmatprep.subr.mxu0 0.0
    %2572 = vmatpush1.xpose.msra.mxu0 0.0
    %2573 = vmatprep.subr.mxu0 0.0
    %2574 = vmatpush1.xpose.msra.mxu0 0.0
    %2575 = vmatprep.subr.mxu0 0.0
    %2576 = vmatpush1.xpose.msra.mxu0 0.0
    %2577 = vmatprep.subr.mxu0 0.0
    %2578 = vmatpush1.xpose.msra.mxu0 0.0
    %2579 = vmatprep.subr.mxu0 0.0
    %2580 = vmatpush1.xpose.msra.mxu0 0.0
    %2581 = vmatprep.subr.mxu0 0.0
    %2582 = vmatpush1.xpose.msra.mxu0 0.0
    %2583 = vmatprep.subr.mxu0 0.0
    %2584 = vmatpush1.xpose.msra.mxu0 0.0
    %2585 = vmatprep.subr.mxu0 0.0
    %2586 = vmatpush1.xpose.msra.mxu0 0.0
    %2587 = vmatprep.subr.mxu0 0.0
    %2588 = vmatpush1.xpose.msra.mxu0 0.0
    %2589 = vmatprep.subr.mxu0 0.0
    %2590 = vmatpush1.xpose.msra.mxu0 0.0
    %2591 = vmatprep.subr.mxu0 0.0
    %2592 = vmatpush1.xpose.msra.mxu0 0.0
    %2593 = vmatprep.mubr.f32.mxu0 0.0
    %2594 = vmatmul.mubr.f32.gmra.mrb[0].mxu0 %v2525
    %v2595 = vpop.f32.mrb[0].mxu0
    %v2596 = vadd.f32 %v205, %v2595
    %v2597 = vpop.f32.mrb[0].mxu0
    %2598 = vdwg.mxu0
    %v2599 = vsel %vm209, %v2596, -inf
    %2600 = vmax.xlane.f32.xlu0 %v2599
    %v2601 = vpop.xlane.xlu0 %2600
    %v2602 = vsub.f32 %v2596, %v2601
    %v2603 = vmul.f32 %v2602, 1.442695
    %v2604 = vpow.pop %v2603
    %v2605 = vsel %vm209, %v2604, 0.0
    %2606 = vadd.xlane.f32.xlu0 %v2605
    %v2607 = vpop.xlane.xlu0 %2606
    %v2608 = vrcp.pop %v2607
    %v2609 = vmul.f32 %v2604, %v2608
    %2610 = vrot.lane.b32.xlu0 %v2008, 40
    %v2611 = vpop.permute.xlu0 %2610
    %v2614 = vsel %vm209, %v2609, 0
    %2616 = vmatprep.subr.mxu0 0.0
    %2617 = vmatpush1.msra.mxu0 %v2611
    %2618 = vmatprep.subr.mxu0 0.0
    %2619 = vmatpush1.msra.mxu0 0.0
    %2620 = vmatprep.subr.mxu0 0.0
    %2621 = vmatpush1.msra.mxu0 0.0
    %2622 = vmatprep.subr.mxu0 0.0
    %2623 = vmatpush1.msra.mxu0 0.0
    %2624 = vmatprep.subr.mxu0 0.0
    %2625 = vmatpush1.msra.mxu0 0.0
    %2626 = vmatprep.subr.mxu0 0.0
    %2627 = vmatpush1.msra.mxu0 0.0
    %2628 = vmatprep.subr.mxu0 0.0
    %2629 = vmatpush1.msra.mxu0 0.0
    %2630 = vmatprep.subr.mxu0 0.0
    %2631 = vmatpush1.msra.mxu0 0.0
    %2632 = vmatprep.subr.mxu0 0.0
    %2633 = vmatpush1.msra.mxu0 0.0
    %2634 = vmatprep.subr.mxu0 0.0
    %2635 = vmatpush1.msra.mxu0 0.0
    %2636 = vmatprep.subr.mxu0 0.0
    %2637 = vmatpush1.msra.mxu0 0.0
    %2638 = vmatprep.subr.mxu0 0.0
    %2639 = vmatpush1.msra.mxu0 0.0
    %2640 = vmatprep.subr.mxu0 0.0
    %2641 = vmatpush1.msra.mxu0 0.0
    %2642 = vmatprep.subr.mxu0 0.0
    %2643 = vmatpush1.msra.mxu0 0.0
    %2644 = vmatprep.subr.mxu0 0.0
    %2645 = vmatpush1.msra.mxu0 0.0
    %2646 = vmatprep.subr.mxu0 0.0
    %2647 = vmatpush1.msra.mxu0 0.0
    %2648 = vmatprep.subr.mxu0 0.0
    %2649 = vmatpush1.msra.mxu0 0.0
    %2650 = vmatprep.subr.mxu0 0.0
    %2651 = vmatpush1.msra.mxu0 0.0
    %2652 = vmatprep.subr.mxu0 0.0
    %2653 = vmatpush1.msra.mxu0 0.0
    %2654 = vmatprep.subr.mxu0 0.0
    %2655 = vmatpush1.msra.mxu0 0.0
    %2656 = vmatprep.subr.mxu0 0.0
    %2657 = vmatpush1.msra.mxu0 0.0
    %2658 = vmatprep.subr.mxu0 0.0
    %2659 = vmatpush1.msra.mxu0 0.0
    %2660 = vmatprep.subr.mxu0 0.0
    %2661 = vmatpush1.msra.mxu0 0.0
    %2662 = vmatprep.subr.mxu0 0.0
    %2663 = vmatpush1.msra.mxu0 0.0
    %2664 = vmatprep.subr.mxu0 0.0
    %2665 = vmatpush1.msra.mxu0 0.0
    %2666 = vmatprep.subr.mxu0 0.0
    %2667 = vmatpush1.msra.mxu0 0.0
    %2668 = vmatprep.subr.mxu0 0.0
    %2669 = vmatpush1.msra.mxu0 0.0
    %2670 = vmatprep.subr.mxu0 0.0
    %2671 = vmatpush1.msra.mxu0 0.0
    %2672 = vmatprep.subr.mxu0 0.0
    %2673 = vmatpush1.msra.mxu0 0.0
    %2674 = vmatprep.subr.mxu0 0.0
    %2675 = vmatpush1.msra.mxu0 0.0
    %2676 = vmatprep.subr.mxu0 0.0
    %2677 = vmatpush1.msra.mxu0 0.0
    %2678 = vmatprep.subr.mxu0 0.0
    %2679 = vmatpush1.msra.mxu0 0.0
    %2680 = vmatprep.mubr.f32.mxu0 0.0
    %2681 = vmatmul.mubr.f32.gmra.mrb[0].mxu0 %v2614
    %v2682 = vpop.f32.mrb[0].mxu0
    %v2683 = vadd.f32 0.0, %v2682
    %v2684 = vpop.f32.mrb[0].mxu0
    %2685 = vdwg.mxu0
    %2687 = vrot.lane.b32.xlu0 %v2683, 24
    %v2688 = vpop.permute.xlu0 %2687
    %2690 = vst.msk [vmem:[#allocation2] sm:$0xff] %vm883, %v2688
    %2692 = vrot.lane.b32.xlu0 %v2013, 96
    %v2693 = vpop.permute.xlu0 %2692
    %v2694 = vsel %vm209, %v2013, 0
    %v2696 = vsel %vm209, %v2693, 0
    %2698 = vmatprep.subr.mxu0 0.0
    %2699 = vmatpush1.xpose.msra.mxu0 %v2696
    %2700 = vmatprep.subr.mxu0 0.0
    %2701 = vmatpush1.xpose.msra.mxu0 0.0
    %2702 = vmatprep.subr.mxu0 0.0
    %2703 = vmatpush1.xpose.msra.mxu0 0.0
    %2704 = vmatprep.subr.mxu0 0.0
    %2705 = vmatpush1.xpose.msra.mxu0 0.0
    %2706 = vmatprep.subr.mxu0 0.0
    %2707 = vmatpush1.xpose.msra.mxu0 0.0
    %2708 = vmatprep.subr.mxu0 0.0
    %2709 = vmatpush1.xpose.msra.mxu0 0.0
    %2710 = vmatprep.subr.mxu0 0.0
    %2711 = vmatpush1.xpose.msra.mxu0 0.0
    %2712 = vmatprep.subr.mxu0 0.0
    %2713 = vmatpush1.xpose.msra.mxu0 0.0
    %2714 = vmatprep.subr.mxu0 0.0
    %2715 = vmatpush1.xpose.msra.mxu0 0.0
    %2716 = vmatprep.subr.mxu0 0.0
    %2717 = vmatpush1.xpose.msra.mxu0 0.0
    %2718 = vmatprep.subr.mxu0 0.0
    %2719 = vmatpush1.xpose.msra.mxu0 0.0
    %2720 = vmatprep.subr.mxu0 0.0
    %2721 = vmatpush1.xpose.msra.mxu0 0.0
    %2722 = vmatprep.subr.mxu0 0.0
    %2723 = vmatpush1.xpose.msra.mxu0 0.0
    %2724 = vmatprep.subr.mxu0 0.0
    %2725 = vmatpush1.xpose.msra.mxu0 0.0
    %2726 = vmatprep.subr.mxu0 0.0
    %2727 = vmatpush1.xpose.msra.mxu0 0.0
    %2728 = vmatprep.subr.mxu0 0.0
    %2729 = vmatpush1.xpose.msra.mxu0 0.0
    %2730 = vmatprep.subr.mxu0 0.0
    %2731 = vmatpush1.xpose.msra.mxu0 0.0
    %2732 = vmatprep.subr.mxu0 0.0
    %2733 = vmatpush1.xpose.msra.mxu0 0.0
    %2734 = vmatprep.subr.mxu0 0.0
    %2735 = vmatpush1.xpose.msra.mxu0 0.0
    %2736 = vmatprep.subr.mxu0 0.0
    %2737 = vmatpush1.xpose.msra.mxu0 0.0
    %2738 = vmatprep.subr.mxu0 0.0
    %2739 = vmatpush1.xpose.msra.mxu0 0.0
    %2740 = vmatprep.subr.mxu0 0.0
    %2741 = vmatpush1.xpose.msra.mxu0 0.0
    %2742 = vmatprep.subr.mxu0 0.0
    %2743 = vmatpush1.xpose.msra.mxu0 0.0
    %2744 = vmatprep.subr.mxu0 0.0
    %2745 = vmatpush1.xpose.msra.mxu0 0.0
    %2746 = vmatprep.subr.mxu0 0.0
    %2747 = vmatpush1.xpose.msra.mxu0 0.0
    %2748 = vmatprep.subr.mxu0 0.0
    %2749 = vmatpush1.xpose.msra.mxu0 0.0
    %2750 = vmatprep.subr.mxu0 0.0
    %2751 = vmatpush1.xpose.msra.mxu0 0.0
    %2752 = vmatprep.subr.mxu0 0.0
    %2753 = vmatpush1.xpose.msra.mxu0 0.0
    %2754 = vmatprep.subr.mxu0 0.0
    %2755 = vmatpush1.xpose.msra.mxu0 0.0
    %2756 = vmatprep.subr.mxu0 0.0
    %2757 = vmatpush1.xpose.msra.mxu0 0.0
    %2758 = vmatprep.subr.mxu0 0.0
    %2759 = vmatpush1.xpose.msra.mxu0 0.0
    %2760 = vmatprep.subr.mxu0 0.0
    %2761 = vmatpush1.xpose.msra.mxu0 0.0
    %2762 = vmatprep.mubr.f32.mxu0 0.0
    %2763 = vmatmul.mubr.f32.gmra.mrb[0].mxu0 %v2694
    %v2764 = vpop.f32.mrb[0].mxu0
    %v2765 = vadd.f32 %v888, %v2764
    %v2766 = vpop.f32.mrb[0].mxu0
    %2767 = vdwg.mxu0
    %v2768 = vsel %vm209, %v2765, -inf
    %2769 = vmax.xlane.f32.xlu0 %v2768
    %v2770 = vpop.xlane.xlu0 %2769
    %v2771 = vsub.f32 %v2765, %v2770
    %v2772 = vmul.f32 %v2771, 1.442695
    %v2773 = vpow.pop %v2772
    %v2774 = vsel %vm209, %v2773, 0.0
    %2775 = vadd.xlane.f32.xlu0 %v2774
    %v2776 = vpop.xlane.xlu0 %2775
    %v2777 = vrcp.pop %v2776
    %v2778 = vmul.f32 %v2773, %v2777
    %2779 = vrot.lane.b32.xlu0 %v2013, 64
    %v2780 = vpop.permute.xlu0 %2779
    %v2783 = vsel %vm209, %v2778, 0
    %2785 = vmatprep.subr.mxu0 0.0
    %2786 = vmatpush1.msra.mxu0 %v2780
    %2787 = vmatprep.subr.mxu0 0.0
    %2788 = vmatpush1.msra.mxu0 0.0
    %2789 = vmatprep.subr.mxu0 0.0
    %2790 = vmatpush1.msra.mxu0 0.0
    %2791 = vmatprep.subr.mxu0 0.0
    %2792 = vmatpush1.msra.mxu0 0.0
    %2793 = vmatprep.subr.mxu0 0.0
    %2794 = vmatpush1.msra.mxu0 0.0
    %2795 = vmatprep.subr.mxu0 0.0
    %2796 = vmatpush1.msra.mxu0 0.0
    %2797 = vmatprep.subr.mxu0 0.0
    %2798 = vmatpush1.msra.mxu0 0.0
    %2799 = vmatprep.subr.mxu0 0.0
    %2800 = vmatpush1.msra.mxu0 0.0
    %2801 = vmatprep.subr.mxu0 0.0
    %2802 = vmatpush1.msra.mxu0 0.0
    %2803 = vmatprep.subr.mxu0 0.0
    %2804 = vmatpush1.msra.mxu0 0.0
    %2805 = vmatprep.subr.mxu0 0.0
    %2806 = vmatpush1.msra.mxu0 0.0
    %2807 = vmatprep.subr.mxu0 0.0
    %2808 = vmatpush1.msra.mxu0 0.0
    %2809 = vmatprep.subr.mxu0 0.0
    %2810 = vmatpush1.msra.mxu0 0.0
    %2811 = vmatprep.subr.mxu0 0.0
    %2812 = vmatpush1.msra.mxu0 0.0
    %2813 = vmatprep.subr.mxu0 0.0
    %2814 = vmatpush1.msra.mxu0 0.0
    %2815 = vmatprep.subr.mxu0 0.0
    %2816 = vmatpush1.msra.mxu0 0.0
    %2817 = vmatprep.subr.mxu0 0.0
    %2818 = vmatpush1.msra.mxu0 0.0
    %2819 = vmatprep.subr.mxu0 0.0
    %2820 = vmatpush1.msra.mxu0 0.0
    %2821 = vmatprep.subr.mxu0 0.0
    %2822 = vmatpush1.msra.mxu0 0.0
    %2823 = vmatprep.subr.mxu0 0.0
    %2824 = vmatpush1.msra.mxu0 0.0
    %2825 = vmatprep.subr.mxu0 0.0
    %2826 = vmatpush1.msra.mxu0 0.0
    %2827 = vmatprep.subr.mxu0 0.0
    %2828 = vmatpush1.msra.mxu0 0.0
    %2829 = vmatprep.subr.mxu0 0.0
    %2830 = vmatpush1.msra.mxu0 0.0
    %2831 = vmatprep.subr.mxu0 0.0
    %2832 = vmatpush1.msra.mxu0 0.0
    %2833 = vmatprep.subr.mxu0 0.0
    %2834 = vmatpush1.msra.mxu0 0.0
    %2835 = vmatprep.subr.mxu0 0.0
    %2836 = vmatpush1.msra.mxu0 0.0
    %2837 = vmatprep.subr.mxu0 0.0
    %2838 = vmatpush1.msra.mxu0 0.0
    %2839 = vmatprep.subr.mxu0 0.0
    %2840 = vmatpush1.msra.mxu0 0.0
    %2841 = vmatprep.subr.mxu0 0.0
    %2842 = vmatpush1.msra.mxu0 0.0
    %2843 = vmatprep.subr.mxu0 0.0
    %2844 = vmatpush1.msra.mxu0 0.0
    %2845 = vmatprep.subr.mxu0 0.0
    %2846 = vmatpush1.msra.mxu0 0.0
    %2847 = vmatprep.subr.mxu0 0.0
    %2848 = vmatpush1.msra.mxu0 0.0
    %2849 = vmatprep.mubr.f32.mxu0 0.0
    %2850 = vmatmul.mubr.f32.gmra.mrb[0].mxu0 %v2783
    %v2851 = vpop.f32.mrb[0].mxu0
    %v2852 = vadd.f32 0.0, %v2851
    %v2853 = vpop.f32.mrb[0].mxu0
    %2854 = vdwg.mxu0
    %2855 = vst.msk [vmem:[#allocation2 + $0x8] sm:$0xff] %vm209, %v2852
    %2856 = vrot.lane.b32.xlu0 %v2013, 120
    %v2857 = vpop.permute.xlu0 %2856
    %2858 = vrot.lane.b32.xlu0 %v2013, 88
    %v2859 = vpop.permute.xlu0 %2858
    %v2860 = vsel %vm209, %v2857, 0
    %v2862 = vsel %vm209, %v2859, 0
    %2864 = vmatprep.subr.mxu0 0.0
    %2865 = vmatpush1.xpose.msra.mxu0 %v2862
    %2866 = vmatprep.subr.mxu0 0.0
    %2867 = vmatpush1.xpose.msra.mxu0 0.0
    %2868 = vmatprep.subr.mxu0 0.0
    %2869 = vmatpush1.xpose.msra.mxu0 0.0
    %2870 = vmatprep.subr.mxu0 0.0
    %2871 = vmatpush1.xpose.msra.mxu0 0.0
    %2872 = vmatprep.subr.mxu0 0.0
    %2873 = vmatpush1.xpose.msra.mxu0 0.0
    %2874 = vmatprep.subr.mxu0 0.0
    %2875 = vmatpush1.xpose.msra.mxu0 0.0
    %2876 = vmatprep.subr.mxu0 0.0
    %2877 = vmatpush1.xpose.msra.mxu0 0.0
    %2878 = vmatprep.subr.mxu0 0.0
    %2879 = vmatpush1.xpose.msra.mxu0 0.0
    %2880 = vmatprep.subr.mxu0 0.0
    %2881 = vmatpush1.xpose.msra.mxu0 0.0
    %2882 = vmatprep.subr.mxu0 0.0
    %2883 = vmatpush1.xpose.msra.mxu0 0.0
    %2884 = vmatprep.subr.mxu0 0.0
    %2885 = vmatpush1.xpose.msra.mxu0 0.0
    %2886 = vmatprep.subr.mxu0 0.0
    %2887 = vmatpush1.xpose.msra.mxu0 0.0
    %2888 = vmatprep.subr.mxu0 0.0
    %2889 = vmatpush1.xpose.msra.mxu0 0.0
    %2890 = vmatprep.subr.mxu0 0.0
    %2891 = vmatpush1.xpose.msra.mxu0 0.0
    %2892 = vmatprep.subr.mxu0 0.0
    %2893 = vmatpush1.xpose.msra.mxu0 0.0
    %2894 = vmatprep.subr.mxu0 0.0
    %2895 = vmatpush1.xpose.msra.mxu0 0.0
    %2896 = vmatprep.subr.mxu0 0.0
    %2897 = vmatpush1.xpose.msra.mxu0 0.0
    %2898 = vmatprep.subr.mxu0 0.0
    %2899 = vmatpush1.xpose.msra.mxu0 0.0
    %2900 = vmatprep.subr.mxu0 0.0
    %2901 = vmatpush1.xpose.msra.mxu0 0.0
    %2902 = vmatprep.subr.mxu0 0.0
    %2903 = vmatpush1.xpose.msra.mxu0 0.0
    %2904 = vmatprep.subr.mxu0 0.0
    %2905 = vmatpush1.xpose.msra.mxu0 0.0
    %2906 = vmatprep.subr.mxu0 0.0
    %2907 = vmatpush1.xpose.msra.mxu0 0.0
    %2908 = vmatprep.subr.mxu0 0.0
    %2909 = vmatpush1.xpose.msra.mxu0 0.0
    %2910 = vmatprep.subr.mxu0 0.0
    %2911 = vmatpush1.xpose.msra.mxu0 0.0
    %2912 = vmatprep.subr.mxu0 0.0
    %2913 = vmatpush1.xpose.msra.mxu0 0.0
    %2914 = vmatprep.subr.mxu0 0.0
    %2915 = vmatpush1.xpose.msra.mxu0 0.0
    %2916 = vmatprep.subr.mxu0 0.0
    %2917 = vmatpush1.xpose.msra.mxu0 0.0
    %2918 = vmatprep.subr.mxu0 0.0
    %2919 = vmatpush1.xpose.msra.mxu0 0.0
    %2920 = vmatprep.subr.mxu0 0.0
    %2921 = vmatpush1.xpose.msra.mxu0 0.0
    %2922 = vmatprep.subr.mxu0 0.0
    %2923 = vmatpush1.xpose.msra.mxu0 0.0
    %2924 = vmatprep.subr.mxu0 0.0
    %2925 = vmatpush1.xpose.msra.mxu0 0.0
    %2926 = vmatprep.subr.mxu0 0.0
    %2927 = vmatpush1.xpose.msra.mxu0 0.0
    %2928 = vmatprep.mubr.f32.mxu0 0.0
    %2929 = vmatmul.mubr.f32.gmra.mrb[0].mxu0 %v2860
    %v2930 = vpop.f32.mrb[0].mxu0
    %v2931 = vadd.f32 %v888, %v2930
    %v2932 = vpop.f32.mrb[0].mxu0
    %2933 = vdwg.mxu0
    %v2934 = vsel %vm209, %v2931, -inf
    %2935 = vmax.xlane.f32.xlu0 %v2934
    %v2936 = vpop.xlane.xlu0 %2935
    %v2937 = vsub.f32 %v2931, %v2936
    %v2938 = vmul.f32 %v2937, 1.442695
    %v2939 = vpow.pop %v2938
    %v2940 = vsel %vm209, %v2939, 0.0
    %2941 = vadd.xlane.f32.xlu0 %v2940
    %v2942 = vpop.xlane.xlu0 %2941
    %v2943 = vrcp.pop %v2942
    %v2944 = vmul.f32 %v2939, %v2943
    %2945 = vrot.lane.b32.xlu0 %v2013, 56
    %v2946 = vpop.permute.xlu0 %2945
    %v2949 = vsel %vm209, %v2944, 0
    %2951 = vmatprep.subr.mxu0 0.0
    %2952 = vmatpush1.msra.mxu0 %v2946
    %2953 = vmatprep.subr.mxu0 0.0
    %2954 = vmatpush1.msra.mxu0 0.0
    %2955 = vmatprep.subr.mxu0 0.0
    %2956 = vmatpush1.msra.mxu0 0.0
    %2957 = vmatprep.subr.mxu0 0.0
    %2958 = vmatpush1.msra.mxu0 0.0
    %2959 = vmatprep.subr.mxu0 0.0
    %2960 = vmatpush1.msra.mxu0 0.0
    %2961 = vmatprep.subr.mxu0 0.0
    %2962 = vmatpush1.msra.mxu0 0.0
    %2963 = vmatprep.subr.mxu0 0.0
    %2964 = vmatpush1.msra.mxu0 0.0
    %2965 = vmatprep.subr.mxu0 0.0
    %2966 = vmatpush1.msra.mxu0 0.0
    %2967 = vmatprep.subr.mxu0 0.0
    %2968 = vmatpush1.msra.mxu0 0.0
    %2969 = vmatprep.subr.mxu0 0.0
    %2970 = vmatpush1.msra.mxu0 0.0
    %2971 = vmatprep.subr.mxu0 0.0
    %2972 = vmatpush1.msra.mxu0 0.0
    %2973 = vmatprep.subr.mxu0 0.0
    %2974 = vmatpush1.msra.mxu0 0.0
    %2975 = vmatprep.subr.mxu0 0.0
    %2976 = vmatpush1.msra.mxu0 0.0
    %2977 = vmatprep.subr.mxu0 0.0
    %2978 = vmatpush1.msra.mxu0 0.0
    %2979 = vmatprep.subr.mxu0 0.0
    %2980 = vmatpush1.msra.mxu0 0.0
    %2981 = vmatprep.subr.mxu0 0.0
    %2982 = vmatpush1.msra.mxu0 0.0
    %2983 = vmatprep.subr.mxu0 0.0
    %2984 = vmatpush1.msra.mxu0 0.0
    %2985 = vmatprep.subr.mxu0 0.0
    %2986 = vmatpush1.msra.mxu0 0.0
    %2987 = vmatprep.subr.mxu0 0.0
    %2988 = vmatpush1.msra.mxu0 0.0
    %2989 = vmatprep.subr.mxu0 0.0
    %2990 = vmatpush1.msra.mxu0 0.0
    %2991 = vmatprep.subr.mxu0 0.0
    %2992 = vmatpush1.msra.mxu0 0.0
    %2993 = vmatprep.subr.mxu0 0.0
    %2994 = vmatpush1.msra.mxu0 0.0
    %2995 = vmatprep.subr.mxu0 0.0
    %2996 = vmatpush1.msra.mxu0 0.0
    %2997 = vmatprep.subr.mxu0 0.0
    %2998 = vmatpush1.msra.mxu0 0.0
    %2999 = vmatprep.subr.mxu0 0.0
    %3000 = vmatpush1.msra.mxu0 0.0
    %3001 = vmatprep.subr.mxu0 0.0
    %3002 = vmatpush1.msra.mxu0 0.0
    %3003 = vmatprep.subr.mxu0 0.0
    %3004 = vmatpush1.msra.mxu0 0.0
    %3005 = vmatprep.subr.mxu0 0.0
    %3006 = vmatpush1.msra.mxu0 0.0
    %3007 = vmatprep.subr.mxu0 0.0
    %3008 = vmatpush1.msra.mxu0 0.0
    %3009 = vmatprep.subr.mxu0 0.0
    %3010 = vmatpush1.msra.mxu0 0.0
    %3011 = vmatprep.subr.mxu0 0.0
    %3012 = vmatpush1.msra.mxu0 0.0
    %3013 = vmatprep.subr.mxu0 0.0
    %3014 = vmatpush1.msra.mxu0 0.0
    %3015 = vmatprep.mubr.f32.mxu0 0.0
    %3016 = vmatmul.mubr.f32.gmra.mrb[0].mxu0 %v2949
    %v3017 = vpop.f32.mrb[0].mxu0
    %v3018 = vadd.f32 0.0, %v3017
    %v3019 = vpop.f32.mrb[0].mxu0
    %3020 = vdwg.mxu0
    %3022 = vrot.lane.b32.xlu0 %v3018, 8
    %v3023 = vpop.permute.xlu0 %3022
    %3025 = vst.msk [vmem:[#allocation2 + $0x8] sm:$0xff] %vm541, %v3023
    %3026 = vrot.lane.b32.xlu0 %v2013, 112
    %v3027 = vpop.permute.xlu0 %3026
    %3028 = vrot.lane.b32.xlu0 %v2013, 80
    %v3029 = vpop.permute.xlu0 %3028
    %v3030 = vsel %vm209, %v3027, 0
    %v3032 = vsel %vm209, %v3029, 0
    %3034 = vmatprep.subr.mxu0 0.0
    %3035 = vmatpush1.xpose.msra.mxu0 %v3032
    %3036 = vmatprep.subr.mxu0 0.0
    %3037 = vmatpush1.xpose.msra.mxu0 0.0
    %3038 = vmatprep.subr.mxu0 0.0
    %3039 = vmatpush1.xpose.msra.mxu0 0.0
    %3040 = vmatprep.subr.mxu0 0.0
    %3041 = vmatpush1.xpose.msra.mxu0 0.0
    %3042 = vmatprep.subr.mxu0 0.0
    %3043 = vmatpush1.xpose.msra.mxu0 0.0
    %3044 = vmatprep.subr.mxu0 0.0
    %3045 = vmatpush1.xpose.msra.mxu0 0.0
    %3046 = vmatprep.subr.mxu0 0.0
    %3047 = vmatpush1.xpose.msra.mxu0 0.0
    %3048 = vmatprep.subr.mxu0 0.0
    %3049 = vmatpush1.xpose.msra.mxu0 0.0
    %3050 = vmatprep.subr.mxu0 0.0
    %3051 = vmatpush1.xpose.msra.mxu0 0.0
    %3052 = vmatprep.subr.mxu0 0.0
    %3053 = vmatpush1.xpose.msra.mxu0 0.0
    %3054 = vmatprep.subr.mxu0 0.0
    %3055 = vmatpush1.xpose.msra.mxu0 0.0
    %3056 = vmatprep.subr.mxu0 0.0
    %3057 = vmatpush1.xpose.msra.mxu0 0.0
    %3058 = vmatprep.subr.mxu0 0.0
    %3059 = vmatpush1.xpose.msra.mxu0 0.0
    %3060 = vmatprep.subr.mxu0 0.0
    %3061 = vmatpush1.xpose.msra.mxu0 0.0
    %3062 = vmatprep.subr.mxu0 0.0
    %3063 = vmatpush1.xpose.msra.mxu0 0.0
    %3064 = vmatprep.subr.mxu0 0.0
    %3065 = vmatpush1.xpose.msra.mxu0 0.0
    %3066 = vmatprep.subr.mxu0 0.0
    %3067 = vmatpush1.xpose.msra.mxu0 0.0
    %3068 = vmatprep.subr.mxu0 0.0
    %3069 = vmatpush1.xpose.msra.mxu0 0.0
    %3070 = vmatprep.subr.mxu0 0.0
    %3071 = vmatpush1.xpose.msra.mxu0 0.0
    %3072 = vmatprep.subr.mxu0 0.0
    %3073 = vmatpush1.xpose.msra.mxu0 0.0
    %3074 = vmatprep.subr.mxu0 0.0
    %3075 = vmatpush1.xpose.msra.mxu0 0.0
    %3076 = vmatprep.subr.mxu0 0.0
    %3077 = vmatpush1.xpose.msra.mxu0 0.0
    %3078 = vmatprep.subr.mxu0 0.0
    %3079 = vmatpush1.xpose.msra.mxu0 0.0
    %3080 = vmatprep.subr.mxu0 0.0
    %3081 = vmatpush1.xpose.msra.mxu0 0.0
    %3082 = vmatprep.subr.mxu0 0.0
    %3083 = vmatpush1.xpose.msra.mxu0 0.0
    %3084 = vmatprep.subr.mxu0 0.0
    %3085 = vmatpush1.xpose.msra.mxu0 0.0
    %3086 = vmatprep.subr.mxu0 0.0
    %3087 = vmatpush1.xpose.msra.mxu0 0.0
    %3088 = vmatprep.subr.mxu0 0.0
    %3089 = vmatpush1.xpose.msra.mxu0 0.0
    %3090 = vmatprep.subr.mxu0 0.0
    %3091 = vmatpush1.xpose.msra.mxu0 0.0
    %3092 = vmatprep.subr.mxu0 0.0
    %3093 = vmatpush1.xpose.msra.mxu0 0.0
    %3094 = vmatprep.subr.mxu0 0.0
    %3095 = vmatpush1.xpose.msra.mxu0 0.0
    %3096 = vmatprep.subr.mxu0 0.0
    %3097 = vmatpush1.xpose.msra.mxu0 0.0
    %3098 = vmatprep.mubr.f32.mxu0 0.0
    %3099 = vmatmul.mubr.f32.gmra.mrb[0].mxu0 %v3030
    %v3100 = vpop.f32.mrb[0].mxu0
    %v3101 = vadd.f32 %v888, %v3100
    %v3102 = vpop.f32.mrb[0].mxu0
    %3103 = vdwg.mxu0
    %v3104 = vsel %vm209, %v3101, -inf
    %3105 = vmax.xlane.f32.xlu0 %v3104
    %v3106 = vpop.xlane.xlu0 %3105
    %v3107 = vsub.f32 %v3101, %v3106
    %v3108 = vmul.f32 %v3107, 1.442695
    %v3109 = vpow.pop %v3108
    %v3110 = vsel %vm209, %v3109, 0.0
    %3111 = vadd.xlane.f32.xlu0 %v3110
    %v3112 = vpop.xlane.xlu0 %3111
    %v3113 = vrcp.pop %v3112
    %v3114 = vmul.f32 %v3109, %v3113
    %3115 = vrot.lane.b32.xlu0 %v2013, 48
    %v3116 = vpop.permute.xlu0 %3115
    %v3119 = vsel %vm209, %v3114, 0
    %3121 = vmatprep.subr.mxu0 0.0
    %3122 = vmatpush1.msra.mxu0 %v3116
    %3123 = vmatprep.subr.mxu0 0.0
    %3124 = vmatpush1.msra.mxu0 0.0
    %3125 = vmatprep.subr.mxu0 0.0
    %3126 = vmatpush1.msra.mxu0 0.0
    %3127 = vmatprep.subr.mxu0 0.0
    %3128 = vmatpush1.msra.mxu0 0.0
    %3129 = vmatprep.subr.mxu0 0.0
    %3130 = vmatpush1.msra.mxu0 0.0
    %3131 = vmatprep.subr.mxu0 0.0
    %3132 = vmatpush1.msra.mxu0 0.0
    %3133 = vmatprep.subr.mxu0 0.0
    %3134 = vmatpush1.msra.mxu0 0.0
    %3135 = vmatprep.subr.mxu0 0.0
    %3136 = vmatpush1.msra.mxu0 0.0
    %3137 = vmatprep.subr.mxu0 0.0
    %3138 = vmatpush1.msra.mxu0 0.0
    %3139 = vmatprep.subr.mxu0 0.0
    %3140 = vmatpush1.msra.mxu0 0.0
    %3141 = vmatprep.subr.mxu0 0.0
    %3142 = vmatpush1.msra.mxu0 0.0
    %3143 = vmatprep.subr.mxu0 0.0
    %3144 = vmatpush1.msra.mxu0 0.0
    %3145 = vmatprep.subr.mxu0 0.0
    %3146 = vmatpush1.msra.mxu0 0.0
    %3147 = vmatprep.subr.mxu0 0.0
    %3148 = vmatpush1.msra.mxu0 0.0
    %3149 = vmatprep.subr.mxu0 0.0
    %3150 = vmatpush1.msra.mxu0 0.0
    %3151 = vmatprep.subr.mxu0 0.0
    %3152 = vmatpush1.msra.mxu0 0.0
    %3153 = vmatprep.subr.mxu0 0.0
    %3154 = vmatpush1.msra.mxu0 0.0
    %3155 = vmatprep.subr.mxu0 0.0
    %3156 = vmatpush1.msra.mxu0 0.0
    %3157 = vmatprep.subr.mxu0 0.0
    %3158 = vmatpush1.msra.mxu0 0.0
    %3159 = vmatprep.subr.mxu0 0.0
    %3160 = vmatpush1.msra.mxu0 0.0
    %3161 = vmatprep.subr.mxu0 0.0
    %3162 = vmatpush1.msra.mxu0 0.0
    %3163 = vmatprep.subr.mxu0 0.0
    %3164 = vmatpush1.msra.mxu0 0.0
    %3165 = vmatprep.subr.mxu0 0.0
    %3166 = vmatpush1.msra.mxu0 0.0
    %3167 = vmatprep.subr.mxu0 0.0
    %3168 = vmatpush1.msra.mxu0 0.0
    %3169 = vmatprep.subr.mxu0 0.0
    %3170 = vmatpush1.msra.mxu0 0.0
    %3171 = vmatprep.subr.mxu0 0.0
    %3172 = vmatpush1.msra.mxu0 0.0
    %3173 = vmatprep.subr.mxu0 0.0
    %3174 = vmatpush1.msra.mxu0 0.0
    %3175 = vmatprep.subr.mxu0 0.0
    %3176 = vmatpush1.msra.mxu0 0.0
    %3177 = vmatprep.subr.mxu0 0.0
    %3178 = vmatpush1.msra.mxu0 0.0
    %3179 = vmatprep.subr.mxu0 0.0
    %3180 = vmatpush1.msra.mxu0 0.0
    %3181 = vmatprep.subr.mxu0 0.0
    %3182 = vmatpush1.msra.mxu0 0.0
    %3183 = vmatprep.subr.mxu0 0.0
    %3184 = vmatpush1.msra.mxu0 0.0
    %3185 = vmatprep.mubr.f32.mxu0 0.0
    %3186 = vmatmul.mubr.f32.gmra.mrb[0].mxu0 %v3119
    %v3187 = vpop.f32.mrb[0].mxu0
    %v3188 = vadd.f32 0.0, %v3187
    %v3189 = vpop.f32.mrb[0].mxu0
    %3190 = vdwg.mxu0
    %3192 = vrot.lane.b32.xlu0 %v3188, 16
    %v3193 = vpop.permute.xlu0 %3192
    %3195 = vst.msk [vmem:[#allocation2 + $0x8] sm:$0xff] %vm712, %v3193
    %3196 = vrot.lane.b32.xlu0 %v2013, 104
    %v3197 = vpop.permute.xlu0 %3196
    %3198 = vrot.lane.b32.xlu0 %v2013, 72
    %v3199 = vpop.permute.xlu0 %3198
    %v3200 = vsel %vm209, %v3197, 0
    %v3202 = vsel %vm209, %v3199, 0
    %3204 = vmatprep.subr.mxu0 0.0
    %3205 = vmatpush1.xpose.msra.mxu0 %v3202
    %3206 = vmatprep.subr.mxu0 0.0
    %3207 = vmatpush1.xpose.msra.mxu0 0.0
    %3208 = vmatprep.subr.mxu0 0.0
    %3209 = vmatpush1.xpose.msra.mxu0 0.0
    %3210 = vmatprep.subr.mxu0 0.0
    %3211 = vmatpush1.xpose.msra.mxu0 0.0
    %3212 = vmatprep.subr.mxu0 0.0
    %3213 = vmatpush1.xpose.msra.mxu0 0.0
    %3214 = vmatprep.subr.mxu0 0.0
    %3215 = vmatpush1.xpose.msra.mxu0 0.0
    %3216 = vmatprep.subr.mxu0 0.0
    %3217 = vmatpush1.xpose.msra.mxu0 0.0
    %3218 = vmatprep.subr.mxu0 0.0
    %3219 = vmatpush1.xpose.msra.mxu0 0.0
    %3220 = vmatprep.subr.mxu0 0.0
    %3221 = vmatpush1.xpose.msra.mxu0 0.0
    %3222 = vmatprep.subr.mxu0 0.0
    %3223 = vmatpush1.xpose.msra.mxu0 0.0
    %3224 = vmatprep.subr.mxu0 0.0
    %3225 = vmatpush1.xpose.msra.mxu0 0.0
    %3226 = vmatprep.subr.mxu0 0.0
    %3227 = vmatpush1.xpose.msra.mxu0 0.0
    %3228 = vmatprep.subr.mxu0 0.0
    %3229 = vmatpush1.xpose.msra.mxu0 0.0
    %3230 = vmatprep.subr.mxu0 0.0
    %3231 = vmatpush1.xpose.msra.mxu0 0.0
    %3232 = vmatprep.subr.mxu0 0.0
    %3233 = vmatpush1.xpose.msra.mxu0 0.0
    %3234 = vmatprep.subr.mxu0 0.0
    %3235 = vmatpush1.xpose.msra.mxu0 0.0
    %3236 = vmatprep.subr.mxu0 0.0
    %3237 = vmatpush1.xpose.msra.mxu0 0.0
    %3238 = vmatprep.subr.mxu0 0.0
    %3239 = vmatpush1.xpose.msra.mxu0 0.0
    %3240 = vmatprep.subr.mxu0 0.0
    %3241 = vmatpush1.xpose.msra.mxu0 0.0
    %3242 = vmatprep.subr.mxu0 0.0
    %3243 = vmatpush1.xpose.msra.mxu0 0.0
    %3244 = vmatprep.subr.mxu0 0.0
    %3245 = vmatpush1.xpose.msra.mxu0 0.0
    %3246 = vmatprep.subr.mxu0 0.0
    %3247 = vmatpush1.xpose.msra.mxu0 0.0
    %3248 = vmatprep.subr.mxu0 0.0
    %3249 = vmatpush1.xpose.msra.mxu0 0.0
    %3250 = vmatprep.subr.mxu0 0.0
    %3251 = vmatpush1.xpose.msra.mxu0 0.0
    %3252 = vmatprep.subr.mxu0 0.0
    %3253 = vmatpush1.xpose.msra.mxu0 0.0
    %3254 = vmatprep.subr.mxu0 0.0
    %3255 = vmatpush1.xpose.msra.mxu0 0.0
    %3256 = vmatprep.subr.mxu0 0.0
    %3257 = vmatpush1.xpose.msra.mxu0 0.0
    %3258 = vmatprep.subr.mxu0 0.0
    %3259 = vmatpush1.xpose.msra.mxu0 0.0
    %3260 = vmatprep.subr.mxu0 0.0
    %3261 = vmatpush1.xpose.msra.mxu0 0.0
    %3262 = vmatprep.subr.mxu0 0.0
    %3263 = vmatpush1.xpose.msra.mxu0 0.0
    %3264 = vmatprep.subr.mxu0 0.0
    %3265 = vmatpush1.xpose.msra.mxu0 0.0
    %3266 = vmatprep.subr.mxu0 0.0
    %3267 = vmatpush1.xpose.msra.mxu0 0.0
    %3268 = vmatprep.mubr.f32.mxu0 0.0
    %3269 = vmatmul.mubr.f32.gmra.mrb[0].mxu0 %v3200
    %v3270 = vpop.f32.mrb[0].mxu0
    %v3271 = vadd.f32 %v888, %v3270
    %v3272 = vpop.f32.mrb[0].mxu0
    %3273 = vdwg.mxu0
    %v3274 = vsel %vm209, %v3271, -inf
    %3275 = vmax.xlane.f32.xlu0 %v3274
    %v3276 = vpop.xlane.xlu0 %3275
    %v3277 = vsub.f32 %v3271, %v3276
    %v3278 = vmul.f32 %v3277, 1.442695
    %v3279 = vpow.pop %v3278
    %v3280 = vsel %vm209, %v3279, 0.0
    %3281 = vadd.xlane.f32.xlu0 %v3280
    %v3282 = vpop.xlane.xlu0 %3281
    %v3283 = vrcp.pop %v3282
    %v3284 = vmul.f32 %v3279, %v3283
    %3285 = vrot.lane.b32.xlu0 %v2013, 40
    %v3286 = vpop.permute.xlu0 %3285
    %v3289 = vsel %vm209, %v3284, 0
    %3291 = vmatprep.subr.mxu0 0.0
    %3292 = vmatpush1.msra.mxu0 %v3286
    %3293 = vmatprep.subr.mxu0 0.0
    %3294 = vmatpush1.msra.mxu0 0.0
    %3295 = vmatprep.subr.mxu0 0.0
    %3296 = vmatpush1.msra.mxu0 0.0
    %3297 = vmatprep.subr.mxu0 0.0
    %3298 = vmatpush1.msra.mxu0 0.0
    %3299 = vmatprep.subr.mxu0 0.0
    %3300 = vmatpush1.msra.mxu0 0.0
    %3301 = vmatprep.subr.mxu0 0.0
    %3302 = vmatpush1.msra.mxu0 0.0
    %3303 = vmatprep.subr.mxu0 0.0
    %3304 = vmatpush1.msra.mxu0 0.0
    %3305 = vmatprep.subr.mxu0 0.0
    %3306 = vmatpush1.msra.mxu0 0.0
    %3307 = vmatprep.subr.mxu0 0.0
    %3308 = vmatpush1.msra.mxu0 0.0
    %3309 = vmatprep.subr.mxu0 0.0
    %3310 = vmatpush1.msra.mxu0 0.0
    %3311 = vmatprep.subr.mxu0 0.0
    %3312 = vmatpush1.msra.mxu0 0.0
    %3313 = vmatprep.subr.mxu0 0.0
    %3314 = vmatpush1.msra.mxu0 0.0
    %3315 = vmatprep.subr.mxu0 0.0
    %3316 = vmatpush1.msra.mxu0 0.0
    %3317 = vmatprep.subr.mxu0 0.0
    %3318 = vmatpush1.msra.mxu0 0.0
    %3319 = vmatprep.subr.mxu0 0.0
    %3320 = vmatpush1.msra.mxu0 0.0
    %3321 = vmatprep.subr.mxu0 0.0
    %3322 = vmatpush1.msra.mxu0 0.0
    %3323 = vmatprep.subr.mxu0 0.0
    %3324 = vmatpush1.msra.mxu0 0.0
    %3325 = vmatprep.subr.mxu0 0.0
    %3326 = vmatpush1.msra.mxu0 0.0
    %3327 = vmatprep.subr.mxu0 0.0
    %3328 = vmatpush1.msra.mxu0 0.0
    %3329 = vmatprep.subr.mxu0 0.0
    %3330 = vmatpush1.msra.mxu0 0.0
    %3331 = vmatprep.subr.mxu0 0.0
    %3332 = vmatpush1.msra.mxu0 0.0
    %3333 = vmatprep.subr.mxu0 0.0
    %3334 = vmatpush1.msra.mxu0 0.0
    %3335 = vmatprep.subr.mxu0 0.0
    %3336 = vmatpush1.msra.mxu0 0.0
    %3337 = vmatprep.subr.mxu0 0.0
    %3338 = vmatpush1.msra.mxu0 0.0
    %3339 = vmatprep.subr.mxu0 0.0
    %3340 = vmatpush1.msra.mxu0 0.0
    %3341 = vmatprep.subr.mxu0 0.0
    %3342 = vmatpush1.msra.mxu0 0.0
    %3343 = vmatprep.subr.mxu0 0.0
    %3344 = vmatpush1.msra.mxu0 0.0
    %3345 = vmatprep.subr.mxu0 0.0
    %3346 = vmatpush1.msra.mxu0 0.0
    %3347 = vmatprep.subr.mxu0 0.0
    %3348 = vmatpush1.msra.mxu0 0.0
    %3349 = vmatprep.subr.mxu0 0.0
    %3350 = vmatpush1.msra.mxu0 0.0
    %3351 = vmatprep.subr.mxu0 0.0
    %3352 = vmatpush1.msra.mxu0 0.0
    %3353 = vmatprep.subr.mxu0 0.0
    %3354 = vmatpush1.msra.mxu0 0.0
    %3355 = vmatprep.mubr.f32.mxu0 0.0
    %3356 = vmatmul.mubr.f32.gmra.mrb[0].mxu0 %v3289
    %v3357 = vpop.f32.mrb[0].mxu0
    %v3358 = vadd.f32 0.0, %v3357
    %v3359 = vpop.f32.mrb[0].mxu0
    %3360 = vdwg.mxu0
    %3362 = vrot.lane.b32.xlu0 %v3358, 24
    %v3363 = vpop.permute.xlu0 %3362
    %3365 = vst.msk [vmem:[#allocation2 + $0x8] sm:$0xff] %vm883, %v3363
    %v3366 = vld [vmem:[#allocation2] sm:$0xff]
    %v3367 = vld [vmem:[#allocation2 + $0x8] sm:$0xff]
    %v3368 = vlaneseq
    %v3369 = vshrl.u32 %v3368, 7
    %v3370 = vsub.s32 1, %v3369
    %v3371 = vrot.slane %v1930, %v3370
    %v3373 = vsel %vm120, %v3366, 0
    %v3376 = vsel %vm120, %v3367, 0
    %3378 = vmatprep.subr.mxu0 0.0
    %3379 = vmatpush1.msra.mxu0 %v1911
    %3380 = vmatprep.subr.mxu0 0.0
    %3381 = vmatpush1.msra.mxu0 %v1912
    %3382 = vmatprep.subr.mxu0 0.0
    %3383 = vmatpush1.msra.mxu0 %v1913
    %3384 = vmatprep.subr.mxu0 0.0
    %3385 = vmatpush1.msra.mxu0 %v1914
    %3386 = vmatprep.subr.mxu0 0.0
    %3387 = vmatpush1.msra.mxu0 0.0
    %3388 = vmatprep.subr.mxu0 0.0
    %3389 = vmatpush1.msra.mxu0 0.0
    %3390 = vmatprep.subr.mxu0 0.0
    %3391 = vmatpush1.msra.mxu0 0.0
    %3392 = vmatprep.subr.mxu0 0.0
    %3393 = vmatpush1.msra.mxu0 0.0
    %3394 = vmatprep.subr.mxu0 0.0
    %3395 = vmatpush1.msra.mxu0 0.0
    %3396 = vmatprep.subr.mxu0 0.0
    %3397 = vmatpush1.msra.mxu0 0.0
    %3398 = vmatprep.subr.mxu0 0.0
    %3399 = vmatpush1.msra.mxu0 0.0
    %3400 = vmatprep.subr.mxu0 0.0
    %3401 = vmatpush1.msra.mxu0 0.0
    %3402 = vmatprep.subr.mxu0 0.0
    %3403 = vmatpush1.msra.mxu0 0.0
    %3404 = vmatprep.subr.mxu0 0.0
    %3405 = vmatpush1.msra.mxu0 0.0
    %3406 = vmatprep.subr.mxu0 0.0
    %3407 = vmatpush1.msra.mxu0 0.0
    %3408 = vmatprep.subr.mxu0 0.0
    %3409 = vmatpush1.msra.mxu0 0.0
    %3410 = vmatprep.subr.mxu0 0.0
    %3411 = vmatpush1.msra.mxu0 0.0
    %3412 = vmatprep.subr.mxu0 0.0
    %3413 = vmatpush1.msra.mxu0 0.0
    %3414 = vmatprep.subr.mxu0 0.0
    %3415 = vmatpush1.msra.mxu0 0.0
    %3416 = vmatprep.subr.mxu0 0.0
    %3417 = vmatpush1.msra.mxu0 0.0
    %3418 = vmatprep.subr.mxu0 0.0
    %3419 = vmatpush1.msra.mxu0 0.0
    %3420 = vmatprep.subr.mxu0 0.0
    %3421 = vmatpush1.msra.mxu0 0.0
    %3422 = vmatprep.subr.mxu0 0.0
    %3423 = vmatpush1.msra.mxu0 0.0
    %3424 = vmatprep.subr.mxu0 0.0
    %3425 = vmatpush1.msra.mxu0 0.0
    %3426 = vmatprep.subr.mxu0 0.0
    %3427 = vmatpush1.msra.mxu0 0.0
    %3428 = vmatprep.subr.mxu0 0.0
    %3429 = vmatpush1.msra.mxu0 0.0
    %3430 = vmatprep.subr.mxu0 0.0
    %3431 = vmatpush1.msra.mxu0 0.0
    %3432 = vmatprep.subr.mxu0 0.0
    %3433 = vmatpush1.msra.mxu0 0.0
    %3434 = vmatprep.subr.mxu0 0.0
    %3435 = vmatpush1.msra.mxu0 0.0
    %3436 = vmatprep.subr.mxu0 0.0
    %3437 = vmatpush1.msra.mxu0 0.0
    %3438 = vmatprep.subr.mxu0 0.0
    %3439 = vmatpush1.msra.mxu0 0.0
    %3440 = vmatprep.subr.mxu0 0.0
    %3441 = vmatpush1.msra.mxu0 0.0
    %3442 = vmatprep.mubr.f32.mxu0 0.0
    %3443 = vmatmul.mubr.f32.gmra.mrb[0].mxu0 %v3373
    %v3444 = vpop.f32.mrb[0].mxu0
    %v3445 = vadd.f32 %v3371, %v3444
    %v3446 = vpop.f32.mrb[0].mxu0
    %3447 = vmatprep.mubr.f32.mxu0 0.0
    %3448 = vmatmul.mubr.f32.gmra.mrb[0].mxu0 %v3376
    %v3449 = vpop.f32.mrb[0].mxu0
    %v3450 = vadd.f32 %v3371, %v3449
    %v3451 = vpop.f32.mrb[0].mxu0
    %3452 = vdwg.mxu0
    %v3453 = vadd.f32 %v1903, %v3445
    %v3454 = vadd.f32 %v1904, %v3450
    %v3455 = vsel %vm120, %v3453, 0.0
    %3456 = vadd.xlane.f32.xlu0 %v3455
    %v3457 = vpop.xlane.xlu0 %3456
    %v3458 = vsel %vm120, %v3454, 0.0
    %3459 = vadd.xlane.f32.xlu0 %v3458
    %v3460 = vpop.xlane.xlu0 %3459
    %v3461 = vmul.f32 %v3457, %v1659
    %v3462 = vmul.f32 %v3460, %v1659
    %v3463 = vsub.f32 %v3453, %v3461
    %v3464 = vsub.f32 %v3454, %v3462
    %v3465 = vmul.f32 %v3463, %v3463
    %v3466 = vmul.f32 %v3464, %v3464
    %v3467 = vsel %vm120, %v3465, 0.0
    %3468 = vadd.xlane.f32.xlu0 %v3467
    %v3469 = vpop.xlane.xlu0 %3468
    %v3470 = vsel %vm120, %v3466, 0.0
    %3471 = vadd.xlane.f32.xlu0 %v3470
    %v3472 = vpop.xlane.xlu0 %3471
    %v3473 = vmul.f32 %v3469, %v1659
    %v3474 = vmul.f32 %v3472, %v1659
    %v3475 = vadd.f32 %v3473, 1e-05
    %v3476 = vadd.f32 %v3474, 1e-05
    %v3477 = vrsqrt.pop %v3475
    %v3478 = vrsqrt.pop %v3476
    %v3479 = vmul.f32 %v3463, %v3477
    %v3480 = vmul.f32 %v3464, %v3478
    %v3481 = vlaneseq
    %v3482 = vshrl.u32 %v3481, 7
    %v3483 = vsub.s32 2, %v3482
    %v3484 = vrot.slane %v1930, %v3483
    %v3485 = vmul.f32 %v3479, %v3484
    %v3486 = vmul.f32 %v3480, %v3484
    %v3487 = vlaneseq
    %v3488 = vshrl.u32 %v3487, 7
    %v3489 = vsub.s32 3, %v3488
    %v3490 = vrot.slane %v1930, %v3489
    %v3491 = vadd.f32 %v3485, %v3490
    %v3492 = vadd.f32 %v3486, %v3490
    %v3493 = vlaneseq
    %v3494 = vshrl.u32 %v3493, 7
    %v3495 = vsub.s32 6, %v3494
    %v3496 = vrot.slane %v1930, %v3495
    %v3498 = vsel %vm120, %v3491, 0
    %v3501 = vsel %vm120, %v3492, 0
    %3503 = vmatprep.subr.mxu0 0.0
    %3504 = vmatpush1.msra.mxu0 %v1916
    %3505 = vmatprep.subr.mxu0 0.0
    %3506 = vmatpush1.msra.mxu0 %v1917
    %3507 = vmatprep.subr.mxu0 0.0
    %3508 = vmatpush1.msra.mxu0 %v1918
    %3509 = vmatprep.subr.mxu0 0.0
    %3510 = vmatpush1.msra.mxu0 %v1919
    %3511 = vmatprep.subr.mxu0 0.0
    %3512 = vmatpush1.msra.mxu0 0.0
    %3513 = vmatprep.subr.mxu0 0.0
    %3514 = vmatpush1.msra.mxu0 0.0
    %3515 = vmatprep.subr.mxu0 0.0
    %3516 = vmatpush1.msra.mxu0 0.0
    %3517 = vmatprep.subr.mxu0 0.0
    %3518 = vmatpush1.msra.mxu0 0.0
    %3519 = vmatprep.subr.mxu0 0.0
    %3520 = vmatpush1.msra.mxu0 0.0
    %3521 = vmatprep.subr.mxu0 0.0
    %3522 = vmatpush1.msra.mxu0 0.0
    %3523 = vmatprep.subr.mxu0 0.0
    %3524 = vmatpush1.msra.mxu0 0.0
    %3525 = vmatprep.subr.mxu0 0.0
    %3526 = vmatpush1.msra.mxu0 0.0
    %3527 = vmatprep.subr.mxu0 0.0
    %3528 = vmatpush1.msra.mxu0 0.0
    %3529 = vmatprep.subr.mxu0 0.0
    %3530 = vmatpush1.msra.mxu0 0.0
    %3531 = vmatprep.subr.mxu0 0.0
    %3532 = vmatpush1.msra.mxu0 0.0
    %3533 = vmatprep.subr.mxu0 0.0
    %3534 = vmatpush1.msra.mxu0 0.0
    %3535 = vmatprep.subr.mxu0 0.0
    %3536 = vmatpush1.msra.mxu0 0.0
    %3537 = vmatprep.subr.mxu0 0.0
    %3538 = vmatpush1.msra.mxu0 0.0
    %3539 = vmatprep.subr.mxu0 0.0
    %3540 = vmatpush1.msra.mxu0 0.0
    %3541 = vmatprep.subr.mxu0 0.0
    %3542 = vmatpush1.msra.mxu0 0.0
    %3543 = vmatprep.subr.mxu0 0.0
    %3544 = vmatpush1.msra.mxu0 0.0
    %3545 = vmatprep.subr.mxu0 0.0
    %3546 = vmatpush1.msra.mxu0 0.0
    %3547 = vmatprep.subr.mxu0 0.0
    %3548 = vmatpush1.msra.mxu0 0.0
    %3549 = vmatprep.subr.mxu0 0.0
    %3550 = vmatpush1.msra.mxu0 0.0
    %3551 = vmatprep.subr.mxu0 0.0
    %3552 = vmatpush1.msra.mxu0 0.0
    %3553 = vmatprep.subr.mxu0 0.0
    %3554 = vmatpush1.msra.mxu0 0.0
    %3555 = vmatprep.subr.mxu0 0.0
    %3556 = vmatpush1.msra.mxu0 0.0
    %3557 = vmatprep.subr.mxu0 0.0
    %3558 = vmatpush1.msra.mxu0 0.0
    %3559 = vmatprep.subr.mxu0 0.0
    %3560 = vmatpush1.msra.mxu0 0.0
    %3561 = vmatprep.subr.mxu0 0.0
    %3562 = vmatpush1.msra.mxu0 0.0
    %3563 = vmatprep.subr.mxu0 0.0
    %3564 = vmatpush1.msra.mxu0 0.0
    %3565 = vmatprep.subr.mxu0 0.0
    %3566 = vmatpush1.msra.mxu0 0.0
    %3567 = vmatprep.mubr.f32.mxu0 0.0
    %3568 = vmatmul.mubr.f32.gmra.mrb[0].mxu0 %v3498
    %v3569 = vpop.f32.mrb[0].mxu0
    %v3570 = vadd.f32 %v3496, %v3569
    %v3571 = vpop.f32.mrb[0].mxu0
    %3572 = vmatprep.mubr.f32.mxu0 0.0
    %3573 = vmatmul.mubr.f32.gmra.mrb[0].mxu0 %v3501
    %v3574 = vpop.f32.mrb[0].mxu0
    %v3575 = vadd.f32 %v3496, %v3574
    %v3576 = vpop.f32.mrb[0].mxu0
    %3577 = vdwg.mxu0
    %v3578 = vmax.f32 %v3570, 0.0
    %v3579 = vmax.f32 %v3575, 0.0
    %v3580 = vlaneseq
    %v3581 = vshrl.u32 %v3580, 7
    %v3582 = vsub.s32 7, %v3581
    %v3583 = vrot.slane %v1930, %v3582
    %v3585 = vsel %vm1783, %v3578, 0
    %v3588 = vsel %vm1783, %v3579, 0
    %3590 = vmatprep.subr.mxu0 0.0
    %3591 = vmatpush1.msra.mxu0 %v1921
    %3592 = vmatprep.subr.mxu0 0.0
    %3593 = vmatpush1.msra.mxu0 %v1922
    %3594 = vmatprep.subr.mxu0 0.0
    %3595 = vmatpush1.msra.mxu0 %v1923
    %3596 = vmatprep.subr.mxu0 0.0
    %3597 = vmatpush1.msra.mxu0 %v1924
    %3598 = vmatprep.subr.mxu0 0.0
    %3599 = vmatpush1.msra.mxu0 %v1925
    %3600 = vmatprep.subr.mxu0 0.0
    %3601 = vmatpush1.msra.mxu0 %v1926
    %3602 = vmatprep.subr.mxu0 0.0
    %3603 = vmatpush1.msra.mxu0 %v1927
    %3604 = vmatprep.subr.mxu0 0.0
    %3605 = vmatpush1.msra.mxu0 %v1928
    %3606 = vmatprep.subr.mxu0 0.0
    %3607 = vmatpush1.msra.mxu0 0.0
    %3608 = vmatprep.subr.mxu0 0.0
    %3609 = vmatpush1.msra.mxu0 0.0
    %3610 = vmatprep.subr.mxu0 0.0
    %3611 = vmatpush1.msra.mxu0 0.0
    %3612 = vmatprep.subr.mxu0 0.0
    %3613 = vmatpush1.msra.mxu0 0.0
    %3614 = vmatprep.subr.mxu0 0.0
    %3615 = vmatpush1.msra.mxu0 0.0
    %3616 = vmatprep.subr.mxu0 0.0
    %3617 = vmatpush1.msra.mxu0 0.0
    %3618 = vmatprep.subr.mxu0 0.0
    %3619 = vmatpush1.msra.mxu0 0.0
    %3620 = vmatprep.subr.mxu0 0.0
    %3621 = vmatpush1.msra.mxu0 0.0
    %3622 = vmatprep.subr.mxu0 0.0
    %3623 = vmatpush1.msra.mxu0 0.0
    %3624 = vmatprep.subr.mxu0 0.0
    %3625 = vmatpush1.msra.mxu0 0.0
    %3626 = vmatprep.subr.mxu0 0.0
    %3627 = vmatpush1.msra.mxu0 0.0
    %3628 = vmatprep.subr.mxu0 0.0
    %3629 = vmatpush1.msra.mxu0 0.0
    %3630 = vmatprep.subr.mxu0 0.0
    %3631 = vmatpush1.msra.mxu0 0.0
    %3632 = vmatprep.subr.mxu0 0.0
    %3633 = vmatpush1.msra.mxu0 0.0
    %3634 = vmatprep.subr.mxu0 0.0
    %3635 = vmatpush1.msra.mxu0 0.0
    %3636 = vmatprep.subr.mxu0 0.0
    %3637 = vmatpush1.msra.mxu0 0.0
    %3638 = vmatprep.subr.mxu0 0.0
    %3639 = vmatpush1.msra.mxu0 0.0
    %3640 = vmatprep.subr.mxu0 0.0
    %3641 = vmatpush1.msra.mxu0 0.0
    %3642 = vmatprep.subr.mxu0 0.0
    %3643 = vmatpush1.msra.mxu0 0.0
    %3644 = vmatprep.subr.mxu0 0.0
    %3645 = vmatpush1.msra.mxu0 0.0
    %3646 = vmatprep.subr.mxu0 0.0
    %3647 = vmatpush1.msra.mxu0 0.0
    %3648 = vmatprep.subr.mxu0 0.0
    %3649 = vmatpush1.msra.mxu0 0.0
    %3650 = vmatprep.subr.mxu0 0.0
    %3651 = vmatpush1.msra.mxu0 0.0
    %3652 = vmatprep.subr.mxu0 0.0
    %3653 = vmatpush1.msra.mxu0 0.0
    %3654 = vmatprep.mubr.f32.mxu0 0.0
    %3655 = vmatmul.mubr.f32.gmra.mrb[0].mxu0 %v3585
    %v3656 = vpop.f32.mrb[0].mxu0
    %v3657 = vadd.f32 %v3583, %v3656
    %v3658 = vpop.f32.mrb[0].mxu0
    %3659 = vmatprep.mubr.f32.mxu0 0.0
    %3660 = vmatmul.mubr.f32.gmra.mrb[0].mxu0 %v3588
    %v3661 = vpop.f32.mrb[0].mxu0
    %v3662 = vadd.f32 %v3583, %v3661
    %v3663 = vpop.f32.mrb[0].mxu0
    %3664 = vdwg.mxu0
    %v3665 = vadd.f32 %v3491, %v3657
    %v3666 = vadd.f32 %v3492, %v3662
    %v3667 = vsel %vm120, %v3665, 0.0
    %3668 = vadd.xlane.f32.xlu0 %v3667
    %v3669 = vpop.xlane.xlu0 %3668
    %v3670 = vsel %vm120, %v3666, 0.0
    %3671 = vadd.xlane.f32.xlu0 %v3670
    %v3672 = vpop.xlane.xlu0 %3671
    %v3673 = vmul.f32 %v3669, %v1659
    %v3674 = vmul.f32 %v3672, %v1659
    %v3675 = vsub.f32 %v3665, %v3673
    %v3676 = vsub.f32 %v3666, %v3674
    %v3677 = vmul.f32 %v3675, %v3675
    %v3678 = vmul.f32 %v3676, %v3676
    %v3679 = vsel %vm120, %v3677, 0.0
    %3680 = vadd.xlane.f32.xlu0 %v3679
    %v3681 = vpop.xlane.xlu0 %3680
    %v3682 = vsel %vm120, %v3678, 0.0
    %3683 = vadd.xlane.f32.xlu0 %v3682
    %v3684 = vpop.xlane.xlu0 %3683
    %v3685 = vmul.f32 %v3681, %v1659
    %v3686 = vmul.f32 %v3684, %v1659
    %v3687 = vadd.f32 %v3685, 1e-05
    %v3688 = vadd.f32 %v3686, 1e-05
    %v3689 = vrsqrt.pop %v3687
    %v3690 = vrsqrt.pop %v3688
    %v3691 = vmul.f32 %v3675, %v3689
    %v3692 = vmul.f32 %v3676, %v3690
    %v3693 = vlaneseq
    %v3694 = vshrl.u32 %v3693, 7
    %v3695 = vsub.s32 4, %v3694
    %v3696 = vrot.slane %v1930, %v3695
    %v3697 = vmul.f32 %v3691, %v3696
    %v3698 = vmul.f32 %v3692, %v3696
    %v3699 = vlaneseq
    %v3700 = vshrl.u32 %v3699, 7
    %v3701 = vsub.s32 5, %v3700
    %v3702 = vrot.slane %v1930, %v3701
    %v3703 = vadd.f32 %v3697, %v3702
    %v3704 = vadd.f32 %v3698, %v3702
    %v3705 = vld [vmem:[#allocation9] sm:$0xff]
    %v3706 = vld [vmem:[#allocation9 + $0x8] sm:$0xff]
    %v3707 = vld [vmem:[#allocation9 + $0x10] sm:$0xff]
    %v3708 = vld [vmem:[#allocation9 + $0x18] sm:$0xff]
    %v3709 = vld [vmem:[#allocation9 + $0x20] sm:$0x1]
    %v3711 = vsel %vm120, %v3703, 0
    %v3714 = vsel %vm120, %v3704, 0
    %3716 = vmatprep.subr.mxu0 0.0
    %3717 = vmatpush1.msra.mxu0 %v3705
    %3718 = vmatprep.subr.mxu0 0.0
    %3719 = vmatpush1.msra.mxu0 %v3706
    %3720 = vmatprep.subr.mxu0 0.0
    %3721 = vmatpush1.msra.mxu0 %v3707
    %3722 = vmatprep.subr.mxu0 0.0
    %3723 = vmatpush1.msra.mxu0 %v3708
    %3724 = vmatprep.subr.mxu0 0.0
    %3725 = vmatpush1.msra.mxu0 0.0
    %3726 = vmatprep.subr.mxu0 0.0
    %3727 = vmatpush1.msra.mxu0 0.0
    %3728 = vmatprep.subr.mxu0 0.0
    %3729 = vmatpush1.msra.mxu0 0.0
    %3730 = vmatprep.subr.mxu0 0.0
    %3731 = vmatpush1.msra.mxu0 0.0
    %3732 = vmatprep.subr.mxu0 0.0
    %3733 = vmatpush1.msra.mxu0 0.0
    %3734 = vmatprep.subr.mxu0 0.0
    %3735 = vmatpush1.msra.mxu0 0.0
    %3736 = vmatprep.subr.mxu0 0.0
    %3737 = vmatpush1.msra.mxu0 0.0
    %3738 = vmatprep.subr.mxu0 0.0
    %3739 = vmatpush1.msra.mxu0 0.0
    %3740 = vmatprep.subr.mxu0 0.0
    %3741 = vmatpush1.msra.mxu0 0.0
    %3742 = vmatprep.subr.mxu0 0.0
    %3743 = vmatpush1.msra.mxu0 0.0
    %3744 = vmatprep.subr.mxu0 0.0
    %3745 = vmatpush1.msra.mxu0 0.0
    %3746 = vmatprep.subr.mxu0 0.0
    %3747 = vmatpush1.msra.mxu0 0.0
    %3748 = vmatprep.subr.mxu0 0.0
    %3749 = vmatpush1.msra.mxu0 0.0
    %3750 = vmatprep.subr.mxu0 0.0
    %3751 = vmatpush1.msra.mxu0 0.0
    %3752 = vmatprep.subr.mxu0 0.0
    %3753 = vmatpush1.msra.mxu0 0.0
    %3754 = vmatprep.subr.mxu0 0.0
    %3755 = vmatpush1.msra.mxu0 0.0
    %3756 = vmatprep.subr.mxu0 0.0
    %3757 = vmatpush1.msra.mxu0 0.0
    %3758 = vmatprep.subr.mxu0 0.0
    %3759 = vmatpush1.msra.mxu0 0.0
    %3760 = vmatprep.subr.mxu0 0.0
    %3761 = vmatpush1.msra.mxu0 0.0
    %3762 = vmatprep.subr.mxu0 0.0
    %3763 = vmatpush1.msra.mxu0 0.0
    %3764 = vmatprep.subr.mxu0 0.0
    %3765 = vmatpush1.msra.mxu0 0.0
    %3766 = vmatprep.subr.mxu0 0.0
    %3767 = vmatpush1.msra.mxu0 0.0
    %3768 = vmatprep.subr.mxu0 0.0
    %3769 = vmatpush1.msra.mxu0 0.0
    %3770 = vmatprep.subr.mxu0 0.0
    %3771 = vmatpush1.msra.mxu0 0.0
    %3772 = vmatprep.subr.mxu0 0.0
    %3773 = vmatpush1.msra.mxu0 0.0
    %3774 = vmatprep.subr.mxu0 0.0
    %3775 = vmatpush1.msra.mxu0 0.0
    %3776 = vmatprep.subr.mxu0 0.0
    %3777 = vmatpush1.msra.mxu0 0.0
    %3778 = vmatprep.subr.mxu0 0.0
    %3779 = vmatpush1.msra.mxu0 0.0
    %3780 = vmatprep.mubr.f32.mxu0 0.0
    %3781 = vmatmul.mubr.f32.gmra.mrb[0].mxu0 %v3711
    %v3782 = vpop.f32.mrb[0].mxu0
    %v3783 = vadd.f32 0.0, %v3782
    %v3784 = vpop.f32.mrb[0].mxu0
    %3785 = vmatprep.mubr.f32.mxu0 0.0
    %3786 = vmatmul.mubr.f32.gmra.mrb[0].mxu0 %v3714
    %v3787 = vpop.f32.mrb[0].mxu0
    %v3788 = vadd.f32 0.0, %v3787
    %v3789 = vpop.f32.mrb[0].mxu0
    %3790 = vdwg.mxu0
    %vm3791 = vcmask 31744
    %v3792 = vsel %vm3791, %v3783, 0.0
    %v3793 = vrot.slane %v3792, 4
    %v3794 = vadd.f32 %v3792, %v3793
    %v3795 = vrot.slane %v3794, 2
    %v3796 = vadd.f32 %v3794, %v3795
    %v3797 = vrot.slane %v3796, 1
    %v3798 = vadd.f32 %v3796, %v3797
    %v3799 = vadd.f32 %v3798, %v3709
    %vm3800 = vcmask 24576
    %3801 = vst.msk [vmem:[#allocation11] sm:$0x1] %vm3800, %v3799
    %v3802 = vsel %vm3791, %v3788, 0.0
    %v3803 = vrot.slane %v3802, 4
    %v3804 = vadd.f32 %v3802, %v3803
    %v3805 = vrot.slane %v3804, 2
    %v3806 = vadd.f32 %v3804, %v3805
    %v3807 = vrot.slane %v3806, 1
    %v3808 = vadd.f32 %v3806, %v3807
    %v3809 = vadd.f32 %v3808, %v3709
    %3810 = vst.msk [vmem:[#allocation11 + $0x1] sm:$0x1] %vm3800, %v3809
    // Predicated region
    $region54: #{_lambda_.1} parent=1 // pred_check
      _
    $region55: #{_lambda_.1} parent=1 // pred_check_branch
      %3812 = sbr.rel (0) target = $region57
    $region56: #{_lambda_.1} parent=1 // pred_region
      %s3814 = ssub.s32 32, 32
      %3815 = vsyncadd [#allocation5], %s3814
      %s3817 = sshll.u32 [#allocation11], 4
      %s3818 = int_to_ptr.vmem [resolvable:$true] %s3817
      %3820 = dma.vmem_to_hbm [thread:$0]  %s3818, 32, %s9, [#allocation5]
    $region57: #{_lambda_.1} parent=1 // pred_fallthru
      _
    // Predicated region
    $region58: #{_lambda_.1} parent=1 // pred_check
      _
    $region59: #{_lambda_.1} parent=1 // pred_check_branch
      %3822 = sbr.rel (0) target = $region61
    $region60: #{_lambda_.1} parent=1 // pred_region
      %3823 = dma.done [#allocation5], 32
    $region61: #{_lambda_.1} parent=1 // pred_fallthru
      _
    %3824 = vsyncpa [#allocation4], 1
    %3825 = vsyncpa [#allocation7], 1
    %3826 = vsyncpa [#allocation10], 1
    %3827 = vsyncpa [#allocation5], 1

</llo_original>
